<compile_context>
chip_gen: v6e
topology: v6e:2x2x1
jax: 0.10.0
libtpu: 0.0.40
codegen_flags: <defaults>
</compile_context>

<pallas_src>
from functools import partial

import jax
import jax.numpy as jnp
from jax.experimental import pallas as pl
from jax.experimental.pallas import tpu as pltpu

LPAD = 8            # left halo width -> interior column writes start at an 8-aligned sublane
DT = jnp.bfloat16   # activation / weight compute dtype (accumulation stays f32)


def _make_kernel(BH, Wp, Cin, Cmid, Cout):
    """BH = output rows per band.  pad1 holds BH+4 pooled rows, pad2 holds BH+2 hidden rows."""
    Wpad = LPAD + Wp + 1   # minimal right halo: only 1 usable right column is ever read

    def conv3x3(pad_ref, w_ref, out_rows, cin):
        # One K=3*cin matmul per ky: the 3 horizontal taps are fused into the contraction.
        acc = None
        for ky in range(3):
            rows = pad_ref[ky:ky + out_rows, LPAD - 1:LPAD + Wp + 1, :]   # (out_rows, Wp+2, cin)
            patch = jnp.concatenate(
                [rows[:, 0:Wp, :], rows[:, 1:Wp + 1, :], rows[:, 2:Wp + 2, :]],
                axis=-1).reshape(out_rows * Wp, 3 * cin)                  # (rows*Wp, 3*cin)
            d = jnp.dot(patch, w_ref[ky], preferred_element_type=jnp.float32)
            acc = d if acc is None else acc + d
        return acc   # (out_rows*Wp, cout) f32 (VMEM temporary at realistic sizes)

    def kernel(x_ref, w1_ref, b1_ref, w2_ref, b2_ref, o_ref, pad1_ref, pad2_ref):
        band = pl.program_id(1)
        n_bands = pl.num_programs(1)

        # ---- 2x2 max pool on the free-reshaped view (halo rows are handled upstream) ----
        xv = x_ref[0]                                            # (BH+4, 2, Wp, 2*Cin) bf16
        rm = jnp.maximum(xv[:, 0, :, :], xv[:, 1, :, :])         # (BH+4, Wp, 2*Cin)
        pooled = jnp.maximum(rm[:, :, 0:Cin], rm[:, :, Cin:2 * Cin])   # (BH+4, Wp, Cin)

        # ---- halo maintenance: only the 2 border columns per scratch (rows are rewritten) ----
        pad1_ref[:, LPAD - 1:LPAD, :] = jnp.zeros((BH + 4, 1, Cin), DT)
        pad1_ref[:, LPAD + Wp:LPAD + Wp + 1, :] = jnp.zeros((BH + 4, 1, Cin), DT)
        pad2_ref[:, LPAD - 1:LPAD, :] = jnp.zeros((BH + 2, 1, Cmid), DT)
        pad2_ref[:, LPAD + Wp:LPAD + Wp + 1, :] = jnp.zeros((BH + 2, 1, Cmid), DT)

        # interior write starts at an 8-aligned sublane offset
        pad1_ref[:, LPAD:LPAD + Wp, :] = pooled

        # ---- conv1 (3x3, pad=1) + folded BN1 + ReLU over BH+2 hidden rows (1-row halo) ----
        acc1 = conv3x3(pad1_ref, w1_ref, BH + 2, Cin)            # ((BH+2)*Wp, Cmid) f32
        hidden = jnp.maximum(acc1 + b1_ref[...], 0.0).astype(DT)
        pad2_ref[:, LPAD:LPAD + Wp, :] = hidden.reshape(BH + 2, Wp, Cmid)

        # conv2's zero padding at the *image* top/bottom: the hidden halo row there must be 0,
        # not conv1-of-zero-padding.  (Interior band boundaries keep the true neighbour row.)
        @pl.when(band == 0)
        def _():
            pad2_ref[0:1, :, :] = jnp.zeros((1, Wpad, Cmid), DT)

        @pl.when(band == n_bands - 1)
        def _():
            pad2_ref[BH + 1:BH + 2, :, :] = jnp.zeros((1, Wpad, Cmid), DT)

        # ---- conv2 (3x3, pad=1) + folded BN2 + ReLU over the BH output rows ----
        acc2 = conv3x3(pad2_ref, w2_ref, BH, Cmid)               # (BH*Wp, Cout) f32
        out = jnp.maximum(acc2 + b2_ref[...], 0.0)

        # channels-first, lane-dense store: (Cout, BH*Wp)
        o_ref[0, :, :] = jnp.transpose(out)

    return kernel


def _fold_bn(w, b, gamma, beta, mean, var, eps=1e-5):
    """Fold eval-mode BatchNorm into conv weight (OIHW) and bias (O,)."""
    scale = gamma / jnp.sqrt(var + eps)
    w_f = w * scale[:, None, None, None]
    b_f = (b - mean) * scale + beta
    return w_f, b_f


def _choose_band(Hp, Wp, target_rows):
    """Largest valid band height: divides Hp and keeps the output block lane-dim % 128 == 0."""
    if Hp <= target_rows:
        return Hp
    for bh in range(target_rows, 0, -1):
        if Hp % bh == 0 and (bh * Wp) % 128 == 0:
            return bh
    return Hp


def _resolve_band(Hp, Wp, band_rows):
    if (band_rows is not None and Hp % band_rows == 0
            and (band_rows == Hp or (band_rows * Wp) % 128 == 0)):
        return band_rows
    return _choose_band(Hp, Wp, 32)


@partial(jax.jit, static_argnames=("band_rows",))
def down_sample_forward(x_nchw, params, band_rows=None):
    """Forward pass of downSample.  x_nchw: (N, Cin, H, W) f32 -> (N, Cout, H//2, W//2) f32."""
    N, Cin, H, W = x_nchw.shape
    Hp, Wp = H // 2, W // 2
    # Match PyTorch MaxPool2d(2) floor behavior for odd H/W (no-op when even).
    x_nchw = x_nchw[:, :, :2 * Hp, :2 * Wp]

    # Fold BN into convs (eval-mode semantics).
    w1f, b1f = _fold_bn(params["w1"], params["b1"], params["g1"], params["bt1"],
                        params["m1"], params["v1"])
    w2f, b2f = _fold_bn(params["w2"], params["b2"], params["g2"], params["bt2"],
                        params["m2"], params["v2"])
    Cmid = w1f.shape[0]
    Cout = w2f.shape[0]

    BH = _resolve_band(Hp, Wp, band_rows)
    nb = Hp // BH

    # Weights OIHW -> (ky, kx*Cin + i, O) bf16 so the 3 horizontal taps fuse into one K=3*C dot.
    w1_k = jnp.transpose(w1f, (2, 3, 1, 0)).reshape(3, 3 * Cin, Cmid).astype(DT)
    w2_k = jnp.transpose(w2f, (2, 3, 1, 0)).reshape(3, 3 * Cmid, Cout).astype(DT)
    b1_k = b1f.reshape(1, Cmid)   # biases stay f32 (added to f32 accumulator)
    b2_k = b2f.reshape(1, Cout)

    # NCHW -> NHWC (bf16), free reshape exposing the 2x2 pool window, then band the pooled-row
    # axis with a 2-row halo (zeros at the image boundary, real rows at band boundaries).
    x_nhwc = jnp.transpose(x_nchw, (0, 2, 3, 1)).astype(DT)
    xv = x_nhwc.reshape(N, Hp, 2, Wp, 2 * Cin)
    xv = jnp.pad(xv, ((0, 0), (2, 2), (0, 0), (0, 0), (0, 0)))          # (N, Hp+4, 2, Wp, 2Cin)
    row_idx = jnp.arange(nb)[:, None] * BH + jnp.arange(BH + 4)[None, :]
    xb = jnp.take(xv, row_idx, axis=1)                                   # (N, nb, BH+4, ...)
    xb = xb.reshape(N * nb, BH + 4, 2, Wp, 2 * Cin)

    kernel = _make_kernel(BH, Wp, Cin, Cmid, Cout)
    Wpad = LPAD + Wp + 1

    out_flat = pl.pallas_call(
        kernel,
        out_shape=jax.ShapeDtypeStruct((N, Cout, Hp * Wp), jnp.float32),
        grid_spec=pltpu.PrefetchScalarGridSpec(
            num_scalar_prefetch=0,
            grid=(N, nb),
            in_specs=[
                pl.BlockSpec((1, BH + 4, 2, Wp, 2 * Cin),
                             lambda n, b: (n * nb + b, 0, 0, 0, 0)),
                pl.BlockSpec((3, 3 * Cin, Cmid), lambda n, b: (0, 0, 0)),
                pl.BlockSpec((1, Cmid), lambda n, b: (0, 0)),
                pl.BlockSpec((3, 3 * Cmid, Cout), lambda n, b: (0, 0, 0)),
                pl.BlockSpec((1, Cout), lambda n, b: (0, 0)),
            ],
            out_specs=pl.BlockSpec((1, Cout, BH * Wp), lambda n, b: (n, 0, b)),
            scratch_shapes=[
                pltpu.VMEM((BH + 4, Wpad, Cin), DT),
                pltpu.VMEM((BH + 2, Wpad, Cmid), DT),
            ],
        ),
        compiler_params=pltpu.CompilerParams(
            dimension_semantics=("parallel", "parallel"),
            # 64 MiB is safe on every generation (v7x physical VMEM is 64 MiB); band sizing
            # keeps realistic working sets well below this.  Could be ~96 MiB on v6e.
            vmem_limit_bytes=64 * 1024 * 1024,
        ),
    )(xb, w1_k, b1_k, w2_k, b2_k)

    # (N, Cout, Hp*Wp) -> (N, Cout, Hp, Wp): free reshape, no transpose pass.
    return out_flat.reshape(N, Cout, Hp, Wp)


def reference_forward(x, params, eps=1e-5):
    """Pure-JAX f32 reference matching PyTorch eval-mode downSample."""
    N, C, H, W = x.shape
    xp = x[:, :, :H - H % 2, :W - W % 2]
    xp = xp.reshape(N, C, H // 2, 2, W // 2, 2).max(axis=5).max(axis=3)

    def conv_bn_relu(y, w, b, g, bt, m, v):
        y = jax.lax.conv_general_dilated(
            y, w, window_strides=(1, 1), padding=((1, 1), (1, 1)),
            dimension_numbers=("NCHW", "OIHW", "NCHW"))
        y = y + b[None, :, None, None]
        y = (y - m[None, :, None, None]) / jnp.sqrt(v[None, :, None, None] + eps)
        y = y * g[None, :, None, None] + bt[None, :, None, None]
        return jnp.maximum(y, 0.0)

    y = conv_bn_relu(xp, params["w1"], params["b1"], params["g1"], params["bt1"],
                     params["m1"], params["v1"])
    y = conv_bn_relu(y, params["w2"], params["b2"], params["g2"], params["bt2"],
                     params["m2"], params["v2"])
    return y


def make_params(in_channels, out_channels, key):
    """Deterministic synthetic parameters (shapes from downSample.__init__)."""
    inter_channels = out_channels  # twoConvs(in, out, inter=out)
    k = jax.random.split(key, 4)
    return {
        "w1": 0.1 * jax.random.normal(k[0], (inter_channels, in_channels, 3, 3), jnp.float32),
        "b1": 0.1 * jax.random.normal(k[1], (inter_channels,), jnp.float32),
        "g1": 1.0 + 0.10 * jnp.arange(inter_channels, dtype=jnp.float32),
        "bt1": 0.05 * jnp.arange(inter_channels, dtype=jnp.float32),
        "m1": 0.02 * jnp.arange(inter_channels, dtype=jnp.float32),
        "v1": 1.0 + 0.03 * jnp.arange(inter_channels, dtype=jnp.float32),
        "w2": 0.1 * jax.random.normal(k[2], (out_channels, inter_channels, 3, 3), jnp.float32),
        "b2": 0.1 * jax.random.normal(k[3], (out_channels,), jnp.float32),
        "g2": 1.0 + 0.07 * jnp.arange(out_channels, dtype=jnp.float32),
        "bt2": -0.03 * jnp.arange(out_channels, dtype=jnp.float32),
        "m2": 0.01 * jnp.arange(out_channels, dtype=jnp.float32),
        "v2": 1.0 + 0.05 * jnp.arange(out_channels, dtype=jnp.float32),
    }


def _check(out, ref, tag):
    # bf16 activations/weights with f32 accumulation: allow bf16-level error vs the f32 ref.
    max_err = float(jnp.max(jnp.abs(out - ref)))
    mean_err = float(jnp.mean(jnp.abs(out - ref)))
    assert max_err < 1e-1, (tag, max_err)
    assert mean_err < 2e-2, (tag, mean_err)


if __name__ == "__main__":
    key = jax.random.PRNGKey(0)
    k_x1, k_p1, k_x2, k_p2 = jax.random.split(key, 4)

    # Case 1: small shape, single row band (band == full pooled image).
    N, Cin, H, W = 2, 4, 16, 16
    Cout = 8
    x1 = jax.random.normal(k_x1, (N, Cin, H, W), jnp.float32)
    p1 = make_params(Cin, Cout, k_p1)
    out1 = jax.block_until_ready(down_sample_forward(x1, p1))
    assert out1.shape == (N, Cout, H // 2, W // 2), out1.shape
    _check(out1, reference_forward(x1, p1), "single-band")

    # Case 2: exercises the row-band grid axis (Hp=16, band of 8 rows -> 2 bands).
    N2, Cin2, H2, W2 = 2, 4, 32, 32
    Cout2 = 8
    x2 = jax.random.normal(k_x2, (N2, Cin2, H2, W2), jnp.float32)
    p2 = make_params(Cin2, Cout2, k_p2)
    out2 = jax.block_until_ready(down_sample_forward(x2, p2, band_rows=8))
    assert out2.shape == (N2, Cout2, H2 // 2, W2 // 2), out2.shape
    _check(out2, reference_forward(x2, p2), "banded")

    print("KERNEL_OK")
</pallas_src>

<mosaic_0001>
module attributes {stable_mosaic.version = 11 : i64} {
  func.func @kernel(%arg0: i32, %arg1: i32, %arg2: memref<1x12x2x8x8xbf16, #tpu.memory_space<vmem>>, %arg3: memref<3x12x8xbf16, #tpu.memory_space<vmem>>, %arg4: memref<1x8xf32, #tpu.memory_space<vmem>>, %arg5: memref<3x24x8xbf16, #tpu.memory_space<vmem>>, %arg6: memref<1x8xf32, #tpu.memory_space<vmem>>, %arg7: memref<1x8x64xf32, #tpu.memory_space<vmem>>, %arg8: memref<12x17x4xbf16, #tpu.memory_space<vmem>>, %arg9: memref<10x17x8xbf16, #tpu.memory_space<vmem>>) attributes {dimension_semantics = [#tpu.dimension_semantics<parallel>, #tpu.dimension_semantics<parallel>], iteration_bounds = array<i64: 2, 1>, scalar_prefetch = 0 : i64, scratch_operands = 2 : i64, tpu.core_type = #tpu.core_type<tc>, window_params = [{transform_indices = @transform_0, window_bounds = array<i64: 1, 12, 2, 8, 8>}, {pipeline_mode = #tpu.pipeline_mode<synchronous>, transform_indices = @transform_1, window_bounds = array<i64: 3, 12, 8>}, {pipeline_mode = #tpu.pipeline_mode<synchronous>, transform_indices = @transform_2, window_bounds = array<i64: 1, 8>}, {pipeline_mode = #tpu.pipeline_mode<synchronous>, transform_indices = @transform_3, window_bounds = array<i64: 3, 24, 8>}, {pipeline_mode = #tpu.pipeline_mode<synchronous>, transform_indices = @transform_4, window_bounds = array<i64: 1, 8>}, {transform_indices = @transform_5, window_bounds = array<i64: 1, 8, 64>}]} {
    %c0 = arith.constant 0 : index
    %c0_0 = arith.constant 0 : index
    %c0_1 = arith.constant 0 : index
    %c0_2 = arith.constant 0 : index
    %c0_3 = arith.constant 0 : index
    %0 = vector.load %arg2[%c0, %c0_0, %c0_1, %c0_2, %c0_3] : memref<1x12x2x8x8xbf16, #tpu.memory_space<vmem>>, vector<1x12x2x8x8xbf16>
    %1 = vector.shape_cast %0 : vector<1x12x2x8x8xbf16> to vector<12x2x8x8xbf16>
    %2 = vector.extract_strided_slice %1 {offsets = [0, 0, 0, 0], sizes = [12, 1, 8, 8], strides = [1, 1, 1, 1]} : vector<12x2x8x8xbf16> to vector<12x1x8x8xbf16>
    %3 = vector.shape_cast %2 : vector<12x1x8x8xbf16> to vector<12x8x8xbf16>
    %4 = vector.extract_strided_slice %1 {offsets = [0, 1, 0, 0], sizes = [12, 1, 8, 8], strides = [1, 1, 1, 1]} : vector<12x2x8x8xbf16> to vector<12x1x8x8xbf16>
    %5 = vector.shape_cast %4 : vector<12x1x8x8xbf16> to vector<12x8x8xbf16>
    %6 = arith.maximumf %3, %5 : vector<12x8x8xbf16>
    %7 = vector.extract_strided_slice %6 {offsets = [0, 0, 0], sizes = [12, 8, 4], strides = [1, 1, 1]} : vector<12x8x8xbf16> to vector<12x8x4xbf16>
    %8 = vector.extract_strided_slice %6 {offsets = [0, 0, 4], sizes = [12, 8, 4], strides = [1, 1, 1]} : vector<12x8x8xbf16> to vector<12x8x4xbf16>
    %9 = arith.maximumf %7, %8 : vector<12x8x4xbf16>
    %cst = arith.constant 0.000000e+00 : bf16
    %10 = vector.broadcast %cst : bf16 to vector<12x1x4xbf16>
    %c0_4 = arith.constant 0 : index
    %c7 = arith.constant 7 : index
    %c0_5 = arith.constant 0 : index
    %11 = vector.load %arg8[%c0_4, %c7, %c0_5] : memref<12x17x4xbf16, #tpu.memory_space<vmem>>, vector<12x1x4xbf16>
    tpu.vector_store %arg8[%c0_4, %c7, %c0_5], %10 {strides = array<i32>} : memref<12x17x4xbf16, #tpu.memory_space<vmem>>, vector<12x1x4xbf16>,
    %cst_6 = arith.constant 0.000000e+00 : bf16
    %12 = vector.broadcast %cst_6 : bf16 to vector<12x1x4xbf16>
    %c0_7 = arith.constant 0 : index
    %c16 = arith.constant 16 : index
    %c0_8 = arith.constant 0 : index
    %13 = vector.load %arg8[%c0_7, %c16, %c0_8] : memref<12x17x4xbf16, #tpu.memory_space<vmem>>, vector<12x1x4xbf16>
    tpu.vector_store %arg8[%c0_7, %c16, %c0_8], %12 {strides = array<i32>} : memref<12x17x4xbf16, #tpu.memory_space<vmem>>, vector<12x1x4xbf16>,
    %cst_9 = arith.constant 0.000000e+00 : bf16
    %14 = vector.broadcast %cst_9 : bf16 to vector<10x1x8xbf16>
    %c0_10 = arith.constant 0 : index
    %c7_11 = arith.constant 7 : index
    %c0_12 = arith.constant 0 : index
    %15 = vector.load %arg9[%c0_10, %c7_11, %c0_12] : memref<10x17x8xbf16, #tpu.memory_space<vmem>>, vector<10x1x8xbf16>
    tpu.vector_store %arg9[%c0_10, %c7_11, %c0_12], %14 {strides = array<i32>} : memref<10x17x8xbf16, #tpu.memory_space<vmem>>, vector<10x1x8xbf16>,
    %cst_13 = arith.constant 0.000000e+00 : bf16
    %16 = vector.broadcast %cst_13 : bf16 to vector<10x1x8xbf16>
    %c0_14 = arith.constant 0 : index
    %c16_15 = arith.constant 16 : index
    %c0_16 = arith.constant 0 : index
    %17 = vector.load %arg9[%c0_14, %c16_15, %c0_16] : memref<10x17x8xbf16, #tpu.memory_space<vmem>>, vector<10x1x8xbf16>
    tpu.vector_store %arg9[%c0_14, %c16_15, %c0_16], %16 {strides = array<i32>} : memref<10x17x8xbf16, #tpu.memory_space<vmem>>, vector<10x1x8xbf16>,
    %c0_17 = arith.constant 0 : index
    %c8 = arith.constant 8 : index
    %c0_18 = arith.constant 0 : index
    %18 = vector.load %arg8[%c0_17, %c8, %c0_18] : memref<12x17x4xbf16, #tpu.memory_space<vmem>>, vector<12x8x4xbf16>
    tpu.vector_store %arg8[%c0_17, %c8, %c0_18], %9 {strides = array<i32>} : memref<12x17x4xbf16, #tpu.memory_space<vmem>>, vector<12x8x4xbf16>,
    %c0_19 = arith.constant 0 : index
    %c7_20 = arith.constant 7 : index
    %c0_21 = arith.constant 0 : index
    %19 = vector.load %arg8[%c0_19, %c7_20, %c0_21] : memref<12x17x4xbf16, #tpu.memory_space<vmem>>, vector<10x10x4xbf16>
    %20 = vector.extract_strided_slice %19 {offsets = [0, 0, 0], sizes = [10, 8, 4], strides = [1, 1, 1]} : vector<10x10x4xbf16> to vector<10x8x4xbf16>
    %21 = vector.extract_strided_slice %19 {offsets = [0, 1, 0], sizes = [10, 8, 4], strides = [1, 1, 1]} : vector<10x10x4xbf16> to vector<10x8x4xbf16>
    %22 = vector.extract_strided_slice %19 {offsets = [0, 2, 0], sizes = [10, 8, 4], strides = [1, 1, 1]} : vector<10x10x4xbf16> to vector<10x8x4xbf16>
    %23 = tpu.concatenate %20, %21, %22 in 2 : vector<10x8x4xbf16>, vector<10x8x4xbf16>, vector<10x8x4xbf16> -> vector<10x8x12xbf16>
    %24 = vector.shape_cast %23 : vector<10x8x12xbf16> to vector<80x12xbf16>
    %c0_22 = arith.constant 0 : index
    %c0_23 = arith.constant 0 : index
    %c0_24 = arith.constant 0 : index
    %25 = vector.load %arg3[%c0_22, %c0_23, %c0_24] : memref<3x12x8xbf16, #tpu.memory_space<vmem>>, vector<1x12x8xbf16>
    %26 = vector.shape_cast %25 : vector<1x12x8xbf16> to vector<12x8xbf16>
    %cst_25 = arith.constant dense<0.000000e+00> : vector<80x8xf32>
    %27 = tpu.matmul %24, %26, %cst_25 {dimension_numbers = #tpu.dot_dimension_numbers<[1], [0], [0], [1], [0, 0, 1, 1], [], []>} : vector<80x12xbf16>, vector<12x8xbf16>, vector<80x8xf32> -> vector<80x8xf32>
    %c1 = arith.constant 1 : index
    %c7_26 = arith.constant 7 : index
    %c0_27 = arith.constant 0 : index
    %28 = vector.load %arg8[%c1, %c7_26, %c0_27] : memref<12x17x4xbf16, #tpu.memory_space<vmem>>, vector<10x10x4xbf16>
    %29 = vector.extract_strided_slice %28 {offsets = [0, 0, 0], sizes = [10, 8, 4], strides = [1, 1, 1]} : vector<10x10x4xbf16> to vector<10x8x4xbf16>
    %30 = vector.extract_strided_slice %28 {offsets = [0, 1, 0], sizes = [10, 8, 4], strides = [1, 1, 1]} : vector<10x10x4xbf16> to vector<10x8x4xbf16>
    %31 = vector.extract_strided_slice %28 {offsets = [0, 2, 0], sizes = [10, 8, 4], strides = [1, 1, 1]} : vector<10x10x4xbf16> to vector<10x8x4xbf16>
    %32 = tpu.concatenate %29, %30, %31 in 2 : vector<10x8x4xbf16>, vector<10x8x4xbf16>, vector<10x8x4xbf16> -> vector<10x8x12xbf16>
    %33 = vector.shape_cast %32 : vector<10x8x12xbf16> to vector<80x12xbf16>
    %c1_28 = arith.constant 1 : index
    %c0_29 = arith.constant 0 : index
    %c0_30 = arith.constant 0 : index
    %34 = vector.load %arg3[%c1_28, %c0_29, %c0_30] : memref<3x12x8xbf16, #tpu.memory_space<vmem>>, vector<1x12x8xbf16>
    %35 = vector.shape_cast %34 : vector<1x12x8xbf16> to vector<12x8xbf16>
    %cst_31 = arith.constant dense<0.000000e+00> : vector<80x8xf32>
    %36 = tpu.matmul %33, %35, %cst_31 {dimension_numbers = #tpu.dot_dimension_numbers<[1], [0], [0], [1], [0, 0, 1, 1], [], []>} : vector<80x12xbf16>, vector<12x8xbf16>, vector<80x8xf32> -> vector<80x8xf32>
    %37 = arith.addf %27, %36 : vector<80x8xf32>
    %c2 = arith.constant 2 : index
    %c7_32 = arith.constant 7 : index
    %c0_33 = arith.constant 0 : index
    %38 = vector.load %arg8[%c2, %c7_32, %c0_33] : memref<12x17x4xbf16, #tpu.memory_space<vmem>>, vector<10x10x4xbf16>
    %39 = vector.extract_strided_slice %38 {offsets = [0, 0, 0], sizes = [10, 8, 4], strides = [1, 1, 1]} : vector<10x10x4xbf16> to vector<10x8x4xbf16>
    %40 = vector.extract_strided_slice %38 {offsets = [0, 1, 0], sizes = [10, 8, 4], strides = [1, 1, 1]} : vector<10x10x4xbf16> to vector<10x8x4xbf16>
    %41 = vector.extract_strided_slice %38 {offsets = [0, 2, 0], sizes = [10, 8, 4], strides = [1, 1, 1]} : vector<10x10x4xbf16> to vector<10x8x4xbf16>
    %42 = tpu.concatenate %39, %40, %41 in 2 : vector<10x8x4xbf16>, vector<10x8x4xbf16>, vector<10x8x4xbf16> -> vector<10x8x12xbf16>
    %43 = vector.shape_cast %42 : vector<10x8x12xbf16> to vector<80x12xbf16>
    %c2_34 = arith.constant 2 : index
    %c0_35 = arith.constant 0 : index
    %c0_36 = arith.constant 0 : index
    %44 = vector.load %arg3[%c2_34, %c0_35, %c0_36] : memref<3x12x8xbf16, #tpu.memory_space<vmem>>, vector<1x12x8xbf16>
    %45 = vector.shape_cast %44 : vector<1x12x8xbf16> to vector<12x8xbf16>
    %cst_37 = arith.constant dense<0.000000e+00> : vector<80x8xf32>
    %46 = tpu.matmul %43, %45, %cst_37 {dimension_numbers = #tpu.dot_dimension_numbers<[1], [0], [0], [1], [0, 0, 1, 1], [], []>} : vector<80x12xbf16>, vector<12x8xbf16>, vector<80x8xf32> -> vector<80x8xf32>
    %47 = arith.addf %37, %46 : vector<80x8xf32>
    %c0_38 = arith.constant 0 : index
    %c0_39 = arith.constant 0 : index
    %48 = vector.load %arg4[%c0_38, %c0_39] : memref<1x8xf32, #tpu.memory_space<vmem>>, vector<1x8xf32>
    %49 = vector.broadcast %48 : vector<1x8xf32> to vector<80x8xf32>
    %50 = arith.addf %47, %49 : vector<80x8xf32>
    %cst_40 = arith.constant 0.000000e+00 : f32
    %51 = vector.broadcast %cst_40 : f32 to vector<80x8xf32>
    %52 = arith.maximumf %50, %51 : vector<80x8xf32>
    %53 = arith.truncf %52 : vector<80x8xf32> to vector<80x8xbf16>
    %54 = vector.shape_cast %53 : vector<80x8xbf16> to vector<10x8x8xbf16>
    %c0_41 = arith.constant 0 : index
    %c8_42 = arith.constant 8 : index
    %c0_43 = arith.constant 0 : index
    %55 = vector.load %arg9[%c0_41, %c8_42, %c0_43] : memref<10x17x8xbf16, #tpu.memory_space<vmem>>, vector<10x8x8xbf16>
    tpu.vector_store %arg9[%c0_41, %c8_42, %c0_43], %54 {strides = array<i32>} : memref<10x17x8xbf16, #tpu.memory_space<vmem>>, vector<10x8x8xbf16>,
    %c0_i32 = arith.constant 0 : i32
    %56 = arith.cmpi eq, %arg1, %c0_i32 : i32
    %57 = arith.extui %56 : i1 to i32
    %c0_i32_44 = arith.constant 0 : i32
    %58 = arith.cmpi ne, %57, %c0_i32_44 : i32
    scf.if %58 {
      %cst_74 = arith.constant 0.000000e+00 : bf16
      %100 = vector.broadcast %cst_74 : bf16 to vector<1x17x8xbf16>
      %c0_75 = arith.constant 0 : index
      %c0_76 = arith.constant 0 : index
      %c0_77 = arith.constant 0 : index
      %101 = vector.load %arg9[%c0_75, %c0_76, %c0_77] : memref<10x17x8xbf16, #tpu.memory_space<vmem>>, vector<1x17x8xbf16>
      tpu.vector_store %arg9[%c0_75, %c0_76, %c0_77], %100 {strides = array<i32>} : memref<10x17x8xbf16, #tpu.memory_space<vmem>>, vector<1x17x8xbf16>,
    } else {
    }
    %c0_i32_45 = arith.constant 0 : i32
    %59 = arith.cmpi eq, %arg1, %c0_i32_45 : i32
    %60 = arith.extui %59 : i1 to i32
    %c0_i32_46 = arith.constant 0 : i32
    %61 = arith.cmpi ne, %60, %c0_i32_46 : i32
    scf.if %61 {
      %cst_74 = arith.constant 0.000000e+00 : bf16
      %100 = vector.broadcast %cst_74 : bf16 to vector<1x17x8xbf16>
      %c9 = arith.constant 9 : index
      %c0_75 = arith.constant 0 : index
      %c0_76 = arith.constant 0 : index
      %101 = vector.load %arg9[%c9, %c0_75, %c0_76] : memref<10x17x8xbf16, #tpu.memory_space<vmem>>, vector<1x17x8xbf16>
      tpu.vector_store %arg9[%c9, %c0_75, %c0_76], %100 {strides = array<i32>} : memref<10x17x8xbf16, #tpu.memory_space<vmem>>, vector<1x17x8xbf16>,
    } else {
    }
    %c0_47 = arith.constant 0 : index
    %c7_48 = arith.constant 7 : index
    %c0_49 = arith.constant 0 : index
    %62 = vector.load %arg9[%c0_47, %c7_48, %c0_49] : memref<10x17x8xbf16, #tpu.memory_space<vmem>>, vector<8x10x8xbf16>
    %63 = vector.extract_strided_slice %62 {offsets = [0, 0, 0], sizes = [8, 8, 8], strides = [1, 1, 1]} : vector<8x10x8xbf16> to vector<8x8x8xbf16>
    %64 = vector.extract_strided_slice %62 {offsets = [0, 1, 0], sizes = [8, 8, 8], strides = [1, 1, 1]} : vector<8x10x8xbf16> to vector<8x8x8xbf16>
    %65 = vector.extract_strided_slice %62 {offsets = [0, 2, 0], sizes = [8, 8, 8], strides = [1, 1, 1]} : vector<8x10x8xbf16> to vector<8x8x8xbf16>
    %66 = tpu.concatenate %63, %64, %65 in 2 : vector<8x8x8xbf16>, vector<8x8x8xbf16>, vector<8x8x8xbf16> -> vector<8x8x24xbf16>
    %67 = vector.shape_cast %66 : vector<8x8x24xbf16> to vector<64x24xbf16>
    %c0_50 = arith.constant 0 : index
    %c0_51 = arith.constant 0 : index
    %c0_52 = arith.constant 0 : index
    %68 = vector.load %arg5[%c0_50, %c0_51, %c0_52] : memref<3x24x8xbf16, #tpu.memory_space<vmem>>, vector<1x24x8xbf16>
    %69 = vector.shape_cast %68 : vector<1x24x8xbf16> to vector<24x8xbf16>
    %cst_53 = arith.constant dense<0.000000e+00> : vector<64x8xf32>
    %70 = tpu.matmul %67, %69, %cst_53 {dimension_numbers = #tpu.dot_dimension_numbers<[1], [0], [0], [1], [0, 0, 1, 1], [], []>} : vector<64x24xbf16>, vector<24x8xbf16>, vector<64x8xf32> -> vector<64x8xf32>
    %c1_54 = arith.constant 1 : index
    %c7_55 = arith.constant 7 : index
    %c0_56 = arith.constant 0 : index
    %71 = vector.load %arg9[%c1_54, %c7_55, %c0_56] : memref<10x17x8xbf16, #tpu.memory_space<vmem>>, vector<8x10x8xbf16>
    %72 = vector.extract_strided_slice %71 {offsets = [0, 0, 0], sizes = [8, 8, 8], strides = [1, 1, 1]} : vector<8x10x8xbf16> to vector<8x8x8xbf16>
    %73 = vector.extract_strided_slice %71 {offsets = [0, 1, 0], sizes = [8, 8, 8], strides = [1, 1, 1]} : vector<8x10x8xbf16> to vector<8x8x8xbf16>
    %74 = vector.extract_strided_slice %71 {offsets = [0, 2, 0], sizes = [8, 8, 8], strides = [1, 1, 1]} : vector<8x10x8xbf16> to vector<8x8x8xbf16>
    %75 = tpu.concatenate %72, %73, %74 in 2 : vector<8x8x8xbf16>, vector<8x8x8xbf16>, vector<8x8x8xbf16> -> vector<8x8x24xbf16>
    %76 = vector.shape_cast %75 : vector<8x8x24xbf16> to vector<64x24xbf16>
    %c1_57 = arith.constant 1 : index
    %c0_58 = arith.constant 0 : index
    %c0_59 = arith.constant 0 : index
    %77 = vector.load %arg5[%c1_57, %c0_58, %c0_59] : memref<3x24x8xbf16, #tpu.memory_space<vmem>>, vector<1x24x8xbf16>
    %78 = vector.shape_cast %77 : vector<1x24x8xbf16> to vector<24x8xbf16>
    %cst_60 = arith.constant dense<0.000000e+00> : vector<64x8xf32>
    %79 = tpu.matmul %76, %78, %cst_60 {dimension_numbers = #tpu.dot_dimension_numbers<[1], [0], [0], [1], [0, 0, 1, 1], [], []>} : vector<64x24xbf16>, vector<24x8xbf16>, vector<64x8xf32> -> vector<64x8xf32>
    %80 = arith.addf %70, %79 : vector<64x8xf32>
    %c2_61 = arith.constant 2 : index
    %c7_62 = arith.constant 7 : index
    %c0_63 = arith.constant 0 : index
    %81 = vector.load %arg9[%c2_61, %c7_62, %c0_63] : memref<10x17x8xbf16, #tpu.memory_space<vmem>>, vector<8x10x8xbf16>
    %82 = vector.extract_strided_slice %81 {offsets = [0, 0, 0], sizes = [8, 8, 8], strides = [1, 1, 1]} : vector<8x10x8xbf16> to vector<8x8x8xbf16>
    %83 = vector.extract_strided_slice %81 {offsets = [0, 1, 0], sizes = [8, 8, 8], strides = [1, 1, 1]} : vector<8x10x8xbf16> to vector<8x8x8xbf16>
    %84 = vector.extract_strided_slice %81 {offsets = [0, 2, 0], sizes = [8, 8, 8], strides = [1, 1, 1]} : vector<8x10x8xbf16> to vector<8x8x8xbf16>
    %85 = tpu.concatenate %82, %83, %84 in 2 : vector<8x8x8xbf16>, vector<8x8x8xbf16>, vector<8x8x8xbf16> -> vector<8x8x24xbf16>
    %86 = vector.shape_cast %85 : vector<8x8x24xbf16> to vector<64x24xbf16>
    %c2_64 = arith.constant 2 : index
    %c0_65 = arith.constant 0 : index
    %c0_66 = arith.constant 0 : index
    %87 = vector.load %arg5[%c2_64, %c0_65, %c0_66] : memref<3x24x8xbf16, #tpu.memory_space<vmem>>, vector<1x24x8xbf16>
    %88 = vector.shape_cast %87 : vector<1x24x8xbf16> to vector<24x8xbf16>
    %cst_67 = arith.constant dense<0.000000e+00> : vector<64x8xf32>
    %89 = tpu.matmul %86, %88, %cst_67 {dimension_numbers = #tpu.dot_dimension_numbers<[1], [0], [0], [1], [0, 0, 1, 1], [], []>} : vector<64x24xbf16>, vector<24x8xbf16>, vector<64x8xf32> -> vector<64x8xf32>
    %90 = arith.addf %80, %89 : vector<64x8xf32>
    %c0_68 = arith.constant 0 : index
    %c0_69 = arith.constant 0 : index
    %91 = vector.load %arg6[%c0_68, %c0_69] : memref<1x8xf32, #tpu.memory_space<vmem>>, vector<1x8xf32>
    %92 = vector.broadcast %91 : vector<1x8xf32> to vector<64x8xf32>
    %93 = arith.addf %90, %92 : vector<64x8xf32>
    %cst_70 = arith.constant 0.000000e+00 : f32
    %94 = vector.broadcast %cst_70 : f32 to vector<64x8xf32>
    %95 = arith.maximumf %93, %94 : vector<64x8xf32>
    %96 = tpu.transpose %95, [1, 0] : vector<64x8xf32> -> vector<8x64xf32>
    %c0_71 = arith.constant 0 : index
    %c0_72 = arith.constant 0 : index
    %c0_73 = arith.constant 0 : index
    %97 = vector.load %arg7[%c0_71, %c0_72, %c0_73] : memref<1x8x64xf32, #tpu.memory_space<vmem>>, vector<1x8x64xf32>
    %98 = vector.shape_cast %97 : vector<1x8x64xf32> to vector<8x64xf32>
    %99 = vector.shape_cast %96 : vector<8x64xf32> to vector<1x8x64xf32>
    tpu.vector_store %arg7[%c0_71, %c0_72, %c0_73], %99 {strides = array<i32>} : memref<1x8x64xf32, #tpu.memory_space<vmem>>, vector<1x8x64xf32>,
    return
  }
  func.func @transform_0(%arg0: i32, %arg1: i32) -> (i32, i32, i32, i32, i32) {
    %c1_i32 = arith.constant 1 : i32
    %0 = arith.muli %arg0, %c1_i32 : i32
    %1 = arith.addi %0, %arg1 : i32
    %c0_i32 = arith.constant 0 : i32
    %c0_i32_0 = arith.constant 0 : i32
    %c0_i32_1 = arith.constant 0 : i32
    %c0_i32_2 = arith.constant 0 : i32
    %c0_i32_3 = arith.constant 0 : i32
    return %1, %c0_i32, %c0_i32_0, %c0_i32_1, %c0_i32_2 : i32, i32, i32, i32, i32
  }
  func.func @transform_1(%arg0: i32, %arg1: i32) -> (i32, i32, i32) {
    %c0_i32 = arith.constant 0 : i32
    %c0_i32_0 = arith.constant 0 : i32
    %c0_i32_1 = arith.constant 0 : i32
    %c0_i32_2 = arith.constant 0 : i32
    return %c0_i32, %c0_i32_0, %c0_i32_1 : i32, i32, i32
  }
  func.func @transform_2(%arg0: i32, %arg1: i32) -> (i32, i32) {
    %c0_i32 = arith.constant 0 : i32
    %c0_i32_0 = arith.constant 0 : i32
    %c0_i32_1 = arith.constant 0 : i32
    return %c0_i32, %c0_i32_0 : i32, i32
  }
  func.func @transform_3(%arg0: i32, %arg1: i32) -> (i32, i32, i32) {
    %c0_i32 = arith.constant 0 : i32
    %c0_i32_0 = arith.constant 0 : i32
    %c0_i32_1 = arith.constant 0 : i32
    %c0_i32_2 = arith.constant 0 : i32
    return %c0_i32, %c0_i32_0, %c0_i32_1 : i32, i32, i32
  }
  func.func @transform_4(%arg0: i32, %arg1: i32) -> (i32, i32) {
    %c0_i32 = arith.constant 0 : i32
    %c0_i32_0 = arith.constant 0 : i32
    %c0_i32_1 = arith.constant 0 : i32
    return %c0_i32, %c0_i32_0 : i32, i32
  }
  func.func @transform_5(%arg0: i32, %arg1: i32) -> (i32, i32, i32) {
    %c0_i32 = arith.constant 0 : i32
    %c0_i32_0 = arith.constant 0 : i32
    return %arg0, %c0_i32, %arg1 : i32, i32, i32
  }
}

</mosaic_0001>

<llo_original>
// kernel: down_sample_forward.1
$region0: #{down_sample_forward.1}
  #allocation0 [shape = 'u32[]', space=smem, size = 0x4, offset = 0x4, fixed_abs, tag = 'smem constant byte address 0x4 - core index']
  #allocation1 [shape = 'u32[144,128]{1,0:T(1,128)}', space=vmem, size = 0x12000, scoped, tag = 'internal scratch']
  #allocation2 [shape = 'bf16[12,17,4]{2,1,0:T(8,128)(2,1)}', space=vmem, size = 0x12000, scoped, tag = 'scratch operand']
  #allocation3 [shape = 'bf16[10,17,8]{2,1,0:T(8,128)(2,1)}', space=vmem, size = 0xf000, scoped, tag = 'scratch operand']
  %s0 = inlined_call_operand.vmem [shape: bf16[2,12,2,8,8], index: 0, kind: input, shape index: {}]
  %s1 = inlined_call_operand.vmem [shape: bf16[3,12,8], index: 1, kind: input, shape index: {}]
  %s2 = inlined_call_operand.vmem [shape: f32[1,8], index: 2, kind: input, shape index: {}]
  %s3 = inlined_call_operand.vmem [shape: bf16[3,24,8], index: 3, kind: input, shape index: {}]
  %s4 = inlined_call_operand.vmem [shape: f32[1,8], index: 4, kind: input, shape index: {}]
  %s5 = inlined_call_operand.vmem [shape: f32[2,8,64], index: 5, kind: output, shape index: {}]
  %s6 = sld [smem:[#allocation0]]
  $region57: #{down_sample_forward.1} parent=0
    _
  %s8 = ssub.s32 1, %s6
  %s9 = scalar_select 0, %s8, %s6
  loop: start=0, step=1, limit=4
  $region2: #{down_sample_forward.1} parent=0 // loop_pre_header
    _
  $region3: #{down_sample_forward.1} parent=0 // loop_header
    %s11 = sphi 0, %s15
    %p12 = scmp.ge.s32.totalorder %s11, 4
    %s18 = sphi 0, %s30
    %s19 = sphi 0, %s26
    %s20 = sphi 0, %s18
    %s21 = sphi 0, %s19
    %s22 = sphi 0, %s20
    %s23 = sphi 0, %s21
    %s35 = sphi 0, %s37
    %s38 = sphi 0, %s35
    %s39 = sphi 0, %s38
    %s55 = sphi 0, %s39
    %s59 = sphi 0, %s59
    %s61 = sphi 0, %s59
    %s62 = sphi 0, %s61
    %s76 = sphi 0, %s62
    %s80 = sphi 0, %s80
    %s82 = sphi 0, %s80
    %s83 = sphi 0, %s82
    %s97 = sphi 0, %s83
    %s101 = sphi 0, %s101
    %s103 = sphi 0, %s101
    %s104 = sphi 0, %s103
    %s118 = sphi 0, %s104
    %s122 = sphi 0, %s122
    %s124 = sphi 0, %s122
    %s125 = sphi 0, %s124
    %s139 = sphi 0, %s125
    %s147 = sphi 0, %s149
    %s150 = sphi 0, %s147
    %s151 = sphi 0, %s150
    %s167 = sphi 0, %s151
  $region4: #{down_sample_forward.1} parent=0 // loop_header_branch
    %14 = sbr.rel (%p12) target = $region8
  $region5: #{down_sample_forward.1} parent=0 // loop_body
    %s16 = ssub.s32 %s11, 1
    %s17 = ssub.s32 %s11, 2
    %s24 = sadd.s32 1, %s19
    %p25 = scmp.ge.s32.totalorder %s24, 1
    %s26 = scalar_select %p25, 0, %s24
    %s27 = sadd.s32 1, %s18
    %s28 = scalar_select %p25, %s27, %s18
    %p29 = scmp.ge.s32.totalorder %s28, 2
    %s30 = scalar_select %p29, 0, %s28
    %s31 = sadd.s32 %s18, %s19
    %s32 = sadd.s32 %s30, %s26
    %s33 = ssub.s32 %s31, %s32
    %p34 = scmp.eq.s32.totalorder %s33, 0
    %s36 = sadd.s32 %s35, 1
    %s37 = scalar_select %p34, %s35, %s36
    %p40 = pneg %p34
    %p41 = scmp.eq.s32.totalorder %s11, 1
    %p42 = por %p40, %p41
    %p43 = scmp.ne.s32.totalorder %s35, %s38
    %p44 = scmp.eq.s32.totalorder %s11, 0
    %p45 = por %p43, %p44
    %p46 = scmp.ne.s32.totalorder %s35, %s38
    %p47 = scmp.eq.s32.totalorder %s16, 1
    %p48 = por %p46, %p47
    %p49 = scmp.ne.s32.totalorder %s38, %s39
    %p50 = scmp.eq.s32.totalorder %s16, 0
    %p51 = por %p49, %p50
    %p52 = scmp.ne.s32.totalorder %s38, %s39
    %p53 = scmp.eq.s32.totalorder %s17, 1
    %p54 = por %p52, %p53
    %p56 = scmp.ne.s32.totalorder %s39, %s55
    %p57 = scmp.eq.s32.totalorder %s17, 0
    %p58 = por %p56, %p57
    %s60 = sadd.s32 %s59, 1
    %p63 = scmp.eq.s32.totalorder %s11, 1
    %p64 = scmp.ne.s32.totalorder %s59, %s61
    %p65 = scmp.eq.s32.totalorder %s11, 0
    %p66 = por %p64, %p65
    %p67 = scmp.ne.s32.totalorder %s59, %s61
    %p68 = scmp.eq.s32.totalorder %s16, 1
    %p69 = por %p67, %p68
    %p70 = scmp.ne.s32.totalorder %s61, %s62
    %p71 = scmp.eq.s32.totalorder %s16, 0
    %p72 = por %p70, %p71
    %p73 = scmp.ne.s32.totalorder %s61, %s62
    %p74 = scmp.eq.s32.totalorder %s17, 1
    %p75 = por %p73, %p74
    %p77 = scmp.ne.s32.totalorder %s62, %s76
    %p78 = scmp.eq.s32.totalorder %s17, 0
    %p79 = por %p77, %p78
    %s81 = sadd.s32 %s80, 1
    %p84 = scmp.eq.s32.totalorder %s11, 1
    %p85 = scmp.ne.s32.totalorder %s80, %s82
    %p86 = scmp.eq.s32.totalorder %s11, 0
    %p87 = por %p85, %p86
    %p88 = scmp.ne.s32.totalorder %s80, %s82
    %p89 = scmp.eq.s32.totalorder %s16, 1
    %p90 = por %p88, %p89
    %p91 = scmp.ne.s32.totalorder %s82, %s83
    %p92 = scmp.eq.s32.totalorder %s16, 0
    %p93 = por %p91, %p92
    %p94 = scmp.ne.s32.totalorder %s82, %s83
    %p95 = scmp.eq.s32.totalorder %s17, 1
    %p96 = por %p94, %p95
    %p98 = scmp.ne.s32.totalorder %s83, %s97
    %p99 = scmp.eq.s32.totalorder %s17, 0
    %p100 = por %p98, %p99
    %s102 = sadd.s32 %s101, 1
    %p105 = scmp.eq.s32.totalorder %s11, 1
    %p106 = scmp.ne.s32.totalorder %s101, %s103
    %p107 = scmp.eq.s32.totalorder %s11, 0
    %p108 = por %p106, %p107
    %p109 = scmp.ne.s32.totalorder %s101, %s103
    %p110 = scmp.eq.s32.totalorder %s16, 1
    %p111 = por %p109, %p110
    %p112 = scmp.ne.s32.totalorder %s103, %s104
    %p113 = scmp.eq.s32.totalorder %s16, 0
    %p114 = por %p112, %p113
    %p115 = scmp.ne.s32.totalorder %s103, %s104
    %p116 = scmp.eq.s32.totalorder %s17, 1
    %p117 = por %p115, %p116
    %p119 = scmp.ne.s32.totalorder %s104, %s118
    %p120 = scmp.eq.s32.totalorder %s17, 0
    %p121 = por %p119, %p120
    %s123 = sadd.s32 %s122, 1
    %p126 = scmp.eq.s32.totalorder %s11, 1
    %p127 = scmp.ne.s32.totalorder %s122, %s124
    %p128 = scmp.eq.s32.totalorder %s11, 0
    %p129 = por %p127, %p128
    %p130 = scmp.ne.s32.totalorder %s122, %s124
    %p131 = scmp.eq.s32.totalorder %s16, 1
    %p132 = por %p130, %p131
    %p133 = scmp.ne.s32.totalorder %s124, %s125
    %p134 = scmp.eq.s32.totalorder %s16, 0
    %p135 = por %p133, %p134
    %p136 = scmp.ne.s32.totalorder %s124, %s125
    %p137 = scmp.eq.s32.totalorder %s17, 1
    %p138 = por %p136, %p137
    %p140 = scmp.ne.s32.totalorder %s125, %s139
    %p141 = scmp.eq.s32.totalorder %s17, 0
    %p142 = por %p140, %p141
    %s143 = ssub.s32 %s18, %s30
    %s144 = ssub.s32 %s19, %s26
    %s145 = sor.u32 %s143, %s144
    %p146 = scmp.eq.s32.totalorder %s145, 0
    %s148 = sadd.s32 %s147, 1
    %s149 = scalar_select %p146, %s147, %s148
    %p152 = pneg %p146
    %p153 = scmp.eq.s32.totalorder %s11, 1
    %p154 = por %p152, %p153
    %p155 = scmp.ne.s32.totalorder %s147, %s150
    %p156 = scmp.eq.s32.totalorder %s11, 0
    %p157 = por %p155, %p156
    %p158 = scmp.ne.s32.totalorder %s147, %s150
    %p159 = scmp.eq.s32.totalorder %s16, 1
    %p160 = por %p158, %p159
    %p161 = scmp.ne.s32.totalorder %s150, %s151
    %p162 = scmp.eq.s32.totalorder %s16, 0
    %p163 = por %p161, %p162
    %p164 = scmp.ne.s32.totalorder %s150, %s151
    %p165 = scmp.eq.s32.totalorder %s17, 1
    %p166 = por %p164, %p165
    %p168 = scmp.ne.s32.totalorder %s151, %s167
    %p169 = scmp.eq.s32.totalorder %s17, 0
    %p170 = por %p168, %p169
    %p171 = scmp.le.s32.totalorder 1, %s11
    %p172 = scmp.lt.s32.totalorder %s11, 3
    %p173 = pnand %p171, %p172
    %p174 = pneg %p173
    // Predicated region
    $region9: #{down_sample_forward.1} parent=5 // pred_check
      _
    $region10: #{down_sample_forward.1} parent=5 // pred_check_branch
      %176 = sbr.rel (%p173) target = $region12
    $region11: #{down_sample_forward.1} parent=5 // pred_region
      %s177 = ssub.s32 %s11, 1
      // Predicated region
      $region13: #{down_sample_forward.1} parent=11 // pred_check
        %p178 = pneg %p72
      $region14: #{down_sample_forward.1} parent=11 // pred_check_branch
        %180 = sbr.rel (%p178) target = $region16
      $region15: #{down_sample_forward.1} parent=11 // pred_region
        _
      $region16: #{down_sample_forward.1} parent=11 // pred_fallthru
        _
      // Predicated region
      $region17: #{down_sample_forward.1} parent=11 // pred_check
        %p181 = pneg %p93
      $region18: #{down_sample_forward.1} parent=11 // pred_check_branch
        %183 = sbr.rel (%p181) target = $region20
      $region19: #{down_sample_forward.1} parent=11 // pred_region
        _
      $region20: #{down_sample_forward.1} parent=11 // pred_fallthru
        _
      // Predicated region
      $region21: #{down_sample_forward.1} parent=11 // pred_check
        %p184 = pneg %p114
      $region22: #{down_sample_forward.1} parent=11 // pred_check_branch
        %186 = sbr.rel (%p184) target = $region24
      $region23: #{down_sample_forward.1} parent=11 // pred_region
        _
      $region24: #{down_sample_forward.1} parent=11 // pred_fallthru
        _
      // Predicated region
      $region25: #{down_sample_forward.1} parent=11 // pred_check
        %p187 = pneg %p135
      $region26: #{down_sample_forward.1} parent=11 // pred_check_branch
        %189 = sbr.rel (%p187) target = $region28
      $region27: #{down_sample_forward.1} parent=11 // pred_region
        _
      $region28: #{down_sample_forward.1} parent=11 // pred_fallthru
        _
    $region12: #{down_sample_forward.1} parent=5 // pred_fallthru
      _
    %p190 = scmp.lt.s32.totalorder %s11, 2
    // Predicated region
    $region29: #{down_sample_forward.1} parent=5 // pred_check
      %p191 = pneg %p190
    $region30: #{down_sample_forward.1} parent=5 // pred_check_branch
      %193 = sbr.rel (%p191) target = $region32
    $region31: #{down_sample_forward.1} parent=5 // pred_region
      // Predicated region
      $region33: #{down_sample_forward.1} parent=31 // pred_check
        %p194 = pneg %p45
      $region34: #{down_sample_forward.1} parent=31 // pred_check_branch
        %196 = sbr.rel (%p194) target = $region36
      $region35: #{down_sample_forward.1} parent=31 // pred_region
        %s197 = sadd.s32 %s18, %s19
        %p198 = scmp.lt.s32.totalorder %s197, 1
        %s199 = scalar_select %p198, %s197, 1
        %s200 = smul.addr %s199, 24
        %s201 = smul.addr %s200, 4
        %s202 = scalar_lea.vmem %s0, %s201
        %s203 = sadd.s32 %s18, %s19
      $region36: #{down_sample_forward.1} parent=31 // pred_fallthru
        _
    $region32: #{down_sample_forward.1} parent=5 // pred_fallthru
      _
    %p204 = scmp.le.s32.totalorder 1, %s11
    %p205 = scmp.lt.s32.totalorder %s11, 3
    %p206 = pnand %p204, %p205
    %p207 = pneg %p206
    // Predicated region
    $region37: #{down_sample_forward.1} parent=5 // pred_check
      _
    $region38: #{down_sample_forward.1} parent=5 // pred_check_branch
      %209 = sbr.rel (%p206) target = $region40
    $region39: #{down_sample_forward.1} parent=5 // pred_region
      %s210 = ssub.s32 %s11, 1
      %s211 = sadd.s32 %s20, %s21
      %p212 = scmp.lt.s32.totalorder %s211, 1
      %s213 = scalar_select %p212, %s211, 1
      %s214 = smul.addr %s213, 24
      %s215 = smul.addr %s214, 4
      %s216 = scalar_lea.vmem %s0, %s215
      %p217 = pneg %p51
      %p218 = pneg %p48
      %p219 = pneg %p72
      %p220 = pneg %p69
      %p221 = pneg %p93
      %p222 = pneg %p90
      %p223 = pneg %p114
      %p224 = pneg %p111
      %p225 = pneg %p135
      %p226 = pneg %p132
      %p227 = pneg %p163
      %p228 = pneg %p160
      %p229 = scmp.lt.s32.totalorder %s20, 1
      %s230 = scalar_select %p229, %s20, 1
      %p231 = scmp.lt.s32.totalorder %s21, 0
      %s232 = scalar_select %p231, %s21, 0
      %s233 = sadd.s32 %s232, %s230
      %s234 = smul.addr %s233, 8
      %s235 = scalar_lea.vmem %s5, %s234
      %s236 = sadd.s32 %s20, %s21
      %p237 = scmp.lt.s32.totalorder %s236, 1
      %s238 = scalar_select %p237, %s236, 1
      %s239 = smul.addr %s238, 24
      %s240 = smul.addr %s239, 4
      %s241 = scalar_lea.vmem %s0, %s240
      %s242 = sadd.s32 %s20, %s21
      %p243 = scmp.lt.s32.totalorder %s20, 1
      %s244 = scalar_select %p243, %s20, 1
      %p245 = scmp.lt.s32.totalorder %s21, 0
      %s246 = scalar_select %p245, %s21, 0
      %s247 = sadd.s32 %s246, %s244
      %s248 = smul.addr %s247, 8
      %s249 = scalar_lea.vmem %s5, %s248
      %v251 = vld [vmem:[%s241] sm:$0xf]
      %v252 = vld [vmem:[%s241 + $0x4] sm:$0xf]
      %v253 = vld [vmem:[%s241 + $0x8] sm:$0xf]
      %v254 = vld [vmem:[%s241 + $0xc] sm:$0xf]
      %v255 = vld [vmem:[%s241 + $0x10] sm:$0xf]
      %v256 = vld [vmem:[%s241 + $0x14] sm:$0xf]
      %v257 = vld [vmem:[%s241 + $0x18] sm:$0xf]
      %v258 = vld [vmem:[%s241 + $0x1c] sm:$0xf]
      %v259 = vld [vmem:[%s241 + $0x20] sm:$0xf]
      %v260 = vld [vmem:[%s241 + $0x24] sm:$0xf]
      %v261 = vld [vmem:[%s241 + $0x28] sm:$0xf]
      %v262 = vld [vmem:[%s241 + $0x2c] sm:$0xf]
      %v263 = vld [vmem:[%s241 + $0x30] sm:$0xf]
      %v264 = vld [vmem:[%s241 + $0x34] sm:$0xf]
      %v265 = vld [vmem:[%s241 + $0x38] sm:$0xf]
      %v266 = vld [vmem:[%s241 + $0x3c] sm:$0xf]
      %v267 = vld [vmem:[%s241 + $0x40] sm:$0xf]
      %v268 = vld [vmem:[%s241 + $0x44] sm:$0xf]
      %v269 = vld [vmem:[%s241 + $0x48] sm:$0xf]
      %v270 = vld [vmem:[%s241 + $0x4c] sm:$0xf]
      %v271 = vld [vmem:[%s241 + $0x50] sm:$0xf]
      %v272 = vld [vmem:[%s241 + $0x54] sm:$0xf]
      %v273 = vld [vmem:[%s241 + $0x58] sm:$0xf]
      %v274 = vld [vmem:[%s241 + $0x5c] sm:$0xf]
      %v275 = vmax.bf16 %v251, %v252
      %v276 = vmax.bf16 %v253, %v254
      %v277 = vmax.bf16 %v255, %v256
      %v278 = vmax.bf16 %v257, %v258
      %v279 = vmax.bf16 %v259, %v260
      %v280 = vmax.bf16 %v261, %v262
      %v281 = vmax.bf16 %v263, %v264
      %v282 = vmax.bf16 %v265, %v266
      %v283 = vmax.bf16 %v267, %v268
      %v284 = vmax.bf16 %v269, %v270
      %v285 = vmax.bf16 %v271, %v272
      %v286 = vmax.bf16 %v273, %v274
      %299 = vrot.lane.b32.xlu0 %v275, 124
      %v300 = vpop.permute.xlu0 %299
      %301 = vrot.lane.b32.xlu0 %v276, 124
      %v302 = vpop.permute.xlu0 %301
      %303 = vrot.lane.b32.xlu0 %v277, 124
      %v304 = vpop.permute.xlu0 %303
      %305 = vrot.lane.b32.xlu0 %v278, 124
      %v306 = vpop.permute.xlu0 %305
      %307 = vrot.lane.b32.xlu0 %v279, 124
      %v308 = vpop.permute.xlu0 %307
      %309 = vrot.lane.b32.xlu0 %v280, 124
      %v310 = vpop.permute.xlu0 %309
      %311 = vrot.lane.b32.xlu0 %v281, 124
      %v312 = vpop.permute.xlu0 %311
      %313 = vrot.lane.b32.xlu0 %v282, 124
      %v314 = vpop.permute.xlu0 %313
      %315 = vrot.lane.b32.xlu0 %v283, 124
      %v316 = vpop.permute.xlu0 %315
      %317 = vrot.lane.b32.xlu0 %v284, 124
      %v318 = vpop.permute.xlu0 %317
      %319 = vrot.lane.b32.xlu0 %v285, 124
      %v320 = vpop.permute.xlu0 %319
      %321 = vrot.lane.b32.xlu0 %v286, 124
      %v322 = vpop.permute.xlu0 %321
      %v335 = vmax.bf16 %v275, %v300
      %v336 = vmax.bf16 %v276, %v302
      %v337 = vmax.bf16 %v277, %v304
      %v338 = vmax.bf16 %v278, %v306
      %v339 = vmax.bf16 %v279, %v308
      %v340 = vmax.bf16 %v280, %v310
      %v341 = vmax.bf16 %v281, %v312
      %v342 = vmax.bf16 %v282, %v314
      %v343 = vmax.bf16 %v283, %v316
      %v344 = vmax.bf16 %v284, %v318
      %v345 = vmax.bf16 %v285, %v320
      %v346 = vmax.bf16 %v286, %v322
      %vm347 = vcmask 27651
      %vm348 = vsmask.f32 7950
      %vm349 = vmand %vm347, %vm348
      %v350 = vld [vmem:[#allocation2] sm:$0x8]
      %v351 = vsel %vm349, 0, %v350
      %352 = vst [vmem:[#allocation2] sm:$0x8] %v351
      %v353 = vld [vmem:[#allocation2 + $0xc] sm:$0x8]
      %v354 = vsel %vm349, 0, %v353
      %355 = vst [vmem:[#allocation2 + $0xc] sm:$0x8] %v354
      %v356 = vld [vmem:[#allocation2 + $0x18] sm:$0x8]
      %v357 = vsel %vm349, 0, %v356
      %358 = vst [vmem:[#allocation2 + $0x18] sm:$0x8] %v357
      %v359 = vld [vmem:[#allocation2 + $0x24] sm:$0x8]
      %v360 = vsel %vm349, 0, %v359
      %361 = vst [vmem:[#allocation2 + $0x24] sm:$0x8] %v360
      %v362 = vld [vmem:[#allocation2 + $0x30] sm:$0x8]
      %v363 = vsel %vm349, 0, %v362
      %364 = vst [vmem:[#allocation2 + $0x30] sm:$0x8] %v363
      %v365 = vld [vmem:[#allocation2 + $0x3c] sm:$0x8]
      %v366 = vsel %vm349, 0, %v365
      %367 = vst [vmem:[#allocation2 + $0x3c] sm:$0x8] %v366
      %v368 = vld [vmem:[#allocation2 + $0x48] sm:$0x8]
      %v369 = vsel %vm349, 0, %v368
      %370 = vst [vmem:[#allocation2 + $0x48] sm:$0x8] %v369
      %v371 = vld [vmem:[#allocation2 + $0x54] sm:$0x8]
      %v372 = vsel %vm349, 0, %v371
      %373 = vst [vmem:[#allocation2 + $0x54] sm:$0x8] %v372
      %v374 = vld [vmem:[#allocation2 + $0x60] sm:$0x8]
      %v375 = vsel %vm349, 0, %v374
      %376 = vst [vmem:[#allocation2 + $0x60] sm:$0x8] %v375
      %v377 = vld [vmem:[#allocation2 + $0x6c] sm:$0x8]
      %v378 = vsel %vm349, 0, %v377
      %379 = vst [vmem:[#allocation2 + $0x6c] sm:$0x8] %v378
      %v380 = vld [vmem:[#allocation2 + $0x78] sm:$0x8]
      %v381 = vsel %vm349, 0, %v380
      %382 = vst [vmem:[#allocation2 + $0x78] sm:$0x8] %v381
      %v383 = vld [vmem:[#allocation2 + $0x84] sm:$0x8]
      %v384 = vsel %vm349, 0, %v383
      %385 = vst [vmem:[#allocation2 + $0x84] sm:$0x8] %v384
      %vm386 = vcmask 24576
      %vm387 = vsmask.f32 256
      %vm388 = vmand %vm386, %vm387
      %v389 = vld [vmem:[#allocation2 + $0x8] sm:$0x1]
      %v390 = vsel %vm388, 0, %v389
      %391 = vst [vmem:[#allocation2 + $0x8] sm:$0x1] %v390
      %v392 = vld [vmem:[#allocation2 + $0x14] sm:$0x1]
      %v393 = vsel %vm388, 0, %v392
      %394 = vst [vmem:[#allocation2 + $0x14] sm:$0x1] %v393
      %v395 = vld [vmem:[#allocation2 + $0x20] sm:$0x1]
      %v396 = vsel %vm388, 0, %v395
      %397 = vst [vmem:[#allocation2 + $0x20] sm:$0x1] %v396
      %v398 = vld [vmem:[#allocation2 + $0x2c] sm:$0x1]
      %v399 = vsel %vm388, 0, %v398
      %400 = vst [vmem:[#allocation2 + $0x2c] sm:$0x1] %v399
      %v401 = vld [vmem:[#allocation2 + $0x38] sm:$0x1]
      %v402 = vsel %vm388, 0, %v401
      %403 = vst [vmem:[#allocation2 + $0x38] sm:$0x1] %v402
      %v404 = vld [vmem:[#allocation2 + $0x44] sm:$0x1]
      %v405 = vsel %vm388, 0, %v404
      %406 = vst [vmem:[#allocation2 + $0x44] sm:$0x1] %v405
      %v407 = vld [vmem:[#allocation2 + $0x50] sm:$0x1]
      %v408 = vsel %vm388, 0, %v407
      %409 = vst [vmem:[#allocation2 + $0x50] sm:$0x1] %v408
      %v410 = vld [vmem:[#allocation2 + $0x5c] sm:$0x1]
      %v411 = vsel %vm388, 0, %v410
      %412 = vst [vmem:[#allocation2 + $0x5c] sm:$0x1] %v411
      %v413 = vld [vmem:[#allocation2 + $0x68] sm:$0x1]
      %v414 = vsel %vm388, 0, %v413
      %415 = vst [vmem:[#allocation2 + $0x68] sm:$0x1] %v414
      %v416 = vld [vmem:[#allocation2 + $0x74] sm:$0x1]
      %v417 = vsel %vm388, 0, %v416
      %418 = vst [vmem:[#allocation2 + $0x74] sm:$0x1] %v417
      %v419 = vld [vmem:[#allocation2 + $0x80] sm:$0x1]
      %v420 = vsel %vm388, 0, %v419
      %421 = vst [vmem:[#allocation2 + $0x80] sm:$0x1] %v420
      %v422 = vld [vmem:[#allocation2 + $0x8c] sm:$0x1]
      %v423 = vsel %vm388, 0, %v422
      %424 = vst [vmem:[#allocation2 + $0x8c] sm:$0x1] %v423
      %vm425 = vcmask 60419
      %vm426 = vmand %vm425, %vm348
      %v427 = vld [vmem:[#allocation3] sm:$0x8]
      %v428 = vsel %vm426, 0, %v427
      %429 = vst [vmem:[#allocation3] sm:$0x8] %v428
      %v430 = vld [vmem:[#allocation3 + $0xc] sm:$0x8]
      %v431 = vsel %vm426, 0, %v430
      %432 = vst [vmem:[#allocation3 + $0xc] sm:$0x8] %v431
      %v433 = vld [vmem:[#allocation3 + $0x18] sm:$0x8]
      %v434 = vsel %vm426, 0, %v433
      %435 = vst [vmem:[#allocation3 + $0x18] sm:$0x8] %v434
      %v436 = vld [vmem:[#allocation3 + $0x24] sm:$0x8]
      %v437 = vsel %vm426, 0, %v436
      %438 = vst [vmem:[#allocation3 + $0x24] sm:$0x8] %v437
      %v439 = vld [vmem:[#allocation3 + $0x30] sm:$0x8]
      %v440 = vsel %vm426, 0, %v439
      %441 = vst [vmem:[#allocation3 + $0x30] sm:$0x8] %v440
      %v442 = vld [vmem:[#allocation3 + $0x3c] sm:$0x8]
      %v443 = vsel %vm426, 0, %v442
      %444 = vst [vmem:[#allocation3 + $0x3c] sm:$0x8] %v443
      %v445 = vld [vmem:[#allocation3 + $0x48] sm:$0x8]
      %v446 = vsel %vm426, 0, %v445
      %447 = vst [vmem:[#allocation3 + $0x48] sm:$0x8] %v446
      %v448 = vld [vmem:[#allocation3 + $0x54] sm:$0x8]
      %v449 = vsel %vm426, 0, %v448
      %450 = vst [vmem:[#allocation3 + $0x54] sm:$0x8] %v449
      %v451 = vld [vmem:[#allocation3 + $0x60] sm:$0x8]
      %v452 = vsel %vm426, 0, %v451
      %453 = vst [vmem:[#allocation3 + $0x60] sm:$0x8] %v452
      %v454 = vld [vmem:[#allocation3 + $0x6c] sm:$0x8]
      %v455 = vsel %vm426, 0, %v454
      %456 = vst [vmem:[#allocation3 + $0x6c] sm:$0x8] %v455
      %vm457 = vcmask 57344
      %vm458 = vmand %vm457, %vm387
      %v459 = vld [vmem:[#allocation3 + $0x8] sm:$0x1]
      %v460 = vsel %vm458, 0, %v459
      %461 = vst [vmem:[#allocation3 + $0x8] sm:$0x1] %v460
      %v462 = vld [vmem:[#allocation3 + $0x14] sm:$0x1]
      %v463 = vsel %vm458, 0, %v462
      %464 = vst [vmem:[#allocation3 + $0x14] sm:$0x1] %v463
      %v465 = vld [vmem:[#allocation3 + $0x20] sm:$0x1]
      %v466 = vsel %vm458, 0, %v465
      %467 = vst [vmem:[#allocation3 + $0x20] sm:$0x1] %v466
      %v468 = vld [vmem:[#allocation3 + $0x2c] sm:$0x1]
      %v469 = vsel %vm458, 0, %v468
      %470 = vst [vmem:[#allocation3 + $0x2c] sm:$0x1] %v469
      %v471 = vld [vmem:[#allocation3 + $0x38] sm:$0x1]
      %v472 = vsel %vm458, 0, %v471
      %473 = vst [vmem:[#allocation3 + $0x38] sm:$0x1] %v472
      %v474 = vld [vmem:[#allocation3 + $0x44] sm:$0x1]
      %v475 = vsel %vm458, 0, %v474
      %476 = vst [vmem:[#allocation3 + $0x44] sm:$0x1] %v475
      %v477 = vld [vmem:[#allocation3 + $0x50] sm:$0x1]
      %v478 = vsel %vm458, 0, %v477
      %479 = vst [vmem:[#allocation3 + $0x50] sm:$0x1] %v478
      %v480 = vld [vmem:[#allocation3 + $0x5c] sm:$0x1]
      %v481 = vsel %vm458, 0, %v480
      %482 = vst [vmem:[#allocation3 + $0x5c] sm:$0x1] %v481
      %v483 = vld [vmem:[#allocation3 + $0x68] sm:$0x1]
      %v484 = vsel %vm458, 0, %v483
      %485 = vst [vmem:[#allocation3 + $0x68] sm:$0x1] %v484
      %v486 = vld [vmem:[#allocation3 + $0x74] sm:$0x1]
      %v487 = vsel %vm458, 0, %v486
      %488 = vst [vmem:[#allocation3 + $0x74] sm:$0x1] %v487
      %vm489 = vcmask 27648
      %490 = vst.msk [vmem:[#allocation2 + $0x4] sm:$0xf] %vm489, %v335
      %491 = vst.msk [vmem:[#allocation2 + $0x10] sm:$0xf] %vm489, %v336
      %492 = vst.msk [vmem:[#allocation2 + $0x1c] sm:$0xf] %vm489, %v337
      %493 = vst.msk [vmem:[#allocation2 + $0x28] sm:$0xf] %vm489, %v338
      %494 = vst.msk [vmem:[#allocation2 + $0x34] sm:$0xf] %vm489, %v339
      %495 = vst.msk [vmem:[#allocation2 + $0x40] sm:$0xf] %vm489, %v340
      %496 = vst.msk [vmem:[#allocation2 + $0x4c] sm:$0xf] %vm489, %v341
      %497 = vst.msk [vmem:[#allocation2 + $0x58] sm:$0xf] %vm489, %v342
      %498 = vst.msk [vmem:[#allocation2 + $0x64] sm:$0xf] %vm489, %v343
      %499 = vst.msk [vmem:[#allocation2 + $0x70] sm:$0xf] %vm489, %v344
      %500 = vst.msk [vmem:[#allocation2 + $0x7c] sm:$0xf] %vm489, %v345
      %501 = vst.msk [vmem:[#allocation2 + $0x88] sm:$0xf] %vm489, %v346
      %v502 = vld [vmem:[#allocation2] sm:$0x8]
      %v503 = vld [vmem:[#allocation2 + $0x4] sm:$0xf]
      %v504 = vld [vmem:[#allocation2 + $0x8] sm:$0x1]
      %v505 = vld [vmem:[#allocation2 + $0xc] sm:$0x8]
      %v506 = vld [vmem:[#allocation2 + $0x10] sm:$0xf]
      %v507 = vld [vmem:[#allocation2 + $0x14] sm:$0x1]
      %v508 = vld [vmem:[#allocation2 + $0x18] sm:$0x8]
      %v509 = vld [vmem:[#allocation2 + $0x1c] sm:$0xf]
      %v510 = vld [vmem:[#allocation2 + $0x20] sm:$0x1]
      %v511 = vld [vmem:[#allocation2 + $0x24] sm:$0x8]
      %v512 = vld [vmem:[#allocation2 + $0x28] sm:$0xf]
      %v513 = vld [vmem:[#allocation2 + $0x2c] sm:$0x1]
      %v514 = vld [vmem:[#allocation2 + $0x30] sm:$0x8]
      %v515 = vld [vmem:[#allocation2 + $0x34] sm:$0xf]
      %v516 = vld [vmem:[#allocation2 + $0x38] sm:$0x1]
      %v517 = vld [vmem:[#allocation2 + $0x3c] sm:$0x8]
      %v518 = vld [vmem:[#allocation2 + $0x40] sm:$0xf]
      %v519 = vld [vmem:[#allocation2 + $0x44] sm:$0x1]
      %v520 = vld [vmem:[#allocation2 + $0x48] sm:$0x8]
      %v521 = vld [vmem:[#allocation2 + $0x4c] sm:$0xf]
      %v522 = vld [vmem:[#allocation2 + $0x50] sm:$0x1]
      %v523 = vld [vmem:[#allocation2 + $0x54] sm:$0x8]
      %v524 = vld [vmem:[#allocation2 + $0x58] sm:$0xf]
      %v525 = vld [vmem:[#allocation2 + $0x5c] sm:$0x1]
      %v526 = vld [vmem:[#allocation2 + $0x60] sm:$0x8]
      %v527 = vld [vmem:[#allocation2 + $0x64] sm:$0xf]
      %v528 = vld [vmem:[#allocation2 + $0x68] sm:$0x1]
      %v529 = vld [vmem:[#allocation2 + $0x6c] sm:$0x8]
      %v530 = vld [vmem:[#allocation2 + $0x70] sm:$0xf]
      %v531 = vld [vmem:[#allocation2 + $0x74] sm:$0x1]
      %v552 = vunpack.c.l.b16 %v502
      %v553 = vunpack.c.l.b16 %v503
      %v554 = vunpack.c.l.b16 %v505
      %v555 = vunpack.c.l.b16 %v506
      %v556 = vunpack.c.l.b16 %v508
      %v557 = vunpack.c.l.b16 %v509
      %v558 = vunpack.c.l.b16 %v511
      %v559 = vunpack.c.l.b16 %v512
      %v560 = vunpack.c.l.b16 %v514
      %v561 = vunpack.c.l.b16 %v515
      %v562 = vunpack.c.l.b16 %v517
      %v563 = vunpack.c.l.b16 %v518
      %v564 = vunpack.c.l.b16 %v520
      %v565 = vunpack.c.l.b16 %v521
      %v566 = vunpack.c.l.b16 %v523
      %v567 = vunpack.c.l.b16 %v524
      %v568 = vunpack.c.l.b16 %v526
      %v569 = vunpack.c.l.b16 %v527
      %v570 = vunpack.c.l.b16 %v529
      %v571 = vunpack.c.l.b16 %v530
      %v572 = vpack.c.b16 %v553, %v552
      %v573 = vpack.c.b16 %v555, %v554
      %v574 = vpack.c.b16 %v557, %v556
      %v575 = vpack.c.b16 %v559, %v558
      %v576 = vpack.c.b16 %v561, %v560
      %v577 = vpack.c.b16 %v563, %v562
      %v578 = vpack.c.b16 %v565, %v564
      %v579 = vpack.c.b16 %v567, %v566
      %v580 = vpack.c.b16 %v569, %v568
      %v581 = vpack.c.b16 %v571, %v570
      %v582 = vpack.c.b16 %v553, %v553
      %v583 = vpack.c.b16 %v555, %v555
      %v584 = vpack.c.b16 %v557, %v557
      %v585 = vpack.c.b16 %v559, %v559
      %v586 = vpack.c.b16 %v561, %v561
      %v587 = vpack.c.b16 %v563, %v563
      %v588 = vpack.c.b16 %v565, %v565
      %v589 = vpack.c.b16 %v567, %v567
      %v590 = vpack.c.b16 %v569, %v569
      %v591 = vpack.c.b16 %v571, %v571
      %v593 = vshrl.u32 %v582, 16
      %v595 = vrot.slane %v593, 4
      %v596 = vshll.u32 %v582, 16
      %v598 = vrot.slane %v596, 5
      %v599 = vor.u32 %v595, %v598
      %v601 = vshrl.u32 %v583, 16
      %v603 = vrot.slane %v601, 4
      %v604 = vshll.u32 %v583, 16
      %v606 = vrot.slane %v604, 5
      %v607 = vor.u32 %v603, %v606
      %v609 = vshrl.u32 %v584, 16
      %v611 = vrot.slane %v609, 4
      %v612 = vshll.u32 %v584, 16
      %v614 = vrot.slane %v612, 5
      %v615 = vor.u32 %v611, %v614
      %v617 = vshrl.u32 %v585, 16
      %v619 = vrot.slane %v617, 4
      %v620 = vshll.u32 %v585, 16
      %v622 = vrot.slane %v620, 5
      %v623 = vor.u32 %v619, %v622
      %v625 = vshrl.u32 %v586, 16
      %v627 = vrot.slane %v625, 4
      %v628 = vshll.u32 %v586, 16
      %v630 = vrot.slane %v628, 5
      %v631 = vor.u32 %v627, %v630
      %v633 = vshrl.u32 %v587, 16
      %v635 = vrot.slane %v633, 4
      %v636 = vshll.u32 %v587, 16
      %v638 = vrot.slane %v636, 5
      %v639 = vor.u32 %v635, %v638
      %v641 = vshrl.u32 %v588, 16
      %v643 = vrot.slane %v641, 4
      %v644 = vshll.u32 %v588, 16
      %v646 = vrot.slane %v644, 5
      %v647 = vor.u32 %v643, %v646
      %v649 = vshrl.u32 %v589, 16
      %v651 = vrot.slane %v649, 4
      %v652 = vshll.u32 %v589, 16
      %v654 = vrot.slane %v652, 5
      %v655 = vor.u32 %v651, %v654
      %v657 = vshrl.u32 %v590, 16
      %v659 = vrot.slane %v657, 4
      %v660 = vshll.u32 %v590, 16
      %v662 = vrot.slane %v660, 5
      %v663 = vor.u32 %v659, %v662
      %v665 = vshrl.u32 %v591, 16
      %v667 = vrot.slane %v665, 4
      %v668 = vshll.u32 %v591, 16
      %v670 = vrot.slane %v668, 5
      %v671 = vor.u32 %v667, %v670
      %672 = vrot.lane.b32.xlu0 %v599, 4
      %v673 = vpop.permute.xlu0 %672
      %674 = vrot.lane.b32.xlu0 %v607, 4
      %v675 = vpop.permute.xlu0 %674
      %676 = vrot.lane.b32.xlu0 %v615, 4
      %v677 = vpop.permute.xlu0 %676
      %678 = vrot.lane.b32.xlu0 %v623, 4
      %v679 = vpop.permute.xlu0 %678
      %680 = vrot.lane.b32.xlu0 %v631, 4
      %v681 = vpop.permute.xlu0 %680
      %682 = vrot.lane.b32.xlu0 %v639, 4
      %v683 = vpop.permute.xlu0 %682
      %684 = vrot.lane.b32.xlu0 %v647, 4
      %v685 = vpop.permute.xlu0 %684
      %686 = vrot.lane.b32.xlu0 %v655, 4
      %v687 = vpop.permute.xlu0 %686
      %688 = vrot.lane.b32.xlu0 %v663, 4
      %v689 = vpop.permute.xlu0 %688
      %690 = vrot.lane.b32.xlu0 %v671, 4
      %v691 = vpop.permute.xlu0 %690
      %v702 = vunpack.c.l.b16 %v504
      %v703 = vunpack.c.l.b16 %v507
      %v704 = vunpack.c.l.b16 %v510
      %v705 = vunpack.c.l.b16 %v513
      %v706 = vunpack.c.l.b16 %v516
      %v707 = vunpack.c.l.b16 %v519
      %v708 = vunpack.c.l.b16 %v522
      %v709 = vunpack.c.l.b16 %v525
      %v710 = vunpack.c.l.b16 %v528
      %v711 = vunpack.c.l.b16 %v531
      %v712 = vpack.c.b16 %v702, %v553
      %v713 = vpack.c.b16 %v703, %v555
      %v714 = vpack.c.b16 %v704, %v557
      %v715 = vpack.c.b16 %v705, %v559
      %v716 = vpack.c.b16 %v706, %v561
      %v717 = vpack.c.b16 %v707, %v563
      %v718 = vpack.c.b16 %v708, %v565
      %v719 = vpack.c.b16 %v709, %v567
      %v720 = vpack.c.b16 %v710, %v569
      %v721 = vpack.c.b16 %v711, %v571
      %v722 = vrot.slane %v712, 5
      %v723 = vrot.slane %v713, 5
      %v724 = vrot.slane %v714, 5
      %v725 = vrot.slane %v715, 5
      %v726 = vrot.slane %v716, 5
      %v727 = vrot.slane %v717, 5
      %v728 = vrot.slane %v718, 5
      %v729 = vrot.slane %v719, 5
      %v730 = vrot.slane %v720, 5
      %v731 = vrot.slane %v721, 5
      %732 = vrot.lane.b32.xlu0 %v722, 8
      %v733 = vpop.permute.xlu0 %732
      %734 = vrot.lane.b32.xlu0 %v723, 8
      %v735 = vpop.permute.xlu0 %734
      %736 = vrot.lane.b32.xlu0 %v724, 8
      %v737 = vpop.permute.xlu0 %736
      %738 = vrot.lane.b32.xlu0 %v725, 8
      %v739 = vpop.permute.xlu0 %738
      %740 = vrot.lane.b32.xlu0 %v726, 8
      %v741 = vpop.permute.xlu0 %740
      %742 = vrot.lane.b32.xlu0 %v727, 8
      %v743 = vpop.permute.xlu0 %742
      %744 = vrot.lane.b32.xlu0 %v728, 8
      %v745 = vpop.permute.xlu0 %744
      %746 = vrot.lane.b32.xlu0 %v729, 8
      %v747 = vpop.permute.xlu0 %746
      %748 = vrot.lane.b32.xlu0 %v730, 8
      %v749 = vpop.permute.xlu0 %748
      %750 = vrot.lane.b32.xlu0 %v731, 8
      %v751 = vpop.permute.xlu0 %750
      %vm752 = vcmask 31744
      %v755 = vsel %vm752, %v572, %v673
      %v758 = vsel %vm752, %v573, %v675
      %v761 = vsel %vm752, %v574, %v677
      %v764 = vsel %vm752, %v575, %v679
      %v767 = vsel %vm752, %v576, %v681
      %v770 = vsel %vm752, %v577, %v683
      %v773 = vsel %vm752, %v578, %v685
      %v776 = vsel %vm752, %v579, %v687
      %v779 = vsel %vm752, %v580, %v689
      %v782 = vsel %vm752, %v581, %v691
      %vm783 = vcmask 64512
      %v785 = vsel %vm783, %v755, %v733
      %v787 = vsel %vm783, %v758, %v735
      %v789 = vsel %vm783, %v761, %v737
      %v791 = vsel %vm783, %v764, %v739
      %v793 = vsel %vm783, %v767, %v741
      %v795 = vsel %vm783, %v770, %v743
      %v797 = vsel %vm783, %v773, %v745
      %v799 = vsel %vm783, %v776, %v747
      %v801 = vsel %vm783, %v779, %v749
      %v803 = vsel %vm783, %v782, %v751
      %v814 = vunpack.c.l.b16 %v785
      %v815 = vunpack.c.h.b16 %v785
      %v816 = vunpack.c.l.b16 %v787
      %v817 = vunpack.c.h.b16 %v787
      %v818 = vunpack.c.l.b16 %v789
      %v819 = vunpack.c.h.b16 %v789
      %v820 = vunpack.c.l.b16 %v791
      %v821 = vunpack.c.h.b16 %v791
      %v822 = vunpack.c.l.b16 %v793
      %v823 = vunpack.c.h.b16 %v793
      %v824 = vunpack.c.l.b16 %v795
      %v825 = vunpack.c.h.b16 %v795
      %v826 = vunpack.c.l.b16 %v797
      %v827 = vunpack.c.h.b16 %v797
      %v828 = vunpack.c.l.b16 %v799
      %v829 = vunpack.c.h.b16 %v799
      %v830 = vunpack.c.l.b16 %v801
      %v831 = vunpack.c.h.b16 %v801
      %v832 = vunpack.c.l.b16 %v803
      %v833 = vunpack.c.h.b16 %v803
      %v834 = vpack.c.b16 %v814, %v814
      %v835 = vpack.c.b16 %v815, %v815
      %v836 = vpack.c.b16 %v816, %v816
      %v837 = vpack.c.b16 %v817, %v817
      %v838 = vpack.c.b16 %v818, %v818
      %v839 = vpack.c.b16 %v819, %v819
      %v840 = vpack.c.b16 %v820, %v820
      %v841 = vpack.c.b16 %v821, %v821
      %v842 = vpack.c.b16 %v822, %v822
      %v843 = vpack.c.b16 %v823, %v823
      %v844 = vpack.c.b16 %v824, %v824
      %v845 = vpack.c.b16 %v825, %v825
      %v846 = vpack.c.b16 %v826, %v826
      %v847 = vpack.c.b16 %v827, %v827
      %v848 = vpack.c.b16 %v828, %v828
      %v849 = vpack.c.b16 %v829, %v829
      %v850 = vpack.c.b16 %v830, %v830
      %v851 = vpack.c.b16 %v831, %v831
      %v852 = vpack.c.b16 %v832, %v832
      %v853 = vpack.c.b16 %v833, %v833
      %vm854 = vsmask.f32 4368
      %vm855 = vmor %vm387, %vm854
      %v857 = vshrl.u32 %v834, 16
      %v859 = vrot.slane %v857, 7
      %v860 = vrot.slane %v859, 4
      %v862 = vshrl.u32 %v835, 16
      %v864 = vrot.slane %v862, 7
      %v865 = vshll.u32 %v835, 16
      %v867 = vor.u32 %v864, %v865
      %v868 = vsel %vm855, %v860, %v867
      %v870 = vshrl.u32 %v836, 16
      %v872 = vrot.slane %v870, 7
      %v873 = vrot.slane %v872, 4
      %v875 = vshrl.u32 %v837, 16
      %v877 = vrot.slane %v875, 7
      %v878 = vshll.u32 %v837, 16
      %v880 = vor.u32 %v877, %v878
      %v881 = vsel %vm855, %v873, %v880
      %v883 = vshrl.u32 %v838, 16
      %v885 = vrot.slane %v883, 7
      %v886 = vrot.slane %v885, 4
      %v888 = vshrl.u32 %v839, 16
      %v890 = vrot.slane %v888, 7
      %v891 = vshll.u32 %v839, 16
      %v893 = vor.u32 %v890, %v891
      %v894 = vsel %vm855, %v886, %v893
      %v896 = vshrl.u32 %v840, 16
      %v898 = vrot.slane %v896, 7
      %v899 = vrot.slane %v898, 4
      %v901 = vshrl.u32 %v841, 16
      %v903 = vrot.slane %v901, 7
      %v904 = vshll.u32 %v841, 16
      %v906 = vor.u32 %v903, %v904
      %v907 = vsel %vm855, %v899, %v906
      %v909 = vshrl.u32 %v842, 16
      %v911 = vrot.slane %v909, 7
      %v912 = vrot.slane %v911, 4
      %v914 = vshrl.u32 %v843, 16
      %v916 = vrot.slane %v914, 7
      %v917 = vshll.u32 %v843, 16
      %v919 = vor.u32 %v916, %v917
      %v920 = vsel %vm855, %v912, %v919
      %v922 = vshrl.u32 %v844, 16
      %v924 = vrot.slane %v922, 7
      %v925 = vrot.slane %v924, 4
      %v927 = vshrl.u32 %v845, 16
      %v929 = vrot.slane %v927, 7
      %v930 = vshll.u32 %v845, 16
      %v932 = vor.u32 %v929, %v930
      %v933 = vsel %vm855, %v925, %v932
      %v935 = vshrl.u32 %v846, 16
      %v937 = vrot.slane %v935, 7
      %v938 = vrot.slane %v937, 4
      %v940 = vshrl.u32 %v847, 16
      %v942 = vrot.slane %v940, 7
      %v943 = vshll.u32 %v847, 16
      %v945 = vor.u32 %v942, %v943
      %v946 = vsel %vm855, %v938, %v945
      %v948 = vshrl.u32 %v848, 16
      %v950 = vrot.slane %v948, 7
      %v951 = vrot.slane %v950, 4
      %v953 = vshrl.u32 %v849, 16
      %v955 = vrot.slane %v953, 7
      %v956 = vshll.u32 %v849, 16
      %v958 = vor.u32 %v955, %v956
      %v959 = vsel %vm855, %v951, %v958
      %v961 = vshrl.u32 %v850, 16
      %v963 = vrot.slane %v961, 7
      %v964 = vrot.slane %v963, 4
      %v966 = vshrl.u32 %v851, 16
      %v968 = vrot.slane %v966, 7
      %v969 = vshll.u32 %v851, 16
      %v971 = vor.u32 %v968, %v969
      %v972 = vsel %vm855, %v964, %v971
      %v974 = vshrl.u32 %v852, 16
      %v976 = vrot.slane %v974, 7
      %v977 = vrot.slane %v976, 4
      %v979 = vshrl.u32 %v853, 16
      %v981 = vrot.slane %v979, 7
      %v982 = vshll.u32 %v853, 16
      %v984 = vor.u32 %v981, %v982
      %v985 = vsel %vm855, %v977, %v984
      %v986 = vld [vmem:[%s1] sm:$0xf]
      %v987 = vld [vmem:[%s1 + $0x4] sm:$0x3]
      %s988 = scalar_lea.vmem [#allocation2], 12
      %v989 = vld [vmem:[%s988] sm:$0x8]
      %v990 = vld [vmem:[%s988 + $0x4] sm:$0xf]
      %v991 = vld [vmem:[%s988 + $0x8] sm:$0x1]
      %v992 = vld [vmem:[%s988 + $0xc] sm:$0x8]
      %v993 = vld [vmem:[%s988 + $0x10] sm:$0xf]
      %v994 = vld [vmem:[%s988 + $0x14] sm:$0x1]
      %v995 = vld [vmem:[%s988 + $0x18] sm:$0x8]
      %v996 = vld [vmem:[%s988 + $0x1c] sm:$0xf]
      %v997 = vld [vmem:[%s988 + $0x20] sm:$0x1]
      %v998 = vld [vmem:[%s988 + $0x24] sm:$0x8]
      %v999 = vld [vmem:[%s988 + $0x28] sm:$0xf]
      %v1000 = vld [vmem:[%s988 + $0x2c] sm:$0x1]
      %v1001 = vld [vmem:[%s988 + $0x30] sm:$0x8]
      %v1002 = vld [vmem:[%s988 + $0x34] sm:$0xf]
      %v1003 = vld [vmem:[%s988 + $0x38] sm:$0x1]
      %v1004 = vld [vmem:[%s988 + $0x3c] sm:$0x8]
      %v1005 = vld [vmem:[%s988 + $0x40] sm:$0xf]
      %v1006 = vld [vmem:[%s988 + $0x44] sm:$0x1]
      %v1007 = vld [vmem:[%s988 + $0x48] sm:$0x8]
      %v1008 = vld [vmem:[%s988 + $0x4c] sm:$0xf]
      %v1009 = vld [vmem:[%s988 + $0x50] sm:$0x1]
      %v1010 = vld [vmem:[%s988 + $0x54] sm:$0x8]
      %v1011 = vld [vmem:[%s988 + $0x58] sm:$0xf]
      %v1012 = vld [vmem:[%s988 + $0x5c] sm:$0x1]
      %v1013 = vld [vmem:[%s988 + $0x60] sm:$0x8]
      %v1014 = vld [vmem:[%s988 + $0x64] sm:$0xf]
      %v1015 = vld [vmem:[%s988 + $0x68] sm:$0x1]
      %v1016 = vld [vmem:[%s988 + $0x6c] sm:$0x8]
      %v1017 = vld [vmem:[%s988 + $0x70] sm:$0xf]
      %v1018 = vld [vmem:[%s988 + $0x74] sm:$0x1]
      %v1039 = vunpack.c.l.b16 %v989
      %v1040 = vunpack.c.l.b16 %v990
      %v1041 = vunpack.c.l.b16 %v992
      %v1042 = vunpack.c.l.b16 %v993
      %v1043 = vunpack.c.l.b16 %v995
      %v1044 = vunpack.c.l.b16 %v996
      %v1045 = vunpack.c.l.b16 %v998
      %v1046 = vunpack.c.l.b16 %v999
      %v1047 = vunpack.c.l.b16 %v1001
      %v1048 = vunpack.c.l.b16 %v1002
      %v1049 = vunpack.c.l.b16 %v1004
      %v1050 = vunpack.c.l.b16 %v1005
      %v1051 = vunpack.c.l.b16 %v1007
      %v1052 = vunpack.c.l.b16 %v1008
      %v1053 = vunpack.c.l.b16 %v1010
      %v1054 = vunpack.c.l.b16 %v1011
      %v1055 = vunpack.c.l.b16 %v1013
      %v1056 = vunpack.c.l.b16 %v1014
      %v1057 = vunpack.c.l.b16 %v1016
      %v1058 = vunpack.c.l.b16 %v1017
      %v1059 = vpack.c.b16 %v1040, %v1039
      %v1060 = vpack.c.b16 %v1042, %v1041
      %v1061 = vpack.c.b16 %v1044, %v1043
      %v1062 = vpack.c.b16 %v1046, %v1045
      %v1063 = vpack.c.b16 %v1048, %v1047
      %v1064 = vpack.c.b16 %v1050, %v1049
      %v1065 = vpack.c.b16 %v1052, %v1051
      %v1066 = vpack.c.b16 %v1054, %v1053
      %v1067 = vpack.c.b16 %v1056, %v1055
      %v1068 = vpack.c.b16 %v1058, %v1057
      %v1069 = vpack.c.b16 %v1040, %v1040
      %v1070 = vpack.c.b16 %v1042, %v1042
      %v1071 = vpack.c.b16 %v1044, %v1044
      %v1072 = vpack.c.b16 %v1046, %v1046
      %v1073 = vpack.c.b16 %v1048, %v1048
      %v1074 = vpack.c.b16 %v1050, %v1050
      %v1075 = vpack.c.b16 %v1052, %v1052
      %v1076 = vpack.c.b16 %v1054, %v1054
      %v1077 = vpack.c.b16 %v1056, %v1056
      %v1078 = vpack.c.b16 %v1058, %v1058
      %v1080 = vshrl.u32 %v1069, 16
      %v1082 = vrot.slane %v1080, 4
      %v1083 = vshll.u32 %v1069, 16
      %v1085 = vrot.slane %v1083, 5
      %v1086 = vor.u32 %v1082, %v1085
      %v1088 = vshrl.u32 %v1070, 16
      %v1090 = vrot.slane %v1088, 4
      %v1091 = vshll.u32 %v1070, 16
      %v1093 = vrot.slane %v1091, 5
      %v1094 = vor.u32 %v1090, %v1093
      %v1096 = vshrl.u32 %v1071, 16
      %v1098 = vrot.slane %v1096, 4
      %v1099 = vshll.u32 %v1071, 16
      %v1101 = vrot.slane %v1099, 5
      %v1102 = vor.u32 %v1098, %v1101
      %v1104 = vshrl.u32 %v1072, 16
      %v1106 = vrot.slane %v1104, 4
      %v1107 = vshll.u32 %v1072, 16
      %v1109 = vrot.slane %v1107, 5
      %v1110 = vor.u32 %v1106, %v1109
      %v1112 = vshrl.u32 %v1073, 16
      %v1114 = vrot.slane %v1112, 4
      %v1115 = vshll.u32 %v1073, 16
      %v1117 = vrot.slane %v1115, 5
      %v1118 = vor.u32 %v1114, %v1117
      %v1120 = vshrl.u32 %v1074, 16
      %v1122 = vrot.slane %v1120, 4
      %v1123 = vshll.u32 %v1074, 16
      %v1125 = vrot.slane %v1123, 5
      %v1126 = vor.u32 %v1122, %v1125
      %v1128 = vshrl.u32 %v1075, 16
      %v1130 = vrot.slane %v1128, 4
      %v1131 = vshll.u32 %v1075, 16
      %v1133 = vrot.slane %v1131, 5
      %v1134 = vor.u32 %v1130, %v1133
      %v1136 = vshrl.u32 %v1076, 16
      %v1138 = vrot.slane %v1136, 4
      %v1139 = vshll.u32 %v1076, 16
      %v1141 = vrot.slane %v1139, 5
      %v1142 = vor.u32 %v1138, %v1141
      %v1144 = vshrl.u32 %v1077, 16
      %v1146 = vrot.slane %v1144, 4
      %v1147 = vshll.u32 %v1077, 16
      %v1149 = vrot.slane %v1147, 5
      %v1150 = vor.u32 %v1146, %v1149
      %v1152 = vshrl.u32 %v1078, 16
      %v1154 = vrot.slane %v1152, 4
      %v1155 = vshll.u32 %v1078, 16
      %v1157 = vrot.slane %v1155, 5
      %v1158 = vor.u32 %v1154, %v1157
      %1159 = vrot.lane.b32.xlu0 %v1086, 4
      %v1160 = vpop.permute.xlu0 %1159
      %1161 = vrot.lane.b32.xlu0 %v1094, 4
      %v1162 = vpop.permute.xlu0 %1161
      %1163 = vrot.lane.b32.xlu0 %v1102, 4
      %v1164 = vpop.permute.xlu0 %1163
      %1165 = vrot.lane.b32.xlu0 %v1110, 4
      %v1166 = vpop.permute.xlu0 %1165
      %1167 = vrot.lane.b32.xlu0 %v1118, 4
      %v1168 = vpop.permute.xlu0 %1167
      %1169 = vrot.lane.b32.xlu0 %v1126, 4
      %v1170 = vpop.permute.xlu0 %1169
      %1171 = vrot.lane.b32.xlu0 %v1134, 4
      %v1172 = vpop.permute.xlu0 %1171
      %1173 = vrot.lane.b32.xlu0 %v1142, 4
      %v1174 = vpop.permute.xlu0 %1173
      %1175 = vrot.lane.b32.xlu0 %v1150, 4
      %v1176 = vpop.permute.xlu0 %1175
      %1177 = vrot.lane.b32.xlu0 %v1158, 4
      %v1178 = vpop.permute.xlu0 %1177
      %v1189 = vunpack.c.l.b16 %v991
      %v1190 = vunpack.c.l.b16 %v994
      %v1191 = vunpack.c.l.b16 %v997
      %v1192 = vunpack.c.l.b16 %v1000
      %v1193 = vunpack.c.l.b16 %v1003
      %v1194 = vunpack.c.l.b16 %v1006
      %v1195 = vunpack.c.l.b16 %v1009
      %v1196 = vunpack.c.l.b16 %v1012
      %v1197 = vunpack.c.l.b16 %v1015
      %v1198 = vunpack.c.l.b16 %v1018
      %v1199 = vpack.c.b16 %v1189, %v1040
      %v1200 = vpack.c.b16 %v1190, %v1042
      %v1201 = vpack.c.b16 %v1191, %v1044
      %v1202 = vpack.c.b16 %v1192, %v1046
      %v1203 = vpack.c.b16 %v1193, %v1048
      %v1204 = vpack.c.b16 %v1194, %v1050
      %v1205 = vpack.c.b16 %v1195, %v1052
      %v1206 = vpack.c.b16 %v1196, %v1054
      %v1207 = vpack.c.b16 %v1197, %v1056
      %v1208 = vpack.c.b16 %v1198, %v1058
      %v1209 = vrot.slane %v1199, 5
      %v1210 = vrot.slane %v1200, 5
      %v1211 = vrot.slane %v1201, 5
      %v1212 = vrot.slane %v1202, 5
      %v1213 = vrot.slane %v1203, 5
      %v1214 = vrot.slane %v1204, 5
      %v1215 = vrot.slane %v1205, 5
      %v1216 = vrot.slane %v1206, 5
      %v1217 = vrot.slane %v1207, 5
      %v1218 = vrot.slane %v1208, 5
      %1219 = vrot.lane.b32.xlu0 %v1209, 8
      %v1220 = vpop.permute.xlu0 %1219
      %1221 = vrot.lane.b32.xlu0 %v1210, 8
      %v1222 = vpop.permute.xlu0 %1221
      %1223 = vrot.lane.b32.xlu0 %v1211, 8
      %v1224 = vpop.permute.xlu0 %1223
      %1225 = vrot.lane.b32.xlu0 %v1212, 8
      %v1226 = vpop.permute.xlu0 %1225
      %1227 = vrot.lane.b32.xlu0 %v1213, 8
      %v1228 = vpop.permute.xlu0 %1227
      %1229 = vrot.lane.b32.xlu0 %v1214, 8
      %v1230 = vpop.permute.xlu0 %1229
      %1231 = vrot.lane.b32.xlu0 %v1215, 8
      %v1232 = vpop.permute.xlu0 %1231
      %1233 = vrot.lane.b32.xlu0 %v1216, 8
      %v1234 = vpop.permute.xlu0 %1233
      %1235 = vrot.lane.b32.xlu0 %v1217, 8
      %v1236 = vpop.permute.xlu0 %1235
      %1237 = vrot.lane.b32.xlu0 %v1218, 8
      %v1238 = vpop.permute.xlu0 %1237
      %v1241 = vsel %vm752, %v1059, %v1160
      %v1244 = vsel %vm752, %v1060, %v1162
      %v1247 = vsel %vm752, %v1061, %v1164
      %v1250 = vsel %vm752, %v1062, %v1166
      %v1253 = vsel %vm752, %v1063, %v1168
      %v1256 = vsel %vm752, %v1064, %v1170
      %v1259 = vsel %vm752, %v1065, %v1172
      %v1262 = vsel %vm752, %v1066, %v1174
      %v1265 = vsel %vm752, %v1067, %v1176
      %v1268 = vsel %vm752, %v1068, %v1178
      %v1270 = vsel %vm783, %v1241, %v1220
      %v1272 = vsel %vm783, %v1244, %v1222
      %v1274 = vsel %vm783, %v1247, %v1224
      %v1276 = vsel %vm783, %v1250, %v1226
      %v1278 = vsel %vm783, %v1253, %v1228
      %v1280 = vsel %vm783, %v1256, %v1230
      %v1282 = vsel %vm783, %v1259, %v1232
      %v1284 = vsel %vm783, %v1262, %v1234
      %v1286 = vsel %vm783, %v1265, %v1236
      %v1288 = vsel %vm783, %v1268, %v1238
      %v1299 = vunpack.c.l.b16 %v1270
      %v1300 = vunpack.c.h.b16 %v1270
      %v1301 = vunpack.c.l.b16 %v1272
      %v1302 = vunpack.c.h.b16 %v1272
      %v1303 = vunpack.c.l.b16 %v1274
      %v1304 = vunpack.c.h.b16 %v1274
      %v1305 = vunpack.c.l.b16 %v1276
      %v1306 = vunpack.c.h.b16 %v1276
      %v1307 = vunpack.c.l.b16 %v1278
      %v1308 = vunpack.c.h.b16 %v1278
      %v1309 = vunpack.c.l.b16 %v1280
      %v1310 = vunpack.c.h.b16 %v1280
      %v1311 = vunpack.c.l.b16 %v1282
      %v1312 = vunpack.c.h.b16 %v1282
      %v1313 = vunpack.c.l.b16 %v1284
      %v1314 = vunpack.c.h.b16 %v1284
      %v1315 = vunpack.c.l.b16 %v1286
      %v1316 = vunpack.c.h.b16 %v1286
      %v1317 = vunpack.c.l.b16 %v1288
      %v1318 = vunpack.c.h.b16 %v1288
      %v1319 = vpack.c.b16 %v1299, %v1299
      %v1320 = vpack.c.b16 %v1300, %v1300
      %v1321 = vpack.c.b16 %v1301, %v1301
      %v1322 = vpack.c.b16 %v1302, %v1302
      %v1323 = vpack.c.b16 %v1303, %v1303
      %v1324 = vpack.c.b16 %v1304, %v1304
      %v1325 = vpack.c.b16 %v1305, %v1305
      %v1326 = vpack.c.b16 %v1306, %v1306
      %v1327 = vpack.c.b16 %v1307, %v1307
      %v1328 = vpack.c.b16 %v1308, %v1308
      %v1329 = vpack.c.b16 %v1309, %v1309
      %v1330 = vpack.c.b16 %v1310, %v1310
      %v1331 = vpack.c.b16 %v1311, %v1311
      %v1332 = vpack.c.b16 %v1312, %v1312
      %v1333 = vpack.c.b16 %v1313, %v1313
      %v1334 = vpack.c.b16 %v1314, %v1314
      %v1335 = vpack.c.b16 %v1315, %v1315
      %v1336 = vpack.c.b16 %v1316, %v1316
      %v1337 = vpack.c.b16 %v1317, %v1317
      %v1338 = vpack.c.b16 %v1318, %v1318
      %v1340 = vshrl.u32 %v1319, 16
      %v1342 = vrot.slane %v1340, 7
      %v1343 = vrot.slane %v1342, 4
      %v1345 = vshrl.u32 %v1320, 16
      %v1347 = vrot.slane %v1345, 7
      %v1348 = vshll.u32 %v1320, 16
      %v1350 = vor.u32 %v1347, %v1348
      %v1351 = vsel %vm855, %v1343, %v1350
      %v1353 = vshrl.u32 %v1321, 16
      %v1355 = vrot.slane %v1353, 7
      %v1356 = vrot.slane %v1355, 4
      %v1358 = vshrl.u32 %v1322, 16
      %v1360 = vrot.slane %v1358, 7
      %v1361 = vshll.u32 %v1322, 16
      %v1363 = vor.u32 %v1360, %v1361
      %v1364 = vsel %vm855, %v1356, %v1363
      %v1366 = vshrl.u32 %v1323, 16
      %v1368 = vrot.slane %v1366, 7
      %v1369 = vrot.slane %v1368, 4
      %v1371 = vshrl.u32 %v1324, 16
      %v1373 = vrot.slane %v1371, 7
      %v1374 = vshll.u32 %v1324, 16
      %v1376 = vor.u32 %v1373, %v1374
      %v1377 = vsel %vm855, %v1369, %v1376
      %v1379 = vshrl.u32 %v1325, 16
      %v1381 = vrot.slane %v1379, 7
      %v1382 = vrot.slane %v1381, 4
      %v1384 = vshrl.u32 %v1326, 16
      %v1386 = vrot.slane %v1384, 7
      %v1387 = vshll.u32 %v1326, 16
      %v1389 = vor.u32 %v1386, %v1387
      %v1390 = vsel %vm855, %v1382, %v1389
      %v1392 = vshrl.u32 %v1327, 16
      %v1394 = vrot.slane %v1392, 7
      %v1395 = vrot.slane %v1394, 4
      %v1397 = vshrl.u32 %v1328, 16
      %v1399 = vrot.slane %v1397, 7
      %v1400 = vshll.u32 %v1328, 16
      %v1402 = vor.u32 %v1399, %v1400
      %v1403 = vsel %vm855, %v1395, %v1402
      %v1405 = vshrl.u32 %v1329, 16
      %v1407 = vrot.slane %v1405, 7
      %v1408 = vrot.slane %v1407, 4
      %v1410 = vshrl.u32 %v1330, 16
      %v1412 = vrot.slane %v1410, 7
      %v1413 = vshll.u32 %v1330, 16
      %v1415 = vor.u32 %v1412, %v1413
      %v1416 = vsel %vm855, %v1408, %v1415
      %v1418 = vshrl.u32 %v1331, 16
      %v1420 = vrot.slane %v1418, 7
      %v1421 = vrot.slane %v1420, 4
      %v1423 = vshrl.u32 %v1332, 16
      %v1425 = vrot.slane %v1423, 7
      %v1426 = vshll.u32 %v1332, 16
      %v1428 = vor.u32 %v1425, %v1426
      %v1429 = vsel %vm855, %v1421, %v1428
      %v1431 = vshrl.u32 %v1333, 16
      %v1433 = vrot.slane %v1431, 7
      %v1434 = vrot.slane %v1433, 4
      %v1436 = vshrl.u32 %v1334, 16
      %v1438 = vrot.slane %v1436, 7
      %v1439 = vshll.u32 %v1334, 16
      %v1441 = vor.u32 %v1438, %v1439
      %v1442 = vsel %vm855, %v1434, %v1441
      %v1444 = vshrl.u32 %v1335, 16
      %v1446 = vrot.slane %v1444, 7
      %v1447 = vrot.slane %v1446, 4
      %v1449 = vshrl.u32 %v1336, 16
      %v1451 = vrot.slane %v1449, 7
      %v1452 = vshll.u32 %v1336, 16
      %v1454 = vor.u32 %v1451, %v1452
      %v1455 = vsel %vm855, %v1447, %v1454
      %v1457 = vshrl.u32 %v1337, 16
      %v1459 = vrot.slane %v1457, 7
      %v1460 = vrot.slane %v1459, 4
      %v1462 = vshrl.u32 %v1338, 16
      %v1464 = vrot.slane %v1462, 7
      %v1465 = vshll.u32 %v1338, 16
      %v1467 = vor.u32 %v1464, %v1465
      %v1468 = vsel %vm855, %v1460, %v1467
      %s1469 = scalar_lea.vmem %s1, 8
      %v1470 = vld [vmem:[%s1469] sm:$0xf]
      %v1471 = vld [vmem:[%s1469 + $0x4] sm:$0x3]
      %v1472 = vunpack.c.l.b16 %v1351
      %v1473 = vunpack.c.l.b16 %v1364
      %v1474 = vunpack.c.l.b16 %v1377
      %v1475 = vunpack.c.l.b16 %v1390
      %v1476 = vunpack.c.l.b16 %v1403
      %v1477 = vunpack.c.l.b16 %v1416
      %v1478 = vunpack.c.l.b16 %v1429
      %v1479 = vunpack.c.l.b16 %v1442
      %v1480 = vunpack.c.l.b16 %v1455
      %v1481 = vunpack.c.l.b16 %v1468
      %v1482 = vpack.c.b16 %v1473, %v1472
      %v1483 = vpack.c.b16 %v1475, %v1474
      %v1484 = vpack.c.b16 %v1477, %v1476
      %v1485 = vpack.c.b16 %v1479, %v1478
      %v1486 = vpack.c.b16 %v1481, %v1480
      %v1489 = vunpack.c.l.b16 %v1470
      %v1490 = vunpack.c.l.b16 %v1471
      %v1491 = vpack.c.b16 %v1490, %v1489
      %vm1492 = vcmask 97280
      %v1494 = vsel %vm1492, %v1482, 0
      %v1497 = vsel %vm1492, %v1483, 0
      %v1500 = vsel %vm1492, %v1484, 0
      %v1503 = vsel %vm1492, %v1485, 0
      %v1506 = vsel %vm1492, %v1486, 0
      %vm1508 = vcmask 1045504
      %v1510 = vsel %vm1508, %v1491, 0
      %1512 = vmatprep.subr.bf16.mxu0 0
      %1513 = vmatpush1.bf16.msra.mxu0 0
      %1514 = vmatprep.subr.bf16.mxu0 0
      %1515 = vmatpush1.bf16.msra.mxu0 0
      %1516 = vmatprep.subr.bf16.mxu0 0
      %1517 = vmatpush1.bf16.msra.mxu0 0
      %1518 = vmatprep.subr.bf16.mxu0 0
      %1519 = vmatpush1.bf16.msra.mxu0 0
      %1520 = vmatprep.subr.bf16.mxu0 0
      %1521 = vmatpush1.bf16.msra.mxu0 0
      %1522 = vmatprep.subr.bf16.mxu0 0
      %1523 = vmatpush1.bf16.msra.mxu0 0
      %1524 = vmatprep.subr.bf16.mxu0 0
      %1525 = vmatpush1.bf16.msra.mxu0 0
      %1526 = vmatprep.subr.bf16.mxu0 0
      %1527 = vmatpush1.bf16.msra.mxu0 %v1510
      %1528 = vmatprep.subr.bf16.mxu0 0
      %1529 = vmatpush2.bf16.msra.mxu0 0
      %1530 = vmatprep.subr.bf16.mxu0 0
      %1531 = vmatpush2.bf16.msra.mxu0 0
      %1532 = vmatprep.subr.bf16.mxu0 0
      %1533 = vmatpush2.bf16.msra.mxu0 0
      %1534 = vmatprep.subr.bf16.mxu0 0
      %1535 = vmatpush2.bf16.msra.mxu0 0
      %1536 = vmatprep.subr.bf16.mxu0 0
      %1537 = vmatpush2.bf16.msra.mxu0 0
      %1538 = vmatprep.subr.bf16.mxu0 0
      %1539 = vmatpush2.bf16.msra.mxu0 0
      %1540 = vmatprep.subr.bf16.mxu0 0
      %1541 = vmatpush2.bf16.msra.mxu0 0
      %1542 = vmatprep.subr.bf16.mxu0 0
      %1543 = vmatpush2.bf16.msra.mxu0 0
      %1544 = vmatprep.mubr.bf16.mxu0 0
      %1545 = vmatmul.mubr.bf16.gmra.mxu0 %v1494
      %v1546 = vpop.f32.mrf.mxu0
      %v1547 = vadd.f32 0.0, %v1546
      %v1548 = vpop.f32.mrf.mxu0
      %v1549 = vpop.f32.mrf.mxu0
      %v1550 = vadd.f32 0.0, %v1549
      %v1551 = vpop.f32.mrf.mxu0
      %1552 = vmatprep.mubr.bf16.mxu0 0
      %1553 = vmatmul.mubr.bf16.gmra.mxu0 %v1497
      %v1554 = vpop.f32.mrf.mxu0
      %v1555 = vadd.f32 0.0, %v1554
      %v1556 = vpop.f32.mrf.mxu0
      %v1557 = vpop.f32.mrf.mxu0
      %v1558 = vadd.f32 0.0, %v1557
      %v1559 = vpop.f32.mrf.mxu0
      %1560 = vmatprep.mubr.bf16.mxu0 0
      %1561 = vmatmul.mubr.bf16.gmra.mxu0 %v1500
      %v1562 = vpop.f32.mrf.mxu0
      %v1563 = vadd.f32 0.0, %v1562
      %v1564 = vpop.f32.mrf.mxu0
      %v1565 = vpop.f32.mrf.mxu0
      %v1566 = vadd.f32 0.0, %v1565
      %v1567 = vpop.f32.mrf.mxu0
      %1568 = vmatprep.mubr.bf16.mxu0 0
      %1569 = vmatmul.mubr.bf16.gmra.mxu0 %v1503
      %v1570 = vpop.f32.mrf.mxu0
      %v1571 = vadd.f32 0.0, %v1570
      %v1572 = vpop.f32.mrf.mxu0
      %v1573 = vpop.f32.mrf.mxu0
      %v1574 = vadd.f32 0.0, %v1573
      %v1575 = vpop.f32.mrf.mxu0
      %1576 = vmatprep.mubr.bf16.mxu0 0
      %1577 = vmatmul.mubr.bf16.gmra.mxu0 %v1506
      %v1578 = vpop.f32.mrf.mxu0
      %v1579 = vadd.f32 0.0, %v1578
      %v1580 = vpop.f32.mrf.mxu0
      %v1581 = vpop.f32.mrf.mxu0
      %v1582 = vadd.f32 0.0, %v1581
      %v1583 = vpop.f32.mrf.mxu0
      %1584 = vdwg.mxu0
      %v1585 = vunpack.c.l.b16 %v868
      %v1586 = vunpack.c.l.b16 %v881
      %v1587 = vunpack.c.l.b16 %v894
      %v1588 = vunpack.c.l.b16 %v907
      %v1589 = vunpack.c.l.b16 %v920
      %v1590 = vunpack.c.l.b16 %v933
      %v1591 = vunpack.c.l.b16 %v946
      %v1592 = vunpack.c.l.b16 %v959
      %v1593 = vunpack.c.l.b16 %v972
      %v1594 = vunpack.c.l.b16 %v985
      %v1595 = vpack.c.b16 %v1586, %v1585
      %v1596 = vpack.c.b16 %v1588, %v1587
      %v1597 = vpack.c.b16 %v1590, %v1589
      %v1598 = vpack.c.b16 %v1592, %v1591
      %v1599 = vpack.c.b16 %v1594, %v1593
      %v1602 = vunpack.c.l.b16 %v986
      %v1603 = vunpack.c.l.b16 %v987
      %v1604 = vpack.c.b16 %v1603, %v1602
      %v1606 = vsel %vm1492, %v1595, 0
      %v1609 = vsel %vm1492, %v1596, 0
      %v1612 = vsel %vm1492, %v1597, 0
      %v1615 = vsel %vm1492, %v1598, 0
      %v1618 = vsel %vm1492, %v1599, 0
      %v1621 = vsel %vm1508, %v1604, 0
      %1623 = vmatprep.subr.bf16.mxu0 0
      %1624 = vmatpush1.bf16.msra.mxu0 0
      %1625 = vmatprep.subr.bf16.mxu0 0
      %1626 = vmatpush1.bf16.msra.mxu0 0
      %1627 = vmatprep.subr.bf16.mxu0 0
      %1628 = vmatpush1.bf16.msra.mxu0 0
      %1629 = vmatprep.subr.bf16.mxu0 0
      %1630 = vmatpush1.bf16.msra.mxu0 0
      %1631 = vmatprep.subr.bf16.mxu0 0
      %1632 = vmatpush1.bf16.msra.mxu0 0
      %1633 = vmatprep.subr.bf16.mxu0 0
      %1634 = vmatpush1.bf16.msra.mxu0 0
      %1635 = vmatprep.subr.bf16.mxu0 0
      %1636 = vmatpush1.bf16.msra.mxu0 0
      %1637 = vmatprep.subr.bf16.mxu0 0
      %1638 = vmatpush1.bf16.msra.mxu0 %v1621
      %1639 = vmatprep.subr.bf16.mxu0 0
      %1640 = vmatpush2.bf16.msra.mxu0 0
      %1641 = vmatprep.subr.bf16.mxu0 0
      %1642 = vmatpush2.bf16.msra.mxu0 0
      %1643 = vmatprep.subr.bf16.mxu0 0
      %1644 = vmatpush2.bf16.msra.mxu0 0
      %1645 = vmatprep.subr.bf16.mxu0 0
      %1646 = vmatpush2.bf16.msra.mxu0 0
      %1647 = vmatprep.subr.bf16.mxu0 0
      %1648 = vmatpush2.bf16.msra.mxu0 0
      %1649 = vmatprep.subr.bf16.mxu0 0
      %1650 = vmatpush2.bf16.msra.mxu0 0
      %1651 = vmatprep.subr.bf16.mxu0 0
      %1652 = vmatpush2.bf16.msra.mxu0 0
      %1653 = vmatprep.subr.bf16.mxu0 0
      %1654 = vmatpush2.bf16.msra.mxu0 0
      %1655 = vmatprep.mubr.bf16.mxu0 0
      %1656 = vmatmul.mubr.bf16.gmra.mxu0 %v1606
      %v1657 = vpop.f32.mrf.mxu0
      %v1658 = vadd.f32 %v1547, %v1657
      %v1659 = vpop.f32.mrf.mxu0
      %v1660 = vpop.f32.mrf.mxu0
      %v1661 = vadd.f32 %v1550, %v1660
      %v1662 = vpop.f32.mrf.mxu0
      %1663 = vmatprep.mubr.bf16.mxu0 0
      %1664 = vmatmul.mubr.bf16.gmra.mxu0 %v1609
      %v1665 = vpop.f32.mrf.mxu0
      %v1666 = vadd.f32 %v1555, %v1665
      %v1667 = vpop.f32.mrf.mxu0
      %v1668 = vpop.f32.mrf.mxu0
      %v1669 = vadd.f32 %v1558, %v1668
      %v1670 = vpop.f32.mrf.mxu0
      %1671 = vmatprep.mubr.bf16.mxu0 0
      %1672 = vmatmul.mubr.bf16.gmra.mxu0 %v1612
      %v1673 = vpop.f32.mrf.mxu0
      %v1674 = vadd.f32 %v1563, %v1673
      %v1675 = vpop.f32.mrf.mxu0
      %v1676 = vpop.f32.mrf.mxu0
      %v1677 = vadd.f32 %v1566, %v1676
      %v1678 = vpop.f32.mrf.mxu0
      %1679 = vmatprep.mubr.bf16.mxu0 0
      %1680 = vmatmul.mubr.bf16.gmra.mxu0 %v1615
      %v1681 = vpop.f32.mrf.mxu0
      %v1682 = vadd.f32 %v1571, %v1681
      %v1683 = vpop.f32.mrf.mxu0
      %v1684 = vpop.f32.mrf.mxu0
      %v1685 = vadd.f32 %v1574, %v1684
      %v1686 = vpop.f32.mrf.mxu0
      %1687 = vmatprep.mubr.bf16.mxu0 0
      %1688 = vmatmul.mubr.bf16.gmra.mxu0 %v1618
      %v1689 = vpop.f32.mrf.mxu0
      %v1690 = vadd.f32 %v1579, %v1689
      %v1691 = vpop.f32.mrf.mxu0
      %v1692 = vpop.f32.mrf.mxu0
      %v1693 = vadd.f32 %v1582, %v1692
      %v1694 = vpop.f32.mrf.mxu0
      %1695 = vdwg.mxu0
      %s1696 = scalar_lea.vmem [#allocation2], 24
      %v1697 = vld [vmem:[%s1696] sm:$0x8]
      %v1698 = vld [vmem:[%s1696 + $0x4] sm:$0xf]
      %v1699 = vld [vmem:[%s1696 + $0x8] sm:$0x1]
      %v1700 = vld [vmem:[%s1696 + $0xc] sm:$0x8]
      %v1701 = vld [vmem:[%s1696 + $0x10] sm:$0xf]
      %v1702 = vld [vmem:[%s1696 + $0x14] sm:$0x1]
      %v1703 = vld [vmem:[%s1696 + $0x18] sm:$0x8]
      %v1704 = vld [vmem:[%s1696 + $0x1c] sm:$0xf]
      %v1705 = vld [vmem:[%s1696 + $0x20] sm:$0x1]
      %v1706 = vld [vmem:[%s1696 + $0x24] sm:$0x8]
      %v1707 = vld [vmem:[%s1696 + $0x28] sm:$0xf]
      %v1708 = vld [vmem:[%s1696 + $0x2c] sm:$0x1]
      %v1709 = vld [vmem:[%s1696 + $0x30] sm:$0x8]
      %v1710 = vld [vmem:[%s1696 + $0x34] sm:$0xf]
      %v1711 = vld [vmem:[%s1696 + $0x38] sm:$0x1]
      %v1712 = vld [vmem:[%s1696 + $0x3c] sm:$0x8]
      %v1713 = vld [vmem:[%s1696 + $0x40] sm:$0xf]
      %v1714 = vld [vmem:[%s1696 + $0x44] sm:$0x1]
      %v1715 = vld [vmem:[%s1696 + $0x48] sm:$0x8]
      %v1716 = vld [vmem:[%s1696 + $0x4c] sm:$0xf]
      %v1717 = vld [vmem:[%s1696 + $0x50] sm:$0x1]
      %v1718 = vld [vmem:[%s1696 + $0x54] sm:$0x8]
      %v1719 = vld [vmem:[%s1696 + $0x58] sm:$0xf]
      %v1720 = vld [vmem:[%s1696 + $0x5c] sm:$0x1]
      %v1721 = vld [vmem:[%s1696 + $0x60] sm:$0x8]
      %v1722 = vld [vmem:[%s1696 + $0x64] sm:$0xf]
      %v1723 = vld [vmem:[%s1696 + $0x68] sm:$0x1]
      %v1724 = vld [vmem:[%s1696 + $0x6c] sm:$0x8]
      %v1725 = vld [vmem:[%s1696 + $0x70] sm:$0xf]
      %v1726 = vld [vmem:[%s1696 + $0x74] sm:$0x1]
      %v1747 = vunpack.c.l.b16 %v1697
      %v1748 = vunpack.c.l.b16 %v1698
      %v1749 = vunpack.c.l.b16 %v1700
      %v1750 = vunpack.c.l.b16 %v1701
      %v1751 = vunpack.c.l.b16 %v1703
      %v1752 = vunpack.c.l.b16 %v1704
      %v1753 = vunpack.c.l.b16 %v1706
      %v1754 = vunpack.c.l.b16 %v1707
      %v1755 = vunpack.c.l.b16 %v1709
      %v1756 = vunpack.c.l.b16 %v1710
      %v1757 = vunpack.c.l.b16 %v1712
      %v1758 = vunpack.c.l.b16 %v1713
      %v1759 = vunpack.c.l.b16 %v1715
      %v1760 = vunpack.c.l.b16 %v1716
      %v1761 = vunpack.c.l.b16 %v1718
      %v1762 = vunpack.c.l.b16 %v1719
      %v1763 = vunpack.c.l.b16 %v1721
      %v1764 = vunpack.c.l.b16 %v1722
      %v1765 = vunpack.c.l.b16 %v1724
      %v1766 = vunpack.c.l.b16 %v1725
      %v1767 = vpack.c.b16 %v1748, %v1747
      %v1768 = vpack.c.b16 %v1750, %v1749
      %v1769 = vpack.c.b16 %v1752, %v1751
      %v1770 = vpack.c.b16 %v1754, %v1753
      %v1771 = vpack.c.b16 %v1756, %v1755
      %v1772 = vpack.c.b16 %v1758, %v1757
      %v1773 = vpack.c.b16 %v1760, %v1759
      %v1774 = vpack.c.b16 %v1762, %v1761
      %v1775 = vpack.c.b16 %v1764, %v1763
      %v1776 = vpack.c.b16 %v1766, %v1765
      %v1777 = vpack.c.b16 %v1748, %v1748
      %v1778 = vpack.c.b16 %v1750, %v1750
      %v1779 = vpack.c.b16 %v1752, %v1752
      %v1780 = vpack.c.b16 %v1754, %v1754
      %v1781 = vpack.c.b16 %v1756, %v1756
      %v1782 = vpack.c.b16 %v1758, %v1758
      %v1783 = vpack.c.b16 %v1760, %v1760
      %v1784 = vpack.c.b16 %v1762, %v1762
      %v1785 = vpack.c.b16 %v1764, %v1764
      %v1786 = vpack.c.b16 %v1766, %v1766
      %v1788 = vshrl.u32 %v1777, 16
      %v1790 = vrot.slane %v1788, 4
      %v1791 = vshll.u32 %v1777, 16
      %v1793 = vrot.slane %v1791, 5
      %v1794 = vor.u32 %v1790, %v1793
      %v1796 = vshrl.u32 %v1778, 16
      %v1798 = vrot.slane %v1796, 4
      %v1799 = vshll.u32 %v1778, 16
      %v1801 = vrot.slane %v1799, 5
      %v1802 = vor.u32 %v1798, %v1801
      %v1804 = vshrl.u32 %v1779, 16
      %v1806 = vrot.slane %v1804, 4
      %v1807 = vshll.u32 %v1779, 16
      %v1809 = vrot.slane %v1807, 5
      %v1810 = vor.u32 %v1806, %v1809
      %v1812 = vshrl.u32 %v1780, 16
      %v1814 = vrot.slane %v1812, 4
      %v1815 = vshll.u32 %v1780, 16
      %v1817 = vrot.slane %v1815, 5
      %v1818 = vor.u32 %v1814, %v1817
      %v1820 = vshrl.u32 %v1781, 16
      %v1822 = vrot.slane %v1820, 4
      %v1823 = vshll.u32 %v1781, 16
      %v1825 = vrot.slane %v1823, 5
      %v1826 = vor.u32 %v1822, %v1825
      %v1828 = vshrl.u32 %v1782, 16
      %v1830 = vrot.slane %v1828, 4
      %v1831 = vshll.u32 %v1782, 16
      %v1833 = vrot.slane %v1831, 5
      %v1834 = vor.u32 %v1830, %v1833
      %v1836 = vshrl.u32 %v1783, 16
      %v1838 = vrot.slane %v1836, 4
      %v1839 = vshll.u32 %v1783, 16
      %v1841 = vrot.slane %v1839, 5
      %v1842 = vor.u32 %v1838, %v1841
      %v1844 = vshrl.u32 %v1784, 16
      %v1846 = vrot.slane %v1844, 4
      %v1847 = vshll.u32 %v1784, 16
      %v1849 = vrot.slane %v1847, 5
      %v1850 = vor.u32 %v1846, %v1849
      %v1852 = vshrl.u32 %v1785, 16
      %v1854 = vrot.slane %v1852, 4
      %v1855 = vshll.u32 %v1785, 16
      %v1857 = vrot.slane %v1855, 5
      %v1858 = vor.u32 %v1854, %v1857
      %v1860 = vshrl.u32 %v1786, 16
      %v1862 = vrot.slane %v1860, 4
      %v1863 = vshll.u32 %v1786, 16
      %v1865 = vrot.slane %v1863, 5
      %v1866 = vor.u32 %v1862, %v1865
      %1867 = vrot.lane.b32.xlu0 %v1794, 4
      %v1868 = vpop.permute.xlu0 %1867
      %1869 = vrot.lane.b32.xlu0 %v1802, 4
      %v1870 = vpop.permute.xlu0 %1869
      %1871 = vrot.lane.b32.xlu0 %v1810, 4
      %v1872 = vpop.permute.xlu0 %1871
      %1873 = vrot.lane.b32.xlu0 %v1818, 4
      %v1874 = vpop.permute.xlu0 %1873
      %1875 = vrot.lane.b32.xlu0 %v1826, 4
      %v1876 = vpop.permute.xlu0 %1875
      %1877 = vrot.lane.b32.xlu0 %v1834, 4
      %v1878 = vpop.permute.xlu0 %1877
      %1879 = vrot.lane.b32.xlu0 %v1842, 4
      %v1880 = vpop.permute.xlu0 %1879
      %1881 = vrot.lane.b32.xlu0 %v1850, 4
      %v1882 = vpop.permute.xlu0 %1881
      %1883 = vrot.lane.b32.xlu0 %v1858, 4
      %v1884 = vpop.permute.xlu0 %1883
      %1885 = vrot.lane.b32.xlu0 %v1866, 4
      %v1886 = vpop.permute.xlu0 %1885
      %v1897 = vunpack.c.l.b16 %v1699
      %v1898 = vunpack.c.l.b16 %v1702
      %v1899 = vunpack.c.l.b16 %v1705
      %v1900 = vunpack.c.l.b16 %v1708
      %v1901 = vunpack.c.l.b16 %v1711
      %v1902 = vunpack.c.l.b16 %v1714
      %v1903 = vunpack.c.l.b16 %v1717
      %v1904 = vunpack.c.l.b16 %v1720
      %v1905 = vunpack.c.l.b16 %v1723
      %v1906 = vunpack.c.l.b16 %v1726
      %v1907 = vpack.c.b16 %v1897, %v1748
      %v1908 = vpack.c.b16 %v1898, %v1750
      %v1909 = vpack.c.b16 %v1899, %v1752
      %v1910 = vpack.c.b16 %v1900, %v1754
      %v1911 = vpack.c.b16 %v1901, %v1756
      %v1912 = vpack.c.b16 %v1902, %v1758
      %v1913 = vpack.c.b16 %v1903, %v1760
      %v1914 = vpack.c.b16 %v1904, %v1762
      %v1915 = vpack.c.b16 %v1905, %v1764
      %v1916 = vpack.c.b16 %v1906, %v1766
      %v1917 = vrot.slane %v1907, 5
      %v1918 = vrot.slane %v1908, 5
      %v1919 = vrot.slane %v1909, 5
      %v1920 = vrot.slane %v1910, 5
      %v1921 = vrot.slane %v1911, 5
      %v1922 = vrot.slane %v1912, 5
      %v1923 = vrot.slane %v1913, 5
      %v1924 = vrot.slane %v1914, 5
      %v1925 = vrot.slane %v1915, 5
      %v1926 = vrot.slane %v1916, 5
      %1927 = vrot.lane.b32.xlu0 %v1917, 8
      %v1928 = vpop.permute.xlu0 %1927
      %1929 = vrot.lane.b32.xlu0 %v1918, 8
      %v1930 = vpop.permute.xlu0 %1929
      %1931 = vrot.lane.b32.xlu0 %v1919, 8
      %v1932 = vpop.permute.xlu0 %1931
      %1933 = vrot.lane.b32.xlu0 %v1920, 8
      %v1934 = vpop.permute.xlu0 %1933
      %1935 = vrot.lane.b32.xlu0 %v1921, 8
      %v1936 = vpop.permute.xlu0 %1935
      %1937 = vrot.lane.b32.xlu0 %v1922, 8
      %v1938 = vpop.permute.xlu0 %1937
      %1939 = vrot.lane.b32.xlu0 %v1923, 8
      %v1940 = vpop.permute.xlu0 %1939
      %1941 = vrot.lane.b32.xlu0 %v1924, 8
      %v1942 = vpop.permute.xlu0 %1941
      %1943 = vrot.lane.b32.xlu0 %v1925, 8
      %v1944 = vpop.permute.xlu0 %1943
      %1945 = vrot.lane.b32.xlu0 %v1926, 8
      %v1946 = vpop.permute.xlu0 %1945
      %v1949 = vsel %vm752, %v1767, %v1868
      %v1952 = vsel %vm752, %v1768, %v1870
      %v1955 = vsel %vm752, %v1769, %v1872
      %v1958 = vsel %vm752, %v1770, %v1874
      %v1961 = vsel %vm752, %v1771, %v1876
      %v1964 = vsel %vm752, %v1772, %v1878
      %v1967 = vsel %vm752, %v1773, %v1880
      %v1970 = vsel %vm752, %v1774, %v1882
      %v1973 = vsel %vm752, %v1775, %v1884
      %v1976 = vsel %vm752, %v1776, %v1886
      %v1978 = vsel %vm783, %v1949, %v1928
      %v1980 = vsel %vm783, %v1952, %v1930
      %v1982 = vsel %vm783, %v1955, %v1932
      %v1984 = vsel %vm783, %v1958, %v1934
      %v1986 = vsel %vm783, %v1961, %v1936
      %v1988 = vsel %vm783, %v1964, %v1938
      %v1990 = vsel %vm783, %v1967, %v1940
      %v1992 = vsel %vm783, %v1970, %v1942
      %v1994 = vsel %vm783, %v1973, %v1944
      %v1996 = vsel %vm783, %v1976, %v1946
      %v2007 = vunpack.c.l.b16 %v1978
      %v2008 = vunpack.c.h.b16 %v1978
      %v2009 = vunpack.c.l.b16 %v1980
      %v2010 = vunpack.c.h.b16 %v1980
      %v2011 = vunpack.c.l.b16 %v1982
      %v2012 = vunpack.c.h.b16 %v1982
      %v2013 = vunpack.c.l.b16 %v1984
      %v2014 = vunpack.c.h.b16 %v1984
      %v2015 = vunpack.c.l.b16 %v1986
      %v2016 = vunpack.c.h.b16 %v1986
      %v2017 = vunpack.c.l.b16 %v1988
      %v2018 = vunpack.c.h.b16 %v1988
      %v2019 = vunpack.c.l.b16 %v1990
      %v2020 = vunpack.c.h.b16 %v1990
      %v2021 = vunpack.c.l.b16 %v1992
      %v2022 = vunpack.c.h.b16 %v1992
      %v2023 = vunpack.c.l.b16 %v1994
      %v2024 = vunpack.c.h.b16 %v1994
      %v2025 = vunpack.c.l.b16 %v1996
      %v2026 = vunpack.c.h.b16 %v1996
      %v2027 = vpack.c.b16 %v2007, %v2007
      %v2028 = vpack.c.b16 %v2008, %v2008
      %v2029 = vpack.c.b16 %v2009, %v2009
      %v2030 = vpack.c.b16 %v2010, %v2010
      %v2031 = vpack.c.b16 %v2011, %v2011
      %v2032 = vpack.c.b16 %v2012, %v2012
      %v2033 = vpack.c.b16 %v2013, %v2013
      %v2034 = vpack.c.b16 %v2014, %v2014
      %v2035 = vpack.c.b16 %v2015, %v2015
      %v2036 = vpack.c.b16 %v2016, %v2016
      %v2037 = vpack.c.b16 %v2017, %v2017
      %v2038 = vpack.c.b16 %v2018, %v2018
      %v2039 = vpack.c.b16 %v2019, %v2019
      %v2040 = vpack.c.b16 %v2020, %v2020
      %v2041 = vpack.c.b16 %v2021, %v2021
      %v2042 = vpack.c.b16 %v2022, %v2022
      %v2043 = vpack.c.b16 %v2023, %v2023
      %v2044 = vpack.c.b16 %v2024, %v2024
      %v2045 = vpack.c.b16 %v2025, %v2025
      %v2046 = vpack.c.b16 %v2026, %v2026
      %v2048 = vshrl.u32 %v2027, 16
      %v2050 = vrot.slane %v2048, 7
      %v2051 = vrot.slane %v2050, 4
      %v2053 = vshrl.u32 %v2028, 16
      %v2055 = vrot.slane %v2053, 7
      %v2056 = vshll.u32 %v2028, 16
      %v2058 = vor.u32 %v2055, %v2056
      %v2059 = vsel %vm855, %v2051, %v2058
      %v2061 = vshrl.u32 %v2029, 16
      %v2063 = vrot.slane %v2061, 7
      %v2064 = vrot.slane %v2063, 4
      %v2066 = vshrl.u32 %v2030, 16
      %v2068 = vrot.slane %v2066, 7
      %v2069 = vshll.u32 %v2030, 16
      %v2071 = vor.u32 %v2068, %v2069
      %v2072 = vsel %vm855, %v2064, %v2071
      %v2074 = vshrl.u32 %v2031, 16
      %v2076 = vrot.slane %v2074, 7
      %v2077 = vrot.slane %v2076, 4
      %v2079 = vshrl.u32 %v2032, 16
      %v2081 = vrot.slane %v2079, 7
      %v2082 = vshll.u32 %v2032, 16
      %v2084 = vor.u32 %v2081, %v2082
      %v2085 = vsel %vm855, %v2077, %v2084
      %v2087 = vshrl.u32 %v2033, 16
      %v2089 = vrot.slane %v2087, 7
      %v2090 = vrot.slane %v2089, 4
      %v2092 = vshrl.u32 %v2034, 16
      %v2094 = vrot.slane %v2092, 7
      %v2095 = vshll.u32 %v2034, 16
      %v2097 = vor.u32 %v2094, %v2095
      %v2098 = vsel %vm855, %v2090, %v2097
      %v2100 = vshrl.u32 %v2035, 16
      %v2102 = vrot.slane %v2100, 7
      %v2103 = vrot.slane %v2102, 4
      %v2105 = vshrl.u32 %v2036, 16
      %v2107 = vrot.slane %v2105, 7
      %v2108 = vshll.u32 %v2036, 16
      %v2110 = vor.u32 %v2107, %v2108
      %v2111 = vsel %vm855, %v2103, %v2110
      %v2113 = vshrl.u32 %v2037, 16
      %v2115 = vrot.slane %v2113, 7
      %v2116 = vrot.slane %v2115, 4
      %v2118 = vshrl.u32 %v2038, 16
      %v2120 = vrot.slane %v2118, 7
      %v2121 = vshll.u32 %v2038, 16
      %v2123 = vor.u32 %v2120, %v2121
      %v2124 = vsel %vm855, %v2116, %v2123
      %v2126 = vshrl.u32 %v2039, 16
      %v2128 = vrot.slane %v2126, 7
      %v2129 = vrot.slane %v2128, 4
      %v2131 = vshrl.u32 %v2040, 16
      %v2133 = vrot.slane %v2131, 7
      %v2134 = vshll.u32 %v2040, 16
      %v2136 = vor.u32 %v2133, %v2134
      %v2137 = vsel %vm855, %v2129, %v2136
      %v2139 = vshrl.u32 %v2041, 16
      %v2141 = vrot.slane %v2139, 7
      %v2142 = vrot.slane %v2141, 4
      %v2144 = vshrl.u32 %v2042, 16
      %v2146 = vrot.slane %v2144, 7
      %v2147 = vshll.u32 %v2042, 16
      %v2149 = vor.u32 %v2146, %v2147
      %v2150 = vsel %vm855, %v2142, %v2149
      %v2152 = vshrl.u32 %v2043, 16
      %v2154 = vrot.slane %v2152, 7
      %v2155 = vrot.slane %v2154, 4
      %v2157 = vshrl.u32 %v2044, 16
      %v2159 = vrot.slane %v2157, 7
      %v2160 = vshll.u32 %v2044, 16
      %v2162 = vor.u32 %v2159, %v2160
      %v2163 = vsel %vm855, %v2155, %v2162
      %v2165 = vshrl.u32 %v2045, 16
      %v2167 = vrot.slane %v2165, 7
      %v2168 = vrot.slane %v2167, 4
      %v2170 = vshrl.u32 %v2046, 16
      %v2172 = vrot.slane %v2170, 7
      %v2173 = vshll.u32 %v2046, 16
      %v2175 = vor.u32 %v2172, %v2173
      %v2176 = vsel %vm855, %v2168, %v2175
      %s2177 = scalar_lea.vmem %s1, 16
      %v2178 = vld [vmem:[%s2177] sm:$0xf]
      %v2179 = vld [vmem:[%s2177 + $0x4] sm:$0x3]
      %v2180 = vunpack.c.l.b16 %v2059
      %v2181 = vunpack.c.l.b16 %v2072
      %v2182 = vunpack.c.l.b16 %v2085
      %v2183 = vunpack.c.l.b16 %v2098
      %v2184 = vunpack.c.l.b16 %v2111
      %v2185 = vunpack.c.l.b16 %v2124
      %v2186 = vunpack.c.l.b16 %v2137
      %v2187 = vunpack.c.l.b16 %v2150
      %v2188 = vunpack.c.l.b16 %v2163
      %v2189 = vunpack.c.l.b16 %v2176
      %v2190 = vpack.c.b16 %v2181, %v2180
      %v2191 = vpack.c.b16 %v2183, %v2182
      %v2192 = vpack.c.b16 %v2185, %v2184
      %v2193 = vpack.c.b16 %v2187, %v2186
      %v2194 = vpack.c.b16 %v2189, %v2188
      %v2197 = vunpack.c.l.b16 %v2178
      %v2198 = vunpack.c.l.b16 %v2179
      %v2199 = vpack.c.b16 %v2198, %v2197
      %v2201 = vsel %vm1492, %v2190, 0
      %v2204 = vsel %vm1492, %v2191, 0
      %v2207 = vsel %vm1492, %v2192, 0
      %v2210 = vsel %vm1492, %v2193, 0
      %v2213 = vsel %vm1492, %v2194, 0
      %v2216 = vsel %vm1508, %v2199, 0
      %2218 = vmatprep.subr.bf16.mxu0 0
      %2219 = vmatpush1.bf16.msra.mxu0 0
      %2220 = vmatprep.subr.bf16.mxu0 0
      %2221 = vmatpush1.bf16.msra.mxu0 0
      %2222 = vmatprep.subr.bf16.mxu0 0
      %2223 = vmatpush1.bf16.msra.mxu0 0
      %2224 = vmatprep.subr.bf16.mxu0 0
      %2225 = vmatpush1.bf16.msra.mxu0 0
      %2226 = vmatprep.subr.bf16.mxu0 0
      %2227 = vmatpush1.bf16.msra.mxu0 0
      %2228 = vmatprep.subr.bf16.mxu0 0
      %2229 = vmatpush1.bf16.msra.mxu0 0
      %2230 = vmatprep.subr.bf16.mxu0 0
      %2231 = vmatpush1.bf16.msra.mxu0 0
      %2232 = vmatprep.subr.bf16.mxu0 0
      %2233 = vmatpush1.bf16.msra.mxu0 %v2216
      %2234 = vmatprep.subr.bf16.mxu0 0
      %2235 = vmatpush2.bf16.msra.mxu0 0
      %2236 = vmatprep.subr.bf16.mxu0 0
      %2237 = vmatpush2.bf16.msra.mxu0 0
      %2238 = vmatprep.subr.bf16.mxu0 0
      %2239 = vmatpush2.bf16.msra.mxu0 0
      %2240 = vmatprep.subr.bf16.mxu0 0
      %2241 = vmatpush2.bf16.msra.mxu0 0
      %2242 = vmatprep.subr.bf16.mxu0 0
      %2243 = vmatpush2.bf16.msra.mxu0 0
      %2244 = vmatprep.subr.bf16.mxu0 0
      %2245 = vmatpush2.bf16.msra.mxu0 0
      %2246 = vmatprep.subr.bf16.mxu0 0
      %2247 = vmatpush2.bf16.msra.mxu0 0
      %2248 = vmatprep.subr.bf16.mxu0 0
      %2249 = vmatpush2.bf16.msra.mxu0 0
      %2250 = vmatprep.mubr.bf16.mxu0 0
      %2251 = vmatmul.mubr.bf16.gmra.mxu0 %v2201
      %v2252 = vpop.f32.mrf.mxu0
      %v2253 = vadd.f32 0.0, %v2252
      %v2254 = vpop.f32.mrf.mxu0
      %v2255 = vpop.f32.mrf.mxu0
      %v2256 = vadd.f32 0.0, %v2255
      %v2257 = vpop.f32.mrf.mxu0
      %2258 = vmatprep.mubr.bf16.mxu0 0
      %2259 = vmatmul.mubr.bf16.gmra.mxu0 %v2204
      %v2260 = vpop.f32.mrf.mxu0
      %v2261 = vadd.f32 0.0, %v2260
      %v2262 = vpop.f32.mrf.mxu0
      %v2263 = vpop.f32.mrf.mxu0
      %v2264 = vadd.f32 0.0, %v2263
      %v2265 = vpop.f32.mrf.mxu0
      %2266 = vmatprep.mubr.bf16.mxu0 0
      %2267 = vmatmul.mubr.bf16.gmra.mxu0 %v2207
      %v2268 = vpop.f32.mrf.mxu0
      %v2269 = vadd.f32 0.0, %v2268
      %v2270 = vpop.f32.mrf.mxu0
      %v2271 = vpop.f32.mrf.mxu0
      %v2272 = vadd.f32 0.0, %v2271
      %v2273 = vpop.f32.mrf.mxu0
      %2274 = vmatprep.mubr.bf16.mxu0 0
      %2275 = vmatmul.mubr.bf16.gmra.mxu0 %v2210
      %v2276 = vpop.f32.mrf.mxu0
      %v2277 = vadd.f32 0.0, %v2276
      %v2278 = vpop.f32.mrf.mxu0
      %v2279 = vpop.f32.mrf.mxu0
      %v2280 = vadd.f32 0.0, %v2279
      %v2281 = vpop.f32.mrf.mxu0
      %2282 = vmatprep.mubr.bf16.mxu0 0
      %2283 = vmatmul.mubr.bf16.gmra.mxu0 %v2213
      %v2284 = vpop.f32.mrf.mxu0
      %v2285 = vadd.f32 0.0, %v2284
      %v2286 = vpop.f32.mrf.mxu0
      %v2287 = vpop.f32.mrf.mxu0
      %v2288 = vadd.f32 0.0, %v2287
      %v2289 = vpop.f32.mrf.mxu0
      %2290 = vdwg.mxu0
      %v2291 = vadd.f32 %v1658, %v2253
      %v2292 = vadd.f32 %v1661, %v2256
      %v2293 = vadd.f32 %v1666, %v2261
      %v2294 = vadd.f32 %v1669, %v2264
      %v2295 = vadd.f32 %v1674, %v2269
      %v2296 = vadd.f32 %v1677, %v2272
      %v2297 = vadd.f32 %v1682, %v2277
      %v2298 = vadd.f32 %v1685, %v2280
      %v2299 = vadd.f32 %v1690, %v2285
      %v2300 = vadd.f32 %v1693, %v2288
      %v2301 = vld [vmem:[%s2] sm:$0x1]
      %v2303 = vlaneseq
      %v2304 = vshrl.u32 %v2303, 7
      %v2305 = vsub.s32 0, %v2304
      %v2306 = vrot.slane %v2301, %v2305
      %v2308 = vadd.f32 %v2291, %v2306
      %v2309 = vadd.f32 %v2292, %v2306
      %v2310 = vadd.f32 %v2293, %v2306
      %v2311 = vadd.f32 %v2294, %v2306
      %v2312 = vadd.f32 %v2295, %v2306
      %v2313 = vadd.f32 %v2296, %v2306
      %v2314 = vadd.f32 %v2297, %v2306
      %v2315 = vadd.f32 %v2298, %v2306
      %v2316 = vadd.f32 %v2299, %v2306
      %v2317 = vadd.f32 %v2300, %v2306
      %v2318 = vmax.f32 %v2308, 0.0
      %v2319 = vmax.f32 %v2309, 0.0
      %v2320 = vmax.f32 %v2310, 0.0
      %v2321 = vmax.f32 %v2311, 0.0
      %v2322 = vmax.f32 %v2312, 0.0
      %v2323 = vmax.f32 %v2313, 0.0
      %v2324 = vmax.f32 %v2314, 0.0
      %v2325 = vmax.f32 %v2315, 0.0
      %v2326 = vmax.f32 %v2316, 0.0
      %v2327 = vmax.f32 %v2317, 0.0
      %v2328 = vpack.c.bf16 %v2319, %v2318
      %v2329 = vpack.c.bf16 %v2321, %v2320
      %v2330 = vpack.c.bf16 %v2323, %v2322
      %v2331 = vpack.c.bf16 %v2325, %v2324
      %v2332 = vpack.c.bf16 %v2327, %v2326
      %v2338 = vunpack.c.l.b16 %v2328
      %v2339 = vunpack.c.h.b16 %v2328
      %v2340 = vunpack.c.l.b16 %v2329
      %v2341 = vunpack.c.h.b16 %v2329
      %v2342 = vunpack.c.l.b16 %v2330
      %v2343 = vunpack.c.h.b16 %v2330
      %v2344 = vunpack.c.l.b16 %v2331
      %v2345 = vunpack.c.h.b16 %v2331
      %v2346 = vunpack.c.l.b16 %v2332
      %v2347 = vunpack.c.h.b16 %v2332
      %v2348 = vpack.c.b16 %v2338, %v2338
      %v2349 = vpack.c.b16 %v2339, %v2339
      %v2350 = vpack.c.b16 %v2340, %v2340
      %v2351 = vpack.c.b16 %v2341, %v2341
      %v2352 = vpack.c.b16 %v2342, %v2342
      %v2353 = vpack.c.b16 %v2343, %v2343
      %v2354 = vpack.c.b16 %v2344, %v2344
      %v2355 = vpack.c.b16 %v2345, %v2345
      %v2356 = vpack.c.b16 %v2346, %v2346
      %v2357 = vpack.c.b16 %v2347, %v2347
      %vm2368 = vcmask 60416
      %2369 = vst.msk [vmem:[#allocation3 + $0x4] sm:$0xf] %vm2368, %v2348
      %2370 = vst.msk [vmem:[#allocation3 + $0x10] sm:$0xf] %vm2368, %v2349
      %2371 = vst.msk [vmem:[#allocation3 + $0x1c] sm:$0xf] %vm2368, %v2350
      %2372 = vst.msk [vmem:[#allocation3 + $0x28] sm:$0xf] %vm2368, %v2351
      %2373 = vst.msk [vmem:[#allocation3 + $0x34] sm:$0xf] %vm2368, %v2352
      %2374 = vst.msk [vmem:[#allocation3 + $0x40] sm:$0xf] %vm2368, %v2353
      %2375 = vst.msk [vmem:[#allocation3 + $0x4c] sm:$0xf] %vm2368, %v2354
      %2376 = vst.msk [vmem:[#allocation3 + $0x58] sm:$0xf] %vm2368, %v2355
      %2377 = vst.msk [vmem:[#allocation3 + $0x64] sm:$0xf] %vm2368, %v2356
      %2378 = vst.msk [vmem:[#allocation3 + $0x70] sm:$0xf] %vm2368, %v2357
      %p2379 = scmp.eq.s32.totalorder %s21, 0
      // Predicated region
      $region41: #{down_sample_forward.1} parent=39 // pred_check
        %p2380 = pneg %p2379
      $region42: #{down_sample_forward.1} parent=39 // pred_check_branch
        %2382 = sbr.rel (%p2380) target = $region44
      $region43: #{down_sample_forward.1} parent=39 // pred_region
        %2383 = vst.msk [vmem:[#allocation3] sm:$0xf] %vm2368, 0
        %2384 = vst.msk [vmem:[#allocation3 + $0x4] sm:$0xf] %vm2368, 0
        %v2385 = vld [vmem:[#allocation3 + $0x8] sm:$0x1]
        %v2386 = vsel %vm458, 0, %v2385
        %2387 = vst [vmem:[#allocation3 + $0x8] sm:$0x1] %v2386
        %s2388 = scalar_lea.vmem [#allocation3], 108
        %2389 = vst.msk [vmem:[%s2388] sm:$0xf] %vm2368, 0
        %2390 = vst.msk [vmem:[%s2388 + $0x4] sm:$0xf] %vm2368, 0
        %v2391 = vld [vmem:[%s2388 + $0x8] sm:$0x1]
        %v2392 = vsel %vm458, 0, %v2391
        %2393 = vst [vmem:[%s2388 + $0x8] sm:$0x1] %v2392
      $region44: #{down_sample_forward.1} parent=39 // pred_fallthru
        _
      %v2394 = vld [vmem:[#allocation3] sm:$0x8]
      %v2395 = vld [vmem:[#allocation3 + $0x4] sm:$0xf]
      %v2396 = vld [vmem:[#allocation3 + $0x8] sm:$0x1]
      %v2397 = vld [vmem:[#allocation3 + $0xc] sm:$0x8]
      %v2398 = vld [vmem:[#allocation3 + $0x10] sm:$0xf]
      %v2399 = vld [vmem:[#allocation3 + $0x14] sm:$0x1]
      %v2400 = vld [vmem:[#allocation3 + $0x18] sm:$0x8]
      %v2401 = vld [vmem:[#allocation3 + $0x1c] sm:$0xf]
      %v2402 = vld [vmem:[#allocation3 + $0x20] sm:$0x1]
      %v2403 = vld [vmem:[#allocation3 + $0x24] sm:$0x8]
      %v2404 = vld [vmem:[#allocation3 + $0x28] sm:$0xf]
      %v2405 = vld [vmem:[#allocation3 + $0x2c] sm:$0x1]
      %v2406 = vld [vmem:[#allocation3 + $0x30] sm:$0x8]
      %v2407 = vld [vmem:[#allocation3 + $0x34] sm:$0xf]
      %v2408 = vld [vmem:[#allocation3 + $0x38] sm:$0x1]
      %v2409 = vld [vmem:[#allocation3 + $0x3c] sm:$0x8]
      %v2410 = vld [vmem:[#allocation3 + $0x40] sm:$0xf]
      %v2411 = vld [vmem:[#allocation3 + $0x44] sm:$0x1]
      %v2412 = vld [vmem:[#allocation3 + $0x48] sm:$0x8]
      %v2413 = vld [vmem:[#allocation3 + $0x4c] sm:$0xf]
      %v2414 = vld [vmem:[#allocation3 + $0x50] sm:$0x1]
      %v2415 = vld [vmem:[#allocation3 + $0x54] sm:$0x8]
      %v2416 = vld [vmem:[#allocation3 + $0x58] sm:$0xf]
      %v2417 = vld [vmem:[#allocation3 + $0x5c] sm:$0x1]
      %v2434 = vunpack.c.l.b16 %v2394
      %v2435 = vunpack.c.l.b16 %v2395
      %v2436 = vunpack.c.l.b16 %v2397
      %v2437 = vunpack.c.l.b16 %v2398
      %v2438 = vunpack.c.l.b16 %v2400
      %v2439 = vunpack.c.l.b16 %v2401
      %v2440 = vunpack.c.l.b16 %v2403
      %v2441 = vunpack.c.l.b16 %v2404
      %v2442 = vunpack.c.l.b16 %v2406
      %v2443 = vunpack.c.l.b16 %v2407
      %v2444 = vunpack.c.l.b16 %v2409
      %v2445 = vunpack.c.l.b16 %v2410
      %v2446 = vunpack.c.l.b16 %v2412
      %v2447 = vunpack.c.l.b16 %v2413
      %v2448 = vunpack.c.l.b16 %v2415
      %v2449 = vunpack.c.l.b16 %v2416
      %v2450 = vpack.c.b16 %v2435, %v2434
      %v2451 = vpack.c.b16 %v2437, %v2436
      %v2452 = vpack.c.b16 %v2439, %v2438
      %v2453 = vpack.c.b16 %v2441, %v2440
      %v2454 = vpack.c.b16 %v2443, %v2442
      %v2455 = vpack.c.b16 %v2445, %v2444
      %v2456 = vpack.c.b16 %v2447, %v2446
      %v2457 = vpack.c.b16 %v2449, %v2448
      %v2458 = vpack.c.b16 %v2435, %v2435
      %v2459 = vpack.c.b16 %v2437, %v2437
      %v2460 = vpack.c.b16 %v2439, %v2439
      %v2461 = vpack.c.b16 %v2441, %v2441
      %v2462 = vpack.c.b16 %v2443, %v2443
      %v2463 = vpack.c.b16 %v2445, %v2445
      %v2464 = vpack.c.b16 %v2447, %v2447
      %v2465 = vpack.c.b16 %v2449, %v2449
      %v2467 = vshrl.u32 %v2458, 16
      %v2469 = vrot.slane %v2467, 4
      %v2470 = vshll.u32 %v2458, 16
      %v2472 = vrot.slane %v2470, 5
      %v2473 = vor.u32 %v2469, %v2472
      %v2475 = vshrl.u32 %v2459, 16
      %v2477 = vrot.slane %v2475, 4
      %v2478 = vshll.u32 %v2459, 16
      %v2480 = vrot.slane %v2478, 5
      %v2481 = vor.u32 %v2477, %v2480
      %v2483 = vshrl.u32 %v2460, 16
      %v2485 = vrot.slane %v2483, 4
      %v2486 = vshll.u32 %v2460, 16
      %v2488 = vrot.slane %v2486, 5
      %v2489 = vor.u32 %v2485, %v2488
      %v2491 = vshrl.u32 %v2461, 16
      %v2493 = vrot.slane %v2491, 4
      %v2494 = vshll.u32 %v2461, 16
      %v2496 = vrot.slane %v2494, 5
      %v2497 = vor.u32 %v2493, %v2496
      %v2499 = vshrl.u32 %v2462, 16
      %v2501 = vrot.slane %v2499, 4
      %v2502 = vshll.u32 %v2462, 16
      %v2504 = vrot.slane %v2502, 5
      %v2505 = vor.u32 %v2501, %v2504
      %v2507 = vshrl.u32 %v2463, 16
      %v2509 = vrot.slane %v2507, 4
      %v2510 = vshll.u32 %v2463, 16
      %v2512 = vrot.slane %v2510, 5
      %v2513 = vor.u32 %v2509, %v2512
      %v2515 = vshrl.u32 %v2464, 16
      %v2517 = vrot.slane %v2515, 4
      %v2518 = vshll.u32 %v2464, 16
      %v2520 = vrot.slane %v2518, 5
      %v2521 = vor.u32 %v2517, %v2520
      %v2523 = vshrl.u32 %v2465, 16
      %v2525 = vrot.slane %v2523, 4
      %v2526 = vshll.u32 %v2465, 16
      %v2528 = vrot.slane %v2526, 5
      %v2529 = vor.u32 %v2525, %v2528
      %2530 = vrot.lane.b32.xlu0 %v2473, 8
      %v2531 = vpop.permute.xlu0 %2530
      %2532 = vrot.lane.b32.xlu0 %v2481, 8
      %v2533 = vpop.permute.xlu0 %2532
      %2534 = vrot.lane.b32.xlu0 %v2489, 8
      %v2535 = vpop.permute.xlu0 %2534
      %2536 = vrot.lane.b32.xlu0 %v2497, 8
      %v2537 = vpop.permute.xlu0 %2536
      %2538 = vrot.lane.b32.xlu0 %v2505, 8
      %v2539 = vpop.permute.xlu0 %2538
      %2540 = vrot.lane.b32.xlu0 %v2513, 8
      %v2541 = vpop.permute.xlu0 %2540
      %2542 = vrot.lane.b32.xlu0 %v2521, 8
      %v2543 = vpop.permute.xlu0 %2542
      %2544 = vrot.lane.b32.xlu0 %v2529, 8
      %v2545 = vpop.permute.xlu0 %2544
      %v2554 = vunpack.c.l.b16 %v2396
      %v2555 = vunpack.c.l.b16 %v2399
      %v2556 = vunpack.c.l.b16 %v2402
      %v2557 = vunpack.c.l.b16 %v2405
      %v2558 = vunpack.c.l.b16 %v2408
      %v2559 = vunpack.c.l.b16 %v2411
      %v2560 = vunpack.c.l.b16 %v2414
      %v2561 = vunpack.c.l.b16 %v2417
      %v2562 = vpack.c.b16 %v2554, %v2435
      %v2563 = vpack.c.b16 %v2555, %v2437
      %v2564 = vpack.c.b16 %v2556, %v2439
      %v2565 = vpack.c.b16 %v2557, %v2441
      %v2566 = vpack.c.b16 %v2558, %v2443
      %v2567 = vpack.c.b16 %v2559, %v2445
      %v2568 = vpack.c.b16 %v2560, %v2447
      %v2569 = vpack.c.b16 %v2561, %v2449
      %v2570 = vrot.slane %v2562, 5
      %v2571 = vrot.slane %v2563, 5
      %v2572 = vrot.slane %v2564, 5
      %v2573 = vrot.slane %v2565, 5
      %v2574 = vrot.slane %v2566, 5
      %v2575 = vrot.slane %v2567, 5
      %v2576 = vrot.slane %v2568, 5
      %v2577 = vrot.slane %v2569, 5
      %2578 = vrot.lane.b32.xlu0 %v2570, 16
      %v2579 = vpop.permute.xlu0 %2578
      %2580 = vrot.lane.b32.xlu0 %v2571, 16
      %v2581 = vpop.permute.xlu0 %2580
      %2582 = vrot.lane.b32.xlu0 %v2572, 16
      %v2583 = vpop.permute.xlu0 %2582
      %2584 = vrot.lane.b32.xlu0 %v2573, 16
      %v2585 = vpop.permute.xlu0 %2584
      %2586 = vrot.lane.b32.xlu0 %v2574, 16
      %v2587 = vpop.permute.xlu0 %2586
      %2588 = vrot.lane.b32.xlu0 %v2575, 16
      %v2589 = vpop.permute.xlu0 %2588
      %2590 = vrot.lane.b32.xlu0 %v2576, 16
      %v2591 = vpop.permute.xlu0 %2590
      %2592 = vrot.lane.b32.xlu0 %v2577, 16
      %v2593 = vpop.permute.xlu0 %2592
      %v2596 = vsel %vm783, %v2450, %v2531
      %v2599 = vsel %vm783, %v2451, %v2533
      %v2602 = vsel %vm783, %v2452, %v2535
      %v2605 = vsel %vm783, %v2453, %v2537
      %v2608 = vsel %vm783, %v2454, %v2539
      %v2611 = vsel %vm783, %v2455, %v2541
      %v2614 = vsel %vm783, %v2456, %v2543
      %v2617 = vsel %vm783, %v2457, %v2545
      %vm2618 = vcmask 130048
      %v2620 = vsel %vm2618, %v2596, %v2579
      %v2622 = vsel %vm2618, %v2599, %v2581
      %v2624 = vsel %vm2618, %v2602, %v2583
      %v2626 = vsel %vm2618, %v2605, %v2585
      %v2628 = vsel %vm2618, %v2608, %v2587
      %v2630 = vsel %vm2618, %v2611, %v2589
      %v2632 = vsel %vm2618, %v2614, %v2591
      %v2634 = vsel %vm2618, %v2617, %v2593
      %v2643 = vunpack.c.l.b16 %v2620
      %v2644 = vunpack.c.h.b16 %v2620
      %v2645 = vunpack.c.l.b16 %v2622
      %v2646 = vunpack.c.h.b16 %v2622
      %v2647 = vunpack.c.l.b16 %v2624
      %v2648 = vunpack.c.h.b16 %v2624
      %v2649 = vunpack.c.l.b16 %v2626
      %v2650 = vunpack.c.h.b16 %v2626
      %v2651 = vunpack.c.l.b16 %v2628
      %v2652 = vunpack.c.h.b16 %v2628
      %v2653 = vunpack.c.l.b16 %v2630
      %v2654 = vunpack.c.h.b16 %v2630
      %v2655 = vunpack.c.l.b16 %v2632
      %v2656 = vunpack.c.h.b16 %v2632
      %v2657 = vunpack.c.l.b16 %v2634
      %v2658 = vunpack.c.h.b16 %v2634
      %v2659 = vpack.c.b16 %v2643, %v2643
      %v2660 = vpack.c.b16 %v2644, %v2644
      %v2661 = vpack.c.b16 %v2645, %v2645
      %v2662 = vpack.c.b16 %v2646, %v2646
      %v2663 = vpack.c.b16 %v2647, %v2647
      %v2664 = vpack.c.b16 %v2648, %v2648
      %v2665 = vpack.c.b16 %v2649, %v2649
      %v2666 = vpack.c.b16 %v2650, %v2650
      %v2667 = vpack.c.b16 %v2651, %v2651
      %v2668 = vpack.c.b16 %v2652, %v2652
      %v2669 = vpack.c.b16 %v2653, %v2653
      %v2670 = vpack.c.b16 %v2654, %v2654
      %v2671 = vpack.c.b16 %v2655, %v2655
      %v2672 = vpack.c.b16 %v2656, %v2656
      %v2673 = vpack.c.b16 %v2657, %v2657
      %v2674 = vpack.c.b16 %v2658, %v2658
      %v2676 = vshrl.u32 %v2659, 16
      %v2678 = vrot.slane %v2676, 7
      %v2679 = vrot.slane %v2678, 4
      %v2681 = vshrl.u32 %v2660, 16
      %v2683 = vrot.slane %v2681, 7
      %v2684 = vshll.u32 %v2660, 16
      %v2686 = vor.u32 %v2683, %v2684
      %v2687 = vsel %vm855, %v2679, %v2686
      %v2689 = vshrl.u32 %v2661, 16
      %v2691 = vrot.slane %v2689, 7
      %v2692 = vrot.slane %v2691, 4
      %v2694 = vshrl.u32 %v2662, 16
      %v2696 = vrot.slane %v2694, 7
      %v2697 = vshll.u32 %v2662, 16
      %v2699 = vor.u32 %v2696, %v2697
      %v2700 = vsel %vm855, %v2692, %v2699
      %v2702 = vshrl.u32 %v2663, 16
      %v2704 = vrot.slane %v2702, 7
      %v2705 = vrot.slane %v2704, 4
      %v2707 = vshrl.u32 %v2664, 16
      %v2709 = vrot.slane %v2707, 7
      %v2710 = vshll.u32 %v2664, 16
      %v2712 = vor.u32 %v2709, %v2710
      %v2713 = vsel %vm855, %v2705, %v2712
      %v2715 = vshrl.u32 %v2665, 16
      %v2717 = vrot.slane %v2715, 7
      %v2718 = vrot.slane %v2717, 4
      %v2720 = vshrl.u32 %v2666, 16
      %v2722 = vrot.slane %v2720, 7
      %v2723 = vshll.u32 %v2666, 16
      %v2725 = vor.u32 %v2722, %v2723
      %v2726 = vsel %vm855, %v2718, %v2725
      %v2728 = vshrl.u32 %v2667, 16
      %v2730 = vrot.slane %v2728, 7
      %v2731 = vrot.slane %v2730, 4
      %v2733 = vshrl.u32 %v2668, 16
      %v2735 = vrot.slane %v2733, 7
      %v2736 = vshll.u32 %v2668, 16
      %v2738 = vor.u32 %v2735, %v2736
      %v2739 = vsel %vm855, %v2731, %v2738
      %v2741 = vshrl.u32 %v2669, 16
      %v2743 = vrot.slane %v2741, 7
      %v2744 = vrot.slane %v2743, 4
      %v2746 = vshrl.u32 %v2670, 16
      %v2748 = vrot.slane %v2746, 7
      %v2749 = vshll.u32 %v2670, 16
      %v2751 = vor.u32 %v2748, %v2749
      %v2752 = vsel %vm855, %v2744, %v2751
      %v2754 = vshrl.u32 %v2671, 16
      %v2756 = vrot.slane %v2754, 7
      %v2757 = vrot.slane %v2756, 4
      %v2759 = vshrl.u32 %v2672, 16
      %v2761 = vrot.slane %v2759, 7
      %v2762 = vshll.u32 %v2672, 16
      %v2764 = vor.u32 %v2761, %v2762
      %v2765 = vsel %vm855, %v2757, %v2764
      %v2767 = vshrl.u32 %v2673, 16
      %v2769 = vrot.slane %v2767, 7
      %v2770 = vrot.slane %v2769, 4
      %v2772 = vshrl.u32 %v2674, 16
      %v2774 = vrot.slane %v2772, 7
      %v2775 = vshll.u32 %v2674, 16
      %v2777 = vor.u32 %v2774, %v2775
      %v2778 = vsel %vm855, %v2770, %v2777
      %v2779 = vld [vmem:[%s3] sm:$0xf]
      %v2780 = vld [vmem:[%s3 + $0x4] sm:$0xf]
      %v2781 = vld [vmem:[%s3 + $0x8] sm:$0xf]
      %s2782 = scalar_lea.vmem [#allocation3], 12
      %v2783 = vld [vmem:[%s2782] sm:$0x8]
      %v2784 = vld [vmem:[%s2782 + $0x4] sm:$0xf]
      %v2785 = vld [vmem:[%s2782 + $0x8] sm:$0x1]
      %v2786 = vld [vmem:[%s2782 + $0xc] sm:$0x8]
      %v2787 = vld [vmem:[%s2782 + $0x10] sm:$0xf]
      %v2788 = vld [vmem:[%s2782 + $0x14] sm:$0x1]
      %v2789 = vld [vmem:[%s2782 + $0x18] sm:$0x8]
      %v2790 = vld [vmem:[%s2782 + $0x1c] sm:$0xf]
      %v2791 = vld [vmem:[%s2782 + $0x20] sm:$0x1]
      %v2792 = vld [vmem:[%s2782 + $0x24] sm:$0x8]
      %v2793 = vld [vmem:[%s2782 + $0x28] sm:$0xf]
      %v2794 = vld [vmem:[%s2782 + $0x2c] sm:$0x1]
      %v2795 = vld [vmem:[%s2782 + $0x30] sm:$0x8]
      %v2796 = vld [vmem:[%s2782 + $0x34] sm:$0xf]
      %v2797 = vld [vmem:[%s2782 + $0x38] sm:$0x1]
      %v2798 = vld [vmem:[%s2782 + $0x3c] sm:$0x8]
      %v2799 = vld [vmem:[%s2782 + $0x40] sm:$0xf]
      %v2800 = vld [vmem:[%s2782 + $0x44] sm:$0x1]
      %v2801 = vld [vmem:[%s2782 + $0x48] sm:$0x8]
      %v2802 = vld [vmem:[%s2782 + $0x4c] sm:$0xf]
      %v2803 = vld [vmem:[%s2782 + $0x50] sm:$0x1]
      %v2804 = vld [vmem:[%s2782 + $0x54] sm:$0x8]
      %v2805 = vld [vmem:[%s2782 + $0x58] sm:$0xf]
      %v2806 = vld [vmem:[%s2782 + $0x5c] sm:$0x1]
      %v2823 = vunpack.c.l.b16 %v2783
      %v2824 = vunpack.c.l.b16 %v2784
      %v2825 = vunpack.c.l.b16 %v2786
      %v2826 = vunpack.c.l.b16 %v2787
      %v2827 = vunpack.c.l.b16 %v2789
      %v2828 = vunpack.c.l.b16 %v2790
      %v2829 = vunpack.c.l.b16 %v2792
      %v2830 = vunpack.c.l.b16 %v2793
      %v2831 = vunpack.c.l.b16 %v2795
      %v2832 = vunpack.c.l.b16 %v2796
      %v2833 = vunpack.c.l.b16 %v2798
      %v2834 = vunpack.c.l.b16 %v2799
      %v2835 = vunpack.c.l.b16 %v2801
      %v2836 = vunpack.c.l.b16 %v2802
      %v2837 = vunpack.c.l.b16 %v2804
      %v2838 = vunpack.c.l.b16 %v2805
      %v2839 = vpack.c.b16 %v2824, %v2823
      %v2840 = vpack.c.b16 %v2826, %v2825
      %v2841 = vpack.c.b16 %v2828, %v2827
      %v2842 = vpack.c.b16 %v2830, %v2829
      %v2843 = vpack.c.b16 %v2832, %v2831
      %v2844 = vpack.c.b16 %v2834, %v2833
      %v2845 = vpack.c.b16 %v2836, %v2835
      %v2846 = vpack.c.b16 %v2838, %v2837
      %v2847 = vpack.c.b16 %v2824, %v2824
      %v2848 = vpack.c.b16 %v2826, %v2826
      %v2849 = vpack.c.b16 %v2828, %v2828
      %v2850 = vpack.c.b16 %v2830, %v2830
      %v2851 = vpack.c.b16 %v2832, %v2832
      %v2852 = vpack.c.b16 %v2834, %v2834
      %v2853 = vpack.c.b16 %v2836, %v2836
      %v2854 = vpack.c.b16 %v2838, %v2838
      %v2856 = vshrl.u32 %v2847, 16
      %v2858 = vrot.slane %v2856, 4
      %v2859 = vshll.u32 %v2847, 16
      %v2861 = vrot.slane %v2859, 5
      %v2862 = vor.u32 %v2858, %v2861
      %v2864 = vshrl.u32 %v2848, 16
      %v2866 = vrot.slane %v2864, 4
      %v2867 = vshll.u32 %v2848, 16
      %v2869 = vrot.slane %v2867, 5
      %v2870 = vor.u32 %v2866, %v2869
      %v2872 = vshrl.u32 %v2849, 16
      %v2874 = vrot.slane %v2872, 4
      %v2875 = vshll.u32 %v2849, 16
      %v2877 = vrot.slane %v2875, 5
      %v2878 = vor.u32 %v2874, %v2877
      %v2880 = vshrl.u32 %v2850, 16
      %v2882 = vrot.slane %v2880, 4
      %v2883 = vshll.u32 %v2850, 16
      %v2885 = vrot.slane %v2883, 5
      %v2886 = vor.u32 %v2882, %v2885
      %v2888 = vshrl.u32 %v2851, 16
      %v2890 = vrot.slane %v2888, 4
      %v2891 = vshll.u32 %v2851, 16
      %v2893 = vrot.slane %v2891, 5
      %v2894 = vor.u32 %v2890, %v2893
      %v2896 = vshrl.u32 %v2852, 16
      %v2898 = vrot.slane %v2896, 4
      %v2899 = vshll.u32 %v2852, 16
      %v2901 = vrot.slane %v2899, 5
      %v2902 = vor.u32 %v2898, %v2901
      %v2904 = vshrl.u32 %v2853, 16
      %v2906 = vrot.slane %v2904, 4
      %v2907 = vshll.u32 %v2853, 16
      %v2909 = vrot.slane %v2907, 5
      %v2910 = vor.u32 %v2906, %v2909
      %v2912 = vshrl.u32 %v2854, 16
      %v2914 = vrot.slane %v2912, 4
      %v2915 = vshll.u32 %v2854, 16
      %v2917 = vrot.slane %v2915, 5
      %v2918 = vor.u32 %v2914, %v2917
      %2919 = vrot.lane.b32.xlu0 %v2862, 8
      %v2920 = vpop.permute.xlu0 %2919
      %2921 = vrot.lane.b32.xlu0 %v2870, 8
      %v2922 = vpop.permute.xlu0 %2921
      %2923 = vrot.lane.b32.xlu0 %v2878, 8
      %v2924 = vpop.permute.xlu0 %2923
      %2925 = vrot.lane.b32.xlu0 %v2886, 8
      %v2926 = vpop.permute.xlu0 %2925
      %2927 = vrot.lane.b32.xlu0 %v2894, 8
      %v2928 = vpop.permute.xlu0 %2927
      %2929 = vrot.lane.b32.xlu0 %v2902, 8
      %v2930 = vpop.permute.xlu0 %2929
      %2931 = vrot.lane.b32.xlu0 %v2910, 8
      %v2932 = vpop.permute.xlu0 %2931
      %2933 = vrot.lane.b32.xlu0 %v2918, 8
      %v2934 = vpop.permute.xlu0 %2933
      %v2943 = vunpack.c.l.b16 %v2785
      %v2944 = vunpack.c.l.b16 %v2788
      %v2945 = vunpack.c.l.b16 %v2791
      %v2946 = vunpack.c.l.b16 %v2794
      %v2947 = vunpack.c.l.b16 %v2797
      %v2948 = vunpack.c.l.b16 %v2800
      %v2949 = vunpack.c.l.b16 %v2803
      %v2950 = vunpack.c.l.b16 %v2806
      %v2951 = vpack.c.b16 %v2943, %v2824
      %v2952 = vpack.c.b16 %v2944, %v2826
      %v2953 = vpack.c.b16 %v2945, %v2828
      %v2954 = vpack.c.b16 %v2946, %v2830
      %v2955 = vpack.c.b16 %v2947, %v2832
      %v2956 = vpack.c.b16 %v2948, %v2834
      %v2957 = vpack.c.b16 %v2949, %v2836
      %v2958 = vpack.c.b16 %v2950, %v2838
      %v2959 = vrot.slane %v2951, 5
      %v2960 = vrot.slane %v2952, 5
      %v2961 = vrot.slane %v2953, 5
      %v2962 = vrot.slane %v2954, 5
      %v2963 = vrot.slane %v2955, 5
      %v2964 = vrot.slane %v2956, 5
      %v2965 = vrot.slane %v2957, 5
      %v2966 = vrot.slane %v2958, 5
      %2967 = vrot.lane.b32.xlu0 %v2959, 16
      %v2968 = vpop.permute.xlu0 %2967
      %2969 = vrot.lane.b32.xlu0 %v2960, 16
      %v2970 = vpop.permute.xlu0 %2969
      %2971 = vrot.lane.b32.xlu0 %v2961, 16
      %v2972 = vpop.permute.xlu0 %2971
      %2973 = vrot.lane.b32.xlu0 %v2962, 16
      %v2974 = vpop.permute.xlu0 %2973
      %2975 = vrot.lane.b32.xlu0 %v2963, 16
      %v2976 = vpop.permute.xlu0 %2975
      %2977 = vrot.lane.b32.xlu0 %v2964, 16
      %v2978 = vpop.permute.xlu0 %2977
      %2979 = vrot.lane.b32.xlu0 %v2965, 16
      %v2980 = vpop.permute.xlu0 %2979
      %2981 = vrot.lane.b32.xlu0 %v2966, 16
      %v2982 = vpop.permute.xlu0 %2981
      %v2985 = vsel %vm783, %v2839, %v2920
      %v2988 = vsel %vm783, %v2840, %v2922
      %v2991 = vsel %vm783, %v2841, %v2924
      %v2994 = vsel %vm783, %v2842, %v2926
      %v2997 = vsel %vm783, %v2843, %v2928
      %v3000 = vsel %vm783, %v2844, %v2930
      %v3003 = vsel %vm783, %v2845, %v2932
      %v3006 = vsel %vm783, %v2846, %v2934
      %v3008 = vsel %vm2618, %v2985, %v2968
      %v3010 = vsel %vm2618, %v2988, %v2970
      %v3012 = vsel %vm2618, %v2991, %v2972
      %v3014 = vsel %vm2618, %v2994, %v2974
      %v3016 = vsel %vm2618, %v2997, %v2976
      %v3018 = vsel %vm2618, %v3000, %v2978
      %v3020 = vsel %vm2618, %v3003, %v2980
      %v3022 = vsel %vm2618, %v3006, %v2982
      %v3031 = vunpack.c.l.b16 %v3008
      %v3032 = vunpack.c.h.b16 %v3008
      %v3033 = vunpack.c.l.b16 %v3010
      %v3034 = vunpack.c.h.b16 %v3010
      %v3035 = vunpack.c.l.b16 %v3012
      %v3036 = vunpack.c.h.b16 %v3012
      %v3037 = vunpack.c.l.b16 %v3014
      %v3038 = vunpack.c.h.b16 %v3014
      %v3039 = vunpack.c.l.b16 %v3016
      %v3040 = vunpack.c.h.b16 %v3016
      %v3041 = vunpack.c.l.b16 %v3018
      %v3042 = vunpack.c.h.b16 %v3018
      %v3043 = vunpack.c.l.b16 %v3020
      %v3044 = vunpack.c.h.b16 %v3020
      %v3045 = vunpack.c.l.b16 %v3022
      %v3046 = vunpack.c.h.b16 %v3022
      %v3047 = vpack.c.b16 %v3031, %v3031
      %v3048 = vpack.c.b16 %v3032, %v3032
      %v3049 = vpack.c.b16 %v3033, %v3033
      %v3050 = vpack.c.b16 %v3034, %v3034
      %v3051 = vpack.c.b16 %v3035, %v3035
      %v3052 = vpack.c.b16 %v3036, %v3036
      %v3053 = vpack.c.b16 %v3037, %v3037
      %v3054 = vpack.c.b16 %v3038, %v3038
      %v3055 = vpack.c.b16 %v3039, %v3039
      %v3056 = vpack.c.b16 %v3040, %v3040
      %v3057 = vpack.c.b16 %v3041, %v3041
      %v3058 = vpack.c.b16 %v3042, %v3042
      %v3059 = vpack.c.b16 %v3043, %v3043
      %v3060 = vpack.c.b16 %v3044, %v3044
      %v3061 = vpack.c.b16 %v3045, %v3045
      %v3062 = vpack.c.b16 %v3046, %v3046
      %v3064 = vshrl.u32 %v3047, 16
      %v3066 = vrot.slane %v3064, 7
      %v3067 = vrot.slane %v3066, 4
      %v3069 = vshrl.u32 %v3048, 16
      %v3071 = vrot.slane %v3069, 7
      %v3072 = vshll.u32 %v3048, 16
      %v3074 = vor.u32 %v3071, %v3072
      %v3075 = vsel %vm855, %v3067, %v3074
      %v3077 = vshrl.u32 %v3049, 16
      %v3079 = vrot.slane %v3077, 7
      %v3080 = vrot.slane %v3079, 4
      %v3082 = vshrl.u32 %v3050, 16
      %v3084 = vrot.slane %v3082, 7
      %v3085 = vshll.u32 %v3050, 16
      %v3087 = vor.u32 %v3084, %v3085
      %v3088 = vsel %vm855, %v3080, %v3087
      %v3090 = vshrl.u32 %v3051, 16
      %v3092 = vrot.slane %v3090, 7
      %v3093 = vrot.slane %v3092, 4
      %v3095 = vshrl.u32 %v3052, 16
      %v3097 = vrot.slane %v3095, 7
      %v3098 = vshll.u32 %v3052, 16
      %v3100 = vor.u32 %v3097, %v3098
      %v3101 = vsel %vm855, %v3093, %v3100
      %v3103 = vshrl.u32 %v3053, 16
      %v3105 = vrot.slane %v3103, 7
      %v3106 = vrot.slane %v3105, 4
      %v3108 = vshrl.u32 %v3054, 16
      %v3110 = vrot.slane %v3108, 7
      %v3111 = vshll.u32 %v3054, 16
      %v3113 = vor.u32 %v3110, %v3111
      %v3114 = vsel %vm855, %v3106, %v3113
      %v3116 = vshrl.u32 %v3055, 16
      %v3118 = vrot.slane %v3116, 7
      %v3119 = vrot.slane %v3118, 4
      %v3121 = vshrl.u32 %v3056, 16
      %v3123 = vrot.slane %v3121, 7
      %v3124 = vshll.u32 %v3056, 16
      %v3126 = vor.u32 %v3123, %v3124
      %v3127 = vsel %vm855, %v3119, %v3126
      %v3129 = vshrl.u32 %v3057, 16
      %v3131 = vrot.slane %v3129, 7
      %v3132 = vrot.slane %v3131, 4
      %v3134 = vshrl.u32 %v3058, 16
      %v3136 = vrot.slane %v3134, 7
      %v3137 = vshll.u32 %v3058, 16
      %v3139 = vor.u32 %v3136, %v3137
      %v3140 = vsel %vm855, %v3132, %v3139
      %v3142 = vshrl.u32 %v3059, 16
      %v3144 = vrot.slane %v3142, 7
      %v3145 = vrot.slane %v3144, 4
      %v3147 = vshrl.u32 %v3060, 16
      %v3149 = vrot.slane %v3147, 7
      %v3150 = vshll.u32 %v3060, 16
      %v3152 = vor.u32 %v3149, %v3150
      %v3153 = vsel %vm855, %v3145, %v3152
      %v3155 = vshrl.u32 %v3061, 16
      %v3157 = vrot.slane %v3155, 7
      %v3158 = vrot.slane %v3157, 4
      %v3160 = vshrl.u32 %v3062, 16
      %v3162 = vrot.slane %v3160, 7
      %v3163 = vshll.u32 %v3062, 16
      %v3165 = vor.u32 %v3162, %v3163
      %v3166 = vsel %vm855, %v3158, %v3165
      %s3167 = scalar_lea.vmem %s3, 12
      %v3168 = vld [vmem:[%s3167] sm:$0xf]
      %v3169 = vld [vmem:[%s3167 + $0x4] sm:$0xf]
      %v3170 = vld [vmem:[%s3167 + $0x8] sm:$0xf]
      %v3171 = vunpack.c.l.b16 %v3075
      %v3172 = vunpack.c.l.b16 %v3088
      %v3173 = vunpack.c.l.b16 %v3101
      %v3174 = vunpack.c.l.b16 %v3114
      %v3175 = vunpack.c.l.b16 %v3127
      %v3176 = vunpack.c.l.b16 %v3140
      %v3177 = vunpack.c.l.b16 %v3153
      %v3178 = vunpack.c.l.b16 %v3166
      %v3179 = vpack.c.b16 %v3172, %v3171
      %v3180 = vpack.c.b16 %v3174, %v3173
      %v3181 = vpack.c.b16 %v3176, %v3175
      %v3182 = vpack.c.b16 %v3178, %v3177
      %v3186 = vunpack.c.l.b16 %v3168
      %v3187 = vunpack.c.l.b16 %v3169
      %v3188 = vunpack.c.l.b16 %v3170
      %v3189 = vpack.c.b16 %v3187, %v3186
      %v3190 = vpack.c.b16 %v3188, %v3188
      %vm3192 = vcmask 195584
      %v3194 = vsel %vm3192, %v3179, 0
      %v3197 = vsel %vm3192, %v3180, 0
      %v3200 = vsel %vm3192, %v3181, 0
      %v3203 = vsel %vm3192, %v3182, 0
      %vm3205 = vcmask 1043456
      %v3207 = vsel %vm3205, %v3190, 0
      %3209 = vmatprep.subr.bf16.mxu0 0
      %3210 = vmatpush1.bf16.msra.mxu0 0
      %3211 = vmatprep.subr.bf16.mxu0 0
      %3212 = vmatpush1.bf16.msra.mxu0 0
      %3213 = vmatprep.subr.bf16.mxu0 0
      %3214 = vmatpush1.bf16.msra.mxu0 0
      %3215 = vmatprep.subr.bf16.mxu0 0
      %3216 = vmatpush1.bf16.msra.mxu0 0
      %3217 = vmatprep.subr.bf16.mxu0 0
      %3218 = vmatpush1.bf16.msra.mxu0 0
      %3219 = vmatprep.subr.bf16.mxu0 0
      %3220 = vmatpush1.bf16.msra.mxu0 0
      %3221 = vmatprep.subr.bf16.mxu0 0
      %3222 = vmatpush1.bf16.msra.mxu0 %v3207
      %3223 = vmatprep.subr.bf16.mxu0 0
      %3224 = vmatpush1.bf16.msra.mxu0 %v3189
      %3225 = vmatprep.subr.bf16.mxu0 0
      %3226 = vmatpush2.bf16.msra.mxu0 0
      %3227 = vmatprep.subr.bf16.mxu0 0
      %3228 = vmatpush2.bf16.msra.mxu0 0
      %3229 = vmatprep.subr.bf16.mxu0 0
      %3230 = vmatpush2.bf16.msra.mxu0 0
      %3231 = vmatprep.subr.bf16.mxu0 0
      %3232 = vmatpush2.bf16.msra.mxu0 0
      %3233 = vmatprep.subr.bf16.mxu0 0
      %3234 = vmatpush2.bf16.msra.mxu0 0
      %3235 = vmatprep.subr.bf16.mxu0 0
      %3236 = vmatpush2.bf16.msra.mxu0 0
      %3237 = vmatprep.subr.bf16.mxu0 0
      %3238 = vmatpush2.bf16.msra.mxu0 0
      %3239 = vmatprep.subr.bf16.mxu0 0
      %3240 = vmatpush2.bf16.msra.mxu0 0
      %3241 = vmatprep.mubr.bf16.mxu0 0
      %3242 = vmatmul.mubr.bf16.gmra.mxu0 %v3194
      %v3243 = vpop.f32.mrf.mxu0
      %v3244 = vadd.f32 0.0, %v3243
      %v3245 = vpop.f32.mrf.mxu0
      %v3246 = vpop.f32.mrf.mxu0
      %v3247 = vadd.f32 0.0, %v3246
      %v3248 = vpop.f32.mrf.mxu0
      %3249 = vmatprep.mubr.bf16.mxu0 0
      %3250 = vmatmul.mubr.bf16.gmra.mxu0 %v3197
      %v3251 = vpop.f32.mrf.mxu0
      %v3252 = vadd.f32 0.0, %v3251
      %v3253 = vpop.f32.mrf.mxu0
      %v3254 = vpop.f32.mrf.mxu0
      %v3255 = vadd.f32 0.0, %v3254
      %v3256 = vpop.f32.mrf.mxu0
      %3257 = vmatprep.mubr.bf16.mxu0 0
      %3258 = vmatmul.mubr.bf16.gmra.mxu0 %v3200
      %v3259 = vpop.f32.mrf.mxu0
      %v3260 = vadd.f32 0.0, %v3259
      %v3261 = vpop.f32.mrf.mxu0
      %v3262 = vpop.f32.mrf.mxu0
      %v3263 = vadd.f32 0.0, %v3262
      %v3264 = vpop.f32.mrf.mxu0
      %3265 = vmatprep.mubr.bf16.mxu0 0
      %3266 = vmatmul.mubr.bf16.gmra.mxu0 %v3203
      %v3267 = vpop.f32.mrf.mxu0
      %v3268 = vadd.f32 0.0, %v3267
      %v3269 = vpop.f32.mrf.mxu0
      %v3270 = vpop.f32.mrf.mxu0
      %v3271 = vadd.f32 0.0, %v3270
      %v3272 = vpop.f32.mrf.mxu0
      %3273 = vdwg.mxu0
      %v3274 = vunpack.c.l.b16 %v2687
      %v3275 = vunpack.c.l.b16 %v2700
      %v3276 = vunpack.c.l.b16 %v2713
      %v3277 = vunpack.c.l.b16 %v2726
      %v3278 = vunpack.c.l.b16 %v2739
      %v3279 = vunpack.c.l.b16 %v2752
      %v3280 = vunpack.c.l.b16 %v2765
      %v3281 = vunpack.c.l.b16 %v2778
      %v3282 = vpack.c.b16 %v3275, %v3274
      %v3283 = vpack.c.b16 %v3277, %v3276
      %v3284 = vpack.c.b16 %v3279, %v3278
      %v3285 = vpack.c.b16 %v3281, %v3280
      %v3289 = vunpack.c.l.b16 %v2779
      %v3290 = vunpack.c.l.b16 %v2780
      %v3291 = vunpack.c.l.b16 %v2781
      %v3292 = vpack.c.b16 %v3290, %v3289
      %v3293 = vpack.c.b16 %v3291, %v3291
      %v3296 = vsel %vm3192, %v3282, 0
      %v3299 = vsel %vm3192, %v3283, 0
      %v3302 = vsel %vm3192, %v3284, 0
      %v3305 = vsel %vm3192, %v3285, 0
      %v3308 = vsel %vm3205, %v3293, 0
      %3310 = vmatprep.subr.bf16.mxu0 0
      %3311 = vmatpush1.bf16.msra.mxu0 0
      %3312 = vmatprep.subr.bf16.mxu0 0
      %3313 = vmatpush1.bf16.msra.mxu0 0
      %3314 = vmatprep.subr.bf16.mxu0 0
      %3315 = vmatpush1.bf16.msra.mxu0 0
      %3316 = vmatprep.subr.bf16.mxu0 0
      %3317 = vmatpush1.bf16.msra.mxu0 0
      %3318 = vmatprep.subr.bf16.mxu0 0
      %3319 = vmatpush1.bf16.msra.mxu0 0
      %3320 = vmatprep.subr.bf16.mxu0 0
      %3321 = vmatpush1.bf16.msra.mxu0 0
      %3322 = vmatprep.subr.bf16.mxu0 0
      %3323 = vmatpush1.bf16.msra.mxu0 %v3308
      %3324 = vmatprep.subr.bf16.mxu0 0
      %3325 = vmatpush1.bf16.msra.mxu0 %v3292
      %3326 = vmatprep.subr.bf16.mxu0 0
      %3327 = vmatpush2.bf16.msra.mxu0 0
      %3328 = vmatprep.subr.bf16.mxu0 0
      %3329 = vmatpush2.bf16.msra.mxu0 0
      %3330 = vmatprep.subr.bf16.mxu0 0
      %3331 = vmatpush2.bf16.msra.mxu0 0
      %3332 = vmatprep.subr.bf16.mxu0 0
      %3333 = vmatpush2.bf16.msra.mxu0 0
      %3334 = vmatprep.subr.bf16.mxu0 0
      %3335 = vmatpush2.bf16.msra.mxu0 0
      %3336 = vmatprep.subr.bf16.mxu0 0
      %3337 = vmatpush2.bf16.msra.mxu0 0
      %3338 = vmatprep.subr.bf16.mxu0 0
      %3339 = vmatpush2.bf16.msra.mxu0 0
      %3340 = vmatprep.subr.bf16.mxu0 0
      %3341 = vmatpush2.bf16.msra.mxu0 0
      %3342 = vmatprep.mubr.bf16.mxu0 0
      %3343 = vmatmul.mubr.bf16.gmra.mxu0 %v3296
      %v3344 = vpop.f32.mrf.mxu0
      %v3345 = vadd.f32 %v3244, %v3344
      %v3346 = vpop.f32.mrf.mxu0
      %v3347 = vpop.f32.mrf.mxu0
      %v3348 = vadd.f32 %v3247, %v3347
      %v3349 = vpop.f32.mrf.mxu0
      %3350 = vmatprep.mubr.bf16.mxu0 0
      %3351 = vmatmul.mubr.bf16.gmra.mxu0 %v3299
      %v3352 = vpop.f32.mrf.mxu0
      %v3353 = vadd.f32 %v3252, %v3352
      %v3354 = vpop.f32.mrf.mxu0
      %v3355 = vpop.f32.mrf.mxu0
      %v3356 = vadd.f32 %v3255, %v3355
      %v3357 = vpop.f32.mrf.mxu0
      %3358 = vmatprep.mubr.bf16.mxu0 0
      %3359 = vmatmul.mubr.bf16.gmra.mxu0 %v3302
      %v3360 = vpop.f32.mrf.mxu0
      %v3361 = vadd.f32 %v3260, %v3360
      %v3362 = vpop.f32.mrf.mxu0
      %v3363 = vpop.f32.mrf.mxu0
      %v3364 = vadd.f32 %v3263, %v3363
      %v3365 = vpop.f32.mrf.mxu0
      %3366 = vmatprep.mubr.bf16.mxu0 0
      %3367 = vmatmul.mubr.bf16.gmra.mxu0 %v3305
      %v3368 = vpop.f32.mrf.mxu0
      %v3369 = vadd.f32 %v3268, %v3368
      %v3370 = vpop.f32.mrf.mxu0
      %v3371 = vpop.f32.mrf.mxu0
      %v3372 = vadd.f32 %v3271, %v3371
      %v3373 = vpop.f32.mrf.mxu0
      %3374 = vdwg.mxu0
      %s3375 = scalar_lea.vmem [#allocation3], 24
      %v3376 = vld [vmem:[%s3375] sm:$0x8]
      %v3377 = vld [vmem:[%s3375 + $0x4] sm:$0xf]
      %v3378 = vld [vmem:[%s3375 + $0x8] sm:$0x1]
      %v3379 = vld [vmem:[%s3375 + $0xc] sm:$0x8]
      %v3380 = vld [vmem:[%s3375 + $0x10] sm:$0xf]
      %v3381 = vld [vmem:[%s3375 + $0x14] sm:$0x1]
      %v3382 = vld [vmem:[%s3375 + $0x18] sm:$0x8]
      %v3383 = vld [vmem:[%s3375 + $0x1c] sm:$0xf]
      %v3384 = vld [vmem:[%s3375 + $0x20] sm:$0x1]
      %v3385 = vld [vmem:[%s3375 + $0x24] sm:$0x8]
      %v3386 = vld [vmem:[%s3375 + $0x28] sm:$0xf]
      %v3387 = vld [vmem:[%s3375 + $0x2c] sm:$0x1]
      %v3388 = vld [vmem:[%s3375 + $0x30] sm:$0x8]
      %v3389 = vld [vmem:[%s3375 + $0x34] sm:$0xf]
      %v3390 = vld [vmem:[%s3375 + $0x38] sm:$0x1]
      %v3391 = vld [vmem:[%s3375 + $0x3c] sm:$0x8]
      %v3392 = vld [vmem:[%s3375 + $0x40] sm:$0xf]
      %v3393 = vld [vmem:[%s3375 + $0x44] sm:$0x1]
      %v3394 = vld [vmem:[%s3375 + $0x48] sm:$0x8]
      %v3395 = vld [vmem:[%s3375 + $0x4c] sm:$0xf]
      %v3396 = vld [vmem:[%s3375 + $0x50] sm:$0x1]
      %v3397 = vld [vmem:[%s3375 + $0x54] sm:$0x8]
      %v3398 = vld [vmem:[%s3375 + $0x58] sm:$0xf]
      %v3399 = vld [vmem:[%s3375 + $0x5c] sm:$0x1]
      %v3416 = vunpack.c.l.b16 %v3376
      %v3417 = vunpack.c.l.b16 %v3377
      %v3418 = vunpack.c.l.b16 %v3379
      %v3419 = vunpack.c.l.b16 %v3380
      %v3420 = vunpack.c.l.b16 %v3382
      %v3421 = vunpack.c.l.b16 %v3383
      %v3422 = vunpack.c.l.b16 %v3385
      %v3423 = vunpack.c.l.b16 %v3386
      %v3424 = vunpack.c.l.b16 %v3388
      %v3425 = vunpack.c.l.b16 %v3389
      %v3426 = vunpack.c.l.b16 %v3391
      %v3427 = vunpack.c.l.b16 %v3392
      %v3428 = vunpack.c.l.b16 %v3394
      %v3429 = vunpack.c.l.b16 %v3395
      %v3430 = vunpack.c.l.b16 %v3397
      %v3431 = vunpack.c.l.b16 %v3398
      %v3432 = vpack.c.b16 %v3417, %v3416
      %v3433 = vpack.c.b16 %v3419, %v3418
      %v3434 = vpack.c.b16 %v3421, %v3420
      %v3435 = vpack.c.b16 %v3423, %v3422
      %v3436 = vpack.c.b16 %v3425, %v3424
      %v3437 = vpack.c.b16 %v3427, %v3426
      %v3438 = vpack.c.b16 %v3429, %v3428
      %v3439 = vpack.c.b16 %v3431, %v3430
      %v3440 = vpack.c.b16 %v3417, %v3417
      %v3441 = vpack.c.b16 %v3419, %v3419
      %v3442 = vpack.c.b16 %v3421, %v3421
      %v3443 = vpack.c.b16 %v3423, %v3423
      %v3444 = vpack.c.b16 %v3425, %v3425
      %v3445 = vpack.c.b16 %v3427, %v3427
      %v3446 = vpack.c.b16 %v3429, %v3429
      %v3447 = vpack.c.b16 %v3431, %v3431
      %v3449 = vshrl.u32 %v3440, 16
      %v3451 = vrot.slane %v3449, 4
      %v3452 = vshll.u32 %v3440, 16
      %v3454 = vrot.slane %v3452, 5
      %v3455 = vor.u32 %v3451, %v3454
      %v3457 = vshrl.u32 %v3441, 16
      %v3459 = vrot.slane %v3457, 4
      %v3460 = vshll.u32 %v3441, 16
      %v3462 = vrot.slane %v3460, 5
      %v3463 = vor.u32 %v3459, %v3462
      %v3465 = vshrl.u32 %v3442, 16
      %v3467 = vrot.slane %v3465, 4
      %v3468 = vshll.u32 %v3442, 16
      %v3470 = vrot.slane %v3468, 5
      %v3471 = vor.u32 %v3467, %v3470
      %v3473 = vshrl.u32 %v3443, 16
      %v3475 = vrot.slane %v3473, 4
      %v3476 = vshll.u32 %v3443, 16
      %v3478 = vrot.slane %v3476, 5
      %v3479 = vor.u32 %v3475, %v3478
      %v3481 = vshrl.u32 %v3444, 16
      %v3483 = vrot.slane %v3481, 4
      %v3484 = vshll.u32 %v3444, 16
      %v3486 = vrot.slane %v3484, 5
      %v3487 = vor.u32 %v3483, %v3486
      %v3489 = vshrl.u32 %v3445, 16
      %v3491 = vrot.slane %v3489, 4
      %v3492 = vshll.u32 %v3445, 16
      %v3494 = vrot.slane %v3492, 5
      %v3495 = vor.u32 %v3491, %v3494
      %v3497 = vshrl.u32 %v3446, 16
      %v3499 = vrot.slane %v3497, 4
      %v3500 = vshll.u32 %v3446, 16
      %v3502 = vrot.slane %v3500, 5
      %v3503 = vor.u32 %v3499, %v3502
      %v3505 = vshrl.u32 %v3447, 16
      %v3507 = vrot.slane %v3505, 4
      %v3508 = vshll.u32 %v3447, 16
      %v3510 = vrot.slane %v3508, 5
      %v3511 = vor.u32 %v3507, %v3510
      %3512 = vrot.lane.b32.xlu0 %v3455, 8
      %v3513 = vpop.permute.xlu0 %3512
      %3514 = vrot.lane.b32.xlu0 %v3463, 8
      %v3515 = vpop.permute.xlu0 %3514
      %3516 = vrot.lane.b32.xlu0 %v3471, 8
      %v3517 = vpop.permute.xlu0 %3516
      %3518 = vrot.lane.b32.xlu0 %v3479, 8
      %v3519 = vpop.permute.xlu0 %3518
      %3520 = vrot.lane.b32.xlu0 %v3487, 8
      %v3521 = vpop.permute.xlu0 %3520
      %3522 = vrot.lane.b32.xlu0 %v3495, 8
      %v3523 = vpop.permute.xlu0 %3522
      %3524 = vrot.lane.b32.xlu0 %v3503, 8
      %v3525 = vpop.permute.xlu0 %3524
      %3526 = vrot.lane.b32.xlu0 %v3511, 8
      %v3527 = vpop.permute.xlu0 %3526
      %v3536 = vunpack.c.l.b16 %v3378
      %v3537 = vunpack.c.l.b16 %v3381
      %v3538 = vunpack.c.l.b16 %v3384
      %v3539 = vunpack.c.l.b16 %v3387
      %v3540 = vunpack.c.l.b16 %v3390
      %v3541 = vunpack.c.l.b16 %v3393
      %v3542 = vunpack.c.l.b16 %v3396
      %v3543 = vunpack.c.l.b16 %v3399
      %v3544 = vpack.c.b16 %v3536, %v3417
      %v3545 = vpack.c.b16 %v3537, %v3419
      %v3546 = vpack.c.b16 %v3538, %v3421
      %v3547 = vpack.c.b16 %v3539, %v3423
      %v3548 = vpack.c.b16 %v3540, %v3425
      %v3549 = vpack.c.b16 %v3541, %v3427
      %v3550 = vpack.c.b16 %v3542, %v3429
      %v3551 = vpack.c.b16 %v3543, %v3431
      %v3552 = vrot.slane %v3544, 5
      %v3553 = vrot.slane %v3545, 5
      %v3554 = vrot.slane %v3546, 5
      %v3555 = vrot.slane %v3547, 5
      %v3556 = vrot.slane %v3548, 5
      %v3557 = vrot.slane %v3549, 5
      %v3558 = vrot.slane %v3550, 5
      %v3559 = vrot.slane %v3551, 5
      %3560 = vrot.lane.b32.xlu0 %v3552, 16
      %v3561 = vpop.permute.xlu0 %3560
      %3562 = vrot.lane.b32.xlu0 %v3553, 16
      %v3563 = vpop.permute.xlu0 %3562
      %3564 = vrot.lane.b32.xlu0 %v3554, 16
      %v3565 = vpop.permute.xlu0 %3564
      %3566 = vrot.lane.b32.xlu0 %v3555, 16
      %v3567 = vpop.permute.xlu0 %3566
      %3568 = vrot.lane.b32.xlu0 %v3556, 16
      %v3569 = vpop.permute.xlu0 %3568
      %3570 = vrot.lane.b32.xlu0 %v3557, 16
      %v3571 = vpop.permute.xlu0 %3570
      %3572 = vrot.lane.b32.xlu0 %v3558, 16
      %v3573 = vpop.permute.xlu0 %3572
      %3574 = vrot.lane.b32.xlu0 %v3559, 16
      %v3575 = vpop.permute.xlu0 %3574
      %v3578 = vsel %vm783, %v3432, %v3513
      %v3581 = vsel %vm783, %v3433, %v3515
      %v3584 = vsel %vm783, %v3434, %v3517
      %v3587 = vsel %vm783, %v3435, %v3519
      %v3590 = vsel %vm783, %v3436, %v3521
      %v3593 = vsel %vm783, %v3437, %v3523
      %v3596 = vsel %vm783, %v3438, %v3525
      %v3599 = vsel %vm783, %v3439, %v3527
      %v3601 = vsel %vm2618, %v3578, %v3561
      %v3603 = vsel %vm2618, %v3581, %v3563
      %v3605 = vsel %vm2618, %v3584, %v3565
      %v3607 = vsel %vm2618, %v3587, %v3567
      %v3609 = vsel %vm2618, %v3590, %v3569
      %v3611 = vsel %vm2618, %v3593, %v3571
      %v3613 = vsel %vm2618, %v3596, %v3573
      %v3615 = vsel %vm2618, %v3599, %v3575
      %v3624 = vunpack.c.l.b16 %v3601
      %v3625 = vunpack.c.h.b16 %v3601
      %v3626 = vunpack.c.l.b16 %v3603
      %v3627 = vunpack.c.h.b16 %v3603
      %v3628 = vunpack.c.l.b16 %v3605
      %v3629 = vunpack.c.h.b16 %v3605
      %v3630 = vunpack.c.l.b16 %v3607
      %v3631 = vunpack.c.h.b16 %v3607
      %v3632 = vunpack.c.l.b16 %v3609
      %v3633 = vunpack.c.h.b16 %v3609
      %v3634 = vunpack.c.l.b16 %v3611
      %v3635 = vunpack.c.h.b16 %v3611
      %v3636 = vunpack.c.l.b16 %v3613
      %v3637 = vunpack.c.h.b16 %v3613
      %v3638 = vunpack.c.l.b16 %v3615
      %v3639 = vunpack.c.h.b16 %v3615
      %v3640 = vpack.c.b16 %v3624, %v3624
      %v3641 = vpack.c.b16 %v3625, %v3625
      %v3642 = vpack.c.b16 %v3626, %v3626
      %v3643 = vpack.c.b16 %v3627, %v3627
      %v3644 = vpack.c.b16 %v3628, %v3628
      %v3645 = vpack.c.b16 %v3629, %v3629
      %v3646 = vpack.c.b16 %v3630, %v3630
      %v3647 = vpack.c.b16 %v3631, %v3631
      %v3648 = vpack.c.b16 %v3632, %v3632
      %v3649 = vpack.c.b16 %v3633, %v3633
      %v3650 = vpack.c.b16 %v3634, %v3634
      %v3651 = vpack.c.b16 %v3635, %v3635
      %v3652 = vpack.c.b16 %v3636, %v3636
      %v3653 = vpack.c.b16 %v3637, %v3637
      %v3654 = vpack.c.b16 %v3638, %v3638
      %v3655 = vpack.c.b16 %v3639, %v3639
      %v3657 = vshrl.u32 %v3640, 16
      %v3659 = vrot.slane %v3657, 7
      %v3660 = vrot.slane %v3659, 4
      %v3662 = vshrl.u32 %v3641, 16
      %v3664 = vrot.slane %v3662, 7
      %v3665 = vshll.u32 %v3641, 16
      %v3667 = vor.u32 %v3664, %v3665
      %v3668 = vsel %vm855, %v3660, %v3667
      %v3670 = vshrl.u32 %v3642, 16
      %v3672 = vrot.slane %v3670, 7
      %v3673 = vrot.slane %v3672, 4
      %v3675 = vshrl.u32 %v3643, 16
      %v3677 = vrot.slane %v3675, 7
      %v3678 = vshll.u32 %v3643, 16
      %v3680 = vor.u32 %v3677, %v3678
      %v3681 = vsel %vm855, %v3673, %v3680
      %v3683 = vshrl.u32 %v3644, 16
      %v3685 = vrot.slane %v3683, 7
      %v3686 = vrot.slane %v3685, 4
      %v3688 = vshrl.u32 %v3645, 16
      %v3690 = vrot.slane %v3688, 7
      %v3691 = vshll.u32 %v3645, 16
      %v3693 = vor.u32 %v3690, %v3691
      %v3694 = vsel %vm855, %v3686, %v3693
      %v3696 = vshrl.u32 %v3646, 16
      %v3698 = vrot.slane %v3696, 7
      %v3699 = vrot.slane %v3698, 4
      %v3701 = vshrl.u32 %v3647, 16
      %v3703 = vrot.slane %v3701, 7
      %v3704 = vshll.u32 %v3647, 16
      %v3706 = vor.u32 %v3703, %v3704
      %v3707 = vsel %vm855, %v3699, %v3706
      %v3709 = vshrl.u32 %v3648, 16
      %v3711 = vrot.slane %v3709, 7
      %v3712 = vrot.slane %v3711, 4
      %v3714 = vshrl.u32 %v3649, 16
      %v3716 = vrot.slane %v3714, 7
      %v3717 = vshll.u32 %v3649, 16
      %v3719 = vor.u32 %v3716, %v3717
      %v3720 = vsel %vm855, %v3712, %v3719
      %v3722 = vshrl.u32 %v3650, 16
      %v3724 = vrot.slane %v3722, 7
      %v3725 = vrot.slane %v3724, 4
      %v3727 = vshrl.u32 %v3651, 16
      %v3729 = vrot.slane %v3727, 7
      %v3730 = vshll.u32 %v3651, 16
      %v3732 = vor.u32 %v3729, %v3730
      %v3733 = vsel %vm855, %v3725, %v3732
      %v3735 = vshrl.u32 %v3652, 16
      %v3737 = vrot.slane %v3735, 7
      %v3738 = vrot.slane %v3737, 4
      %v3740 = vshrl.u32 %v3653, 16
      %v3742 = vrot.slane %v3740, 7
      %v3743 = vshll.u32 %v3653, 16
      %v3745 = vor.u32 %v3742, %v3743
      %v3746 = vsel %vm855, %v3738, %v3745
      %v3748 = vshrl.u32 %v3654, 16
      %v3750 = vrot.slane %v3748, 7
      %v3751 = vrot.slane %v3750, 4
      %v3753 = vshrl.u32 %v3655, 16
      %v3755 = vrot.slane %v3753, 7
      %v3756 = vshll.u32 %v3655, 16
      %v3758 = vor.u32 %v3755, %v3756
      %v3759 = vsel %vm855, %v3751, %v3758
      %s3760 = scalar_lea.vmem %s3, 24
      %v3761 = vld [vmem:[%s3760] sm:$0xf]
      %v3762 = vld [vmem:[%s3760 + $0x4] sm:$0xf]
      %v3763 = vld [vmem:[%s3760 + $0x8] sm:$0xf]
      %v3764 = vunpack.c.l.b16 %v3668
      %v3765 = vunpack.c.l.b16 %v3681
      %v3766 = vunpack.c.l.b16 %v3694
      %v3767 = vunpack.c.l.b16 %v3707
      %v3768 = vunpack.c.l.b16 %v3720
      %v3769 = vunpack.c.l.b16 %v3733
      %v3770 = vunpack.c.l.b16 %v3746
      %v3771 = vunpack.c.l.b16 %v3759
      %v3772 = vpack.c.b16 %v3765, %v3764
      %v3773 = vpack.c.b16 %v3767, %v3766
      %v3774 = vpack.c.b16 %v3769, %v3768
      %v3775 = vpack.c.b16 %v3771, %v3770
      %v3779 = vunpack.c.l.b16 %v3761
      %v3780 = vunpack.c.l.b16 %v3762
      %v3781 = vunpack.c.l.b16 %v3763
      %v3782 = vpack.c.b16 %v3780, %v3779
      %v3783 = vpack.c.b16 %v3781, %v3781
      %v3786 = vsel %vm3192, %v3772, 0
      %v3789 = vsel %vm3192, %v3773, 0
      %v3792 = vsel %vm3192, %v3774, 0
      %v3795 = vsel %vm3192, %v3775, 0
      %v3798 = vsel %vm3205, %v3783, 0
      %3800 = vmatprep.subr.bf16.mxu0 0
      %3801 = vmatpush1.bf16.msra.mxu0 0
      %3802 = vmatprep.subr.bf16.mxu0 0
      %3803 = vmatpush1.bf16.msra.mxu0 0
      %3804 = vmatprep.subr.bf16.mxu0 0
      %3805 = vmatpush1.bf16.msra.mxu0 0
      %3806 = vmatprep.subr.bf16.mxu0 0
      %3807 = vmatpush1.bf16.msra.mxu0 0
      %3808 = vmatprep.subr.bf16.mxu0 0
      %3809 = vmatpush1.bf16.msra.mxu0 0
      %3810 = vmatprep.subr.bf16.mxu0 0
      %3811 = vmatpush1.bf16.msra.mxu0 0
      %3812 = vmatprep.subr.bf16.mxu0 0
      %3813 = vmatpush1.bf16.msra.mxu0 %v3798
      %3814 = vmatprep.subr.bf16.mxu0 0
      %3815 = vmatpush1.bf16.msra.mxu0 %v3782
      %3816 = vmatprep.subr.bf16.mxu0 0
      %3817 = vmatpush2.bf16.msra.mxu0 0
      %3818 = vmatprep.subr.bf16.mxu0 0
      %3819 = vmatpush2.bf16.msra.mxu0 0
      %3820 = vmatprep.subr.bf16.mxu0 0
      %3821 = vmatpush2.bf16.msra.mxu0 0
      %3822 = vmatprep.subr.bf16.mxu0 0
      %3823 = vmatpush2.bf16.msra.mxu0 0
      %3824 = vmatprep.subr.bf16.mxu0 0
      %3825 = vmatpush2.bf16.msra.mxu0 0
      %3826 = vmatprep.subr.bf16.mxu0 0
      %3827 = vmatpush2.bf16.msra.mxu0 0
      %3828 = vmatprep.subr.bf16.mxu0 0
      %3829 = vmatpush2.bf16.msra.mxu0 0
      %3830 = vmatprep.subr.bf16.mxu0 0
      %3831 = vmatpush2.bf16.msra.mxu0 0
      %3832 = vmatprep.mubr.bf16.mxu0 0
      %3833 = vmatmul.mubr.bf16.gmra.mxu0 %v3786
      %v3834 = vpop.f32.mrf.mxu0
      %v3835 = vadd.f32 0.0, %v3834
      %v3836 = vpop.f32.mrf.mxu0
      %v3837 = vpop.f32.mrf.mxu0
      %v3838 = vadd.f32 0.0, %v3837
      %v3839 = vpop.f32.mrf.mxu0
      %3840 = vmatprep.mubr.bf16.mxu0 0
      %3841 = vmatmul.mubr.bf16.gmra.mxu0 %v3789
      %v3842 = vpop.f32.mrf.mxu0
      %v3843 = vadd.f32 0.0, %v3842
      %v3844 = vpop.f32.mrf.mxu0
      %v3845 = vpop.f32.mrf.mxu0
      %v3846 = vadd.f32 0.0, %v3845
      %v3847 = vpop.f32.mrf.mxu0
      %3848 = vmatprep.mubr.bf16.mxu0 0
      %3849 = vmatmul.mubr.bf16.gmra.mxu0 %v3792
      %v3850 = vpop.f32.mrf.mxu0
      %v3851 = vadd.f32 0.0, %v3850
      %v3852 = vpop.f32.mrf.mxu0
      %v3853 = vpop.f32.mrf.mxu0
      %v3854 = vadd.f32 0.0, %v3853
      %v3855 = vpop.f32.mrf.mxu0
      %3856 = vmatprep.mubr.bf16.mxu0 0
      %3857 = vmatmul.mubr.bf16.gmra.mxu0 %v3795
      %v3858 = vpop.f32.mrf.mxu0
      %v3859 = vadd.f32 0.0, %v3858
      %v3860 = vpop.f32.mrf.mxu0
      %v3861 = vpop.f32.mrf.mxu0
      %v3862 = vadd.f32 0.0, %v3861
      %v3863 = vpop.f32.mrf.mxu0
      %3864 = vdwg.mxu0
      %v3865 = vadd.f32 %v3345, %v3835
      %v3866 = vadd.f32 %v3348, %v3838
      %v3867 = vadd.f32 %v3353, %v3843
      %v3868 = vadd.f32 %v3356, %v3846
      %v3869 = vadd.f32 %v3361, %v3851
      %v3870 = vadd.f32 %v3364, %v3854
      %v3871 = vadd.f32 %v3369, %v3859
      %v3872 = vadd.f32 %v3372, %v3862
      %v3873 = vld [vmem:[%s4] sm:$0x1]
      %v3875 = vlaneseq
      %v3876 = vshrl.u32 %v3875, 7
      %v3877 = vsub.s32 0, %v3876
      %v3878 = vrot.slane %v3873, %v3877
      %v3880 = vadd.f32 %v3865, %v3878
      %v3881 = vadd.f32 %v3866, %v3878
      %v3882 = vadd.f32 %v3867, %v3878
      %v3883 = vadd.f32 %v3868, %v3878
      %v3884 = vadd.f32 %v3869, %v3878
      %v3885 = vadd.f32 %v3870, %v3878
      %v3886 = vadd.f32 %v3871, %v3878
      %v3887 = vadd.f32 %v3872, %v3878
      %v3888 = vmax.f32 %v3880, 0.0
      %v3889 = vmax.f32 %v3881, 0.0
      %v3890 = vmax.f32 %v3882, 0.0
      %v3891 = vmax.f32 %v3883, 0.0
      %v3892 = vmax.f32 %v3884, 0.0
      %v3893 = vmax.f32 %v3885, 0.0
      %v3894 = vmax.f32 %v3886, 0.0
      %v3895 = vmax.f32 %v3887, 0.0
      %3896 = vxpose.xlu0.b32.start [1/16] %v3888, 128
      %3897 = vxpose.xlu0.b32.cont [2/16] %v3889, 128
      %3898 = vxpose.xlu0.b32.cont [3/16] %v3890, 128
      %3899 = vxpose.xlu0.b32.cont [4/16] %v3891, 128
      %3900 = vxpose.xlu0.b32.cont [5/16] %v3892, 128
      %3901 = vxpose.xlu0.b32.cont [6/16] %v3893, 128
      %3902 = vxpose.xlu0.b32.cont [7/16] %v3894, 128
      %3903 = vxpose.xlu0.b32.cont [8/16] %v3895, 128
      %3904 = vxpose.xlu0.b32.cont [9/16] 0.0, 128
      %3905 = vxpose.xlu0.b32.cont [10/16] 0.0, 128
      %3906 = vxpose.xlu0.b32.cont [11/16] 0.0, 128
      %3907 = vxpose.xlu0.b32.cont [12/16] 0.0, 128
      %3908 = vxpose.xlu0.b32.cont [13/16] 0.0, 128
      %3909 = vxpose.xlu0.b32.cont [14/16] 0.0, 128
      %3910 = vxpose.xlu0.b32.cont [15/16] 0.0, 128
      %3911 = vxpose.xlu0.b32.end [16/16] 0.0, 128
      %v3912 = vpop.trf.xlu0
      %v3913 = vpop.trf.xlu0
      %v3914 = vpop.trf.xlu0
      %v3915 = vpop.trf.xlu0
      %v3916 = vpop.trf.xlu0
      %v3917 = vpop.trf.xlu0
      %v3918 = vpop.trf.xlu0
      %v3919 = vpop.trf.xlu0
      %v3920 = vpop.trf.xlu0
      %v3921 = vpop.trf.xlu0
      %v3922 = vpop.trf.xlu0
      %v3923 = vpop.trf.xlu0
      %v3924 = vpop.trf.xlu0
      %v3925 = vpop.trf.xlu0
      %v3926 = vpop.trf.xlu0
      %v3927 = vpop.trf.xlu0
      %vm3928 = vcmask 523264
      %3929 = vst.msk [vmem:[%s249] sm:$0xff] %vm3928, %v3912
      %p3930 = scmp.lt.s32.totalorder %s20, 1
      %s3931 = scalar_select %p3930, %s20, 1
      %p3932 = scmp.lt.s32.totalorder %s21, 0
      %s3933 = scalar_select %p3932, %s21, 0
      %s3934 = sadd.s32 %s3933, %s3931
      %s3935 = smul.addr %s3934, 8
      %s3936 = scalar_lea.vmem %s5, %s3935
      // Predicated region
      $region45: #{down_sample_forward.1} parent=39 // pred_check
        %p3937 = pneg %p160
      $region46: #{down_sample_forward.1} parent=39 // pred_check_branch
        %3939 = sbr.rel (%p3937) target = $region48
      $region47: #{down_sample_forward.1} parent=39 // pred_region
        _
      $region48: #{down_sample_forward.1} parent=39 // pred_fallthru
        _
    $region40: #{down_sample_forward.1} parent=5 // pred_fallthru
      _
    %p3940 = scmp.le.s32.totalorder 2, %s11
    // Predicated region
    $region49: #{down_sample_forward.1} parent=5 // pred_check
      %p3941 = pneg %p3940
    $region50: #{down_sample_forward.1} parent=5 // pred_check_branch
      %3943 = sbr.rel (%p3941) target = $region52
    $region51: #{down_sample_forward.1} parent=5 // pred_region
      %s3944 = ssub.s32 %s11, 2
      // Predicated region
      $region53: #{down_sample_forward.1} parent=51 // pred_check
        %p3945 = pneg %p166
      $region54: #{down_sample_forward.1} parent=51 // pred_check_branch
        %3947 = sbr.rel (%p3945) target = $region56
      $region55: #{down_sample_forward.1} parent=51 // pred_region
        %p3948 = scmp.lt.s32.totalorder %s22, 1
        %s3949 = scalar_select %p3948, %s22, 1
        %p3950 = scmp.lt.s32.totalorder %s23, 0
        %s3951 = scalar_select %p3950, %s23, 0
        %s3952 = sadd.s32 %s3951, %s3949
        %s3953 = smul.addr %s3952, 8
        %s3954 = scalar_lea.vmem %s5, %s3953
      $region56: #{down_sample_forward.1} parent=51 // pred_fallthru
        _
    $region52: #{down_sample_forward.1} parent=5 // pred_fallthru
      _
  $region6: #{down_sample_forward.1} parent=0 // loop_footer
    %s15 = sadd.s32 1, %s11
  $region7: #{down_sample_forward.1} parent=0 // loop_footer_branch
    %10 = sbr.rel target = $region3
  $region8: #{down_sample_forward.1} parent=0 // loop_exit
    _

</llo_original>
